<compile_context>
chip_gen: v6e
topology: v6e:2x2x1
jax: 0.10.0
libtpu: 0.0.40
codegen_flags: <defaults>
</compile_context>

<pallas_src>
import jax
import jax.numpy as jnp
from jax import lax
from jax.experimental import pallas as pl
from jax.experimental.pallas import tpu as pltpu

EPS = 1e-5


def down_kernel(x_ref, w1_ref, g1_ref, be1_ref, w2_ref, g2_ref, be2_ref,
                o_ref, pad_ref):
    N, H, W, C = x_ref.shape          # C == Cpad == Cout (wrapper guarantees)
    Hp, Wp = H // 2, W // 2
    Cout = o_ref.shape[0]
    M = N * Hp * Wp
    inv_m = 1.0 / float(M)

    # ---- MaxPool2d(2,2): two W-strided (sublane) gathers, H pair-max free ----
    a = x_ref[:, :, pl.ds(0, Wp, stride=2), :]          # (N, H, Wp, C)
    b = x_ref[:, :, pl.ds(1, Wp, stride=2), :]
    mw = jnp.maximum(a, b)                              # (N, H, Wp, C)
    mwp = mw.reshape(N * Hp, 2, Wp, C)                  # untiled-dim split: free
    pooled = jnp.maximum(mwp[:, 0, :, :],
                         mwp[:, 1, :, :]).reshape(N, Hp, Wp, C)

    # ---- zero the 1-px halo once; interior is written exactly once per conv ----
    # (corner pixels are written twice by row+col halo stores — harmless)
    pad_ref[:, 0:1, :, :] = jnp.zeros((N, 1, Wp + 2, C), jnp.float32)
    pad_ref[:, Hp + 1:Hp + 2, :, :] = jnp.zeros((N, 1, Wp + 2, C), jnp.float32)
    pad_ref[:, :, 0:1, :] = jnp.zeros((N, Hp + 2, 1, C), jnp.float32)
    pad_ref[:, :, Wp + 1:Wp + 2, :] = jnp.zeros((N, Hp + 2, 1, C), jnp.float32)

    def conv3x3(w_ref):
        # 3x3 "same" conv as 9 accumulated (M, C) @ (C, Cout) MXU dots.
        # Only 3 sublane-gather loads (one per dx column); the dy shifts are
        # cheap static slices on the untiled H axis of the loaded column.
        acc = None
        for dx in range(3):
            col = pad_ref[:, :, dx:dx + Wp, :]          # (N, Hp+2, Wp, C)
            for dy in range(3):
                tap = col[:, dy:dy + Hp, :, :].reshape(M, C)
                d = jnp.dot(tap, w_ref[dy * 3 + dx],
                            preferred_element_type=jnp.float32)   # (M, Cout)
                acc = d if acc is None else acc + d
        return acc                                      # (M, Cout)

    def bn_relu_t(acc, g_ref, be_ref):
        # Lane-dense epilogue: XLU transpose to (Cout, M) = (8, 128), then
        # training-mode BN (batch stats, biased var, clamped) + ReLU.
        at = jnp.transpose(acc)                                        # (Cout, M)
        mean = jnp.sum(at, axis=1, keepdims=True) * inv_m              # (Cout, 1)
        var = jnp.maximum(
            jnp.sum(at * at, axis=1, keepdims=True) * inv_m - mean * mean, 0.0)
        scale = g_ref[...] * lax.rsqrt(var + EPS)                      # (Cout, 1)
        shift = be_ref[...] - mean * scale
        return jnp.maximum(at * scale + shift, 0.0)                    # (Cout, M)

    # ---- conv1 -> BN -> ReLU ----
    pad_ref[:, 1:Hp + 1, 1:Wp + 1, :] = pooled
    y1t = bn_relu_t(conv3x3(w1_ref), g1_ref, be1_ref)                  # (Cout, M)

    # ---- conv2 -> BN -> ReLU (same pad scratch; halo is still zero) ----
    pad_ref[:, 1:Hp + 1, 1:Wp + 1, :] = jnp.transpose(y1t).reshape(N, Hp, Wp, C)
    o_ref[...] = bn_relu_t(conv3x3(w2_ref), g2_ref, be2_ref)           # (Cout, M)


def down_forward(x_nchw, params):
    # b1/b2 (conv biases) are cancelled exactly by training-mode BN's mean
    # subtraction, so they are not passed into the kernel.
    w1, b1, g1, be1, w2, b2, g2, be2 = params
    N, Cin, H, W = x_nchw.shape
    Cout = w1.shape[0]
    Hp, Wp = H // 2, W // 2
    M = N * Hp * Wp

    # Pad input channels up to Cout so both convs share channel width and a
    # single padded scratch; the extra channels are zero (and have zero
    # weight rows), so the math is unchanged.
    assert Cin <= Cout, "Down expects in_ch <= out_ch for the shared scratch"
    Cpad = Cout

    x = jnp.transpose(x_nchw, (0, 2, 3, 1)).astype(jnp.float32)        # NHWC
    x = jnp.pad(x, ((0, 0), (0, 0), (0, 0), (0, Cpad - Cin)))

    def pack_w(w, cin):
        # (Cout, cin, 3, 3) -> (3, 3, cin, Cout) -> pad cin -> (9, Cpad, Cout)
        wt = jnp.transpose(w, (2, 3, 1, 0)).astype(jnp.float32)
        wt = jnp.pad(wt, ((0, 0), (0, 0), (0, Cpad - cin), (0, 0)))
        return wt.reshape(9, Cpad, Cout)

    w1p = pack_w(w1, Cin)
    w2p = pack_w(w2, Cout)
    g1c = g1.reshape(Cout, 1).astype(jnp.float32)
    be1c = be1.reshape(Cout, 1).astype(jnp.float32)
    g2c = g2.reshape(Cout, 1).astype(jnp.float32)
    be2c = be2.reshape(Cout, 1).astype(jnp.float32)

    out_t = pl.pallas_call(
        down_kernel,
        out_shape=jax.ShapeDtypeStruct((Cout, M), jnp.float32),
        in_specs=[pl.BlockSpec(memory_space=pltpu.MemorySpace.VMEM)] * 7,
        out_specs=pl.BlockSpec(memory_space=pltpu.MemorySpace.VMEM),
        scratch_shapes=[
            pltpu.VMEM((N, Hp + 2, Wp + 2, Cpad), jnp.float32),  # shared padded buf
        ],
    )(x, w1p, g1c, be1c, w2p, g2c, be2c)

    # (Cout, N*Hp*Wp) -> (N, Cout, Hp, Wp)
    return jnp.transpose(out_t.reshape(Cout, N, Hp, Wp), (1, 0, 2, 3))


def down_reference(x_nchw, params):
    """Pure-JAX reference mirroring the PyTorch forward (training-mode BN,
    conv bias included — its cancellation by BN is part of what we verify)."""
    w1, b1, g1, be1, w2, b2, g2, be2 = params
    N, C, H, W = x_nchw.shape
    xp = jnp.max(x_nchw.reshape(N, C, H // 2, 2, W // 2, 2), axis=(3, 5))

    def conv_bn_relu(x, w, b, g, be):
        y = lax.conv_general_dilated(x, w, window_strides=(1, 1), padding="SAME",
                                     dimension_numbers=("NCHW", "OIHW", "NCHW"))
        y = y + b[None, :, None, None]
        mean = jnp.mean(y, axis=(0, 2, 3), keepdims=True)
        var = jnp.mean((y - mean) ** 2, axis=(0, 2, 3), keepdims=True)
        y = (y - mean) * lax.rsqrt(var + EPS) * g[None, :, None, None] \
            + be[None, :, None, None]
        return jnp.maximum(y, 0.0)

    y = conv_bn_relu(xp, w1, b1, g1, be1)
    y = conv_bn_relu(y, w2, b2, g2, be2)
    return y


if __name__ == "__main__":
    N, Cin, Cout, H, W = 2, 4, 8, 16, 16
    key = jax.random.PRNGKey(0)
    ks = jax.random.split(key, 5)
    x = jax.random.normal(ks[0], (N, Cin, H, W), jnp.float32)
    w1 = 0.1 * jax.random.normal(ks[1], (Cout, Cin, 3, 3), jnp.float32)
    b1 = 0.1 * jax.random.normal(ks[2], (Cout,), jnp.float32)
    w2 = 0.1 * jax.random.normal(ks[3], (Cout, Cout, 3, 3), jnp.float32)
    b2 = 0.1 * jax.random.normal(ks[4], (Cout,), jnp.float32)
    g1 = jnp.ones((Cout,), jnp.float32); be1 = jnp.zeros((Cout,), jnp.float32)
    g2 = jnp.ones((Cout,), jnp.float32); be2 = jnp.zeros((Cout,), jnp.float32)
    params = (w1, b1, g1, be1, w2, b2, g2, be2)

    out = jax.block_until_ready(down_forward(x, params))
    ref = jax.block_until_ready(down_reference(x, params))

    assert out.shape == (N, Cout, H // 2, W // 2), out.shape
    max_err = float(jnp.max(jnp.abs(out - ref)))
    assert jnp.allclose(out, ref, atol=1e-3, rtol=1e-3), max_err
    print("KERNEL_OK")
</pallas_src>

<mosaic_0001>
module attributes {stable_mosaic.version = 11 : i64} {
  func.func @down_kernel(%arg0: memref<2x16x16x8xf32, #tpu.memory_space<vmem>>, %arg1: memref<9x8x8xf32, #tpu.memory_space<vmem>>, %arg2: memref<8x1xf32, #tpu.memory_space<vmem>>, %arg3: memref<8x1xf32, #tpu.memory_space<vmem>>, %arg4: memref<9x8x8xf32, #tpu.memory_space<vmem>>, %arg5: memref<8x1xf32, #tpu.memory_space<vmem>>, %arg6: memref<8x1xf32, #tpu.memory_space<vmem>>, %arg7: memref<8x128xf32, #tpu.memory_space<vmem>>, %arg8: memref<2x10x10x8xf32, #tpu.memory_space<vmem>>) attributes {dimension_semantics = [], scalar_prefetch = 0 : i64, scratch_operands = 1 : i64, tpu.core_type = #tpu.core_type<tc>} {
    %c0 = arith.constant 0 : index
    %c0_0 = arith.constant 0 : index
    %c0_1 = arith.constant 0 : index
    %c0_2 = arith.constant 0 : index
    %0 = tpu.strided_load %arg0[%c0, %c0_0, %c0_1, %c0_2] {strides = array<i32: 1, 1, 2, 1>} : memref<2x16x16x8xf32, #tpu.memory_space<vmem>>, vector<2x16x8x8xf32>
    %c0_3 = arith.constant 0 : index
    %c0_4 = arith.constant 0 : index
    %c1 = arith.constant 1 : index
    %c0_5 = arith.constant 0 : index
    %1 = tpu.strided_load %arg0[%c0_3, %c0_4, %c1, %c0_5] {strides = array<i32: 1, 1, 2, 1>} : memref<2x16x16x8xf32, #tpu.memory_space<vmem>>, vector<2x16x8x8xf32>
    %2 = arith.maximumf %0, %1 : vector<2x16x8x8xf32>
    %3 = vector.shape_cast %2 : vector<2x16x8x8xf32> to vector<16x2x8x8xf32>
    %4 = vector.extract_strided_slice %3 {offsets = [0, 0, 0, 0], sizes = [16, 1, 8, 8], strides = [1, 1, 1, 1]} : vector<16x2x8x8xf32> to vector<16x1x8x8xf32>
    %5 = vector.shape_cast %4 : vector<16x1x8x8xf32> to vector<16x8x8xf32>
    %6 = vector.extract_strided_slice %3 {offsets = [0, 1, 0, 0], sizes = [16, 1, 8, 8], strides = [1, 1, 1, 1]} : vector<16x2x8x8xf32> to vector<16x1x8x8xf32>
    %7 = vector.shape_cast %6 : vector<16x1x8x8xf32> to vector<16x8x8xf32>
    %8 = arith.maximumf %5, %7 : vector<16x8x8xf32>
    %9 = vector.shape_cast %8 : vector<16x8x8xf32> to vector<2x8x8x8xf32>
    %cst = arith.constant 0.000000e+00 : f32
    %10 = vector.broadcast %cst : f32 to vector<2x1x10x8xf32>
    %c0_6 = arith.constant 0 : index
    %c0_7 = arith.constant 0 : index
    %c0_8 = arith.constant 0 : index
    %c0_9 = arith.constant 0 : index
    %11 = vector.load %arg8[%c0_6, %c0_7, %c0_8, %c0_9] : memref<2x10x10x8xf32, #tpu.memory_space<vmem>>, vector<2x1x10x8xf32>
    tpu.vector_store %arg8[%c0_6, %c0_7, %c0_8, %c0_9], %10 {strides = array<i32>} : memref<2x10x10x8xf32, #tpu.memory_space<vmem>>, vector<2x1x10x8xf32>,
    %cst_10 = arith.constant 0.000000e+00 : f32
    %12 = vector.broadcast %cst_10 : f32 to vector<2x1x10x8xf32>
    %c0_11 = arith.constant 0 : index
    %c9 = arith.constant 9 : index
    %c0_12 = arith.constant 0 : index
    %c0_13 = arith.constant 0 : index
    %13 = vector.load %arg8[%c0_11, %c9, %c0_12, %c0_13] : memref<2x10x10x8xf32, #tpu.memory_space<vmem>>, vector<2x1x10x8xf32>
    tpu.vector_store %arg8[%c0_11, %c9, %c0_12, %c0_13], %12 {strides = array<i32>} : memref<2x10x10x8xf32, #tpu.memory_space<vmem>>, vector<2x1x10x8xf32>,
    %cst_14 = arith.constant 0.000000e+00 : f32
    %14 = vector.broadcast %cst_14 : f32 to vector<2x10x1x8xf32>
    %c0_15 = arith.constant 0 : index
    %c0_16 = arith.constant 0 : index
    %c0_17 = arith.constant 0 : index
    %c0_18 = arith.constant 0 : index
    %15 = vector.load %arg8[%c0_15, %c0_16, %c0_17, %c0_18] : memref<2x10x10x8xf32, #tpu.memory_space<vmem>>, vector<2x10x1x8xf32>
    tpu.vector_store %arg8[%c0_15, %c0_16, %c0_17, %c0_18], %14 {strides = array<i32>} : memref<2x10x10x8xf32, #tpu.memory_space<vmem>>, vector<2x10x1x8xf32>,
    %cst_19 = arith.constant 0.000000e+00 : f32
    %16 = vector.broadcast %cst_19 : f32 to vector<2x10x1x8xf32>
    %c0_20 = arith.constant 0 : index
    %c0_21 = arith.constant 0 : index
    %c9_22 = arith.constant 9 : index
    %c0_23 = arith.constant 0 : index
    %17 = vector.load %arg8[%c0_20, %c0_21, %c9_22, %c0_23] : memref<2x10x10x8xf32, #tpu.memory_space<vmem>>, vector<2x10x1x8xf32>
    tpu.vector_store %arg8[%c0_20, %c0_21, %c9_22, %c0_23], %16 {strides = array<i32>} : memref<2x10x10x8xf32, #tpu.memory_space<vmem>>, vector<2x10x1x8xf32>,
    %c0_24 = arith.constant 0 : index
    %c1_25 = arith.constant 1 : index
    %c1_26 = arith.constant 1 : index
    %c0_27 = arith.constant 0 : index
    %18 = vector.load %arg8[%c0_24, %c1_25, %c1_26, %c0_27] : memref<2x10x10x8xf32, #tpu.memory_space<vmem>>, vector<2x8x8x8xf32>
    tpu.vector_store %arg8[%c0_24, %c1_25, %c1_26, %c0_27], %9 {strides = array<i32>} : memref<2x10x10x8xf32, #tpu.memory_space<vmem>>, vector<2x8x8x8xf32>,
    %c0_28 = arith.constant 0 : index
    %c0_29 = arith.constant 0 : index
    %c0_30 = arith.constant 0 : index
    %c0_31 = arith.constant 0 : index
    %19 = vector.load %arg8[%c0_28, %c0_29, %c0_30, %c0_31] : memref<2x10x10x8xf32, #tpu.memory_space<vmem>>, vector<2x10x8x8xf32>
    %20 = vector.extract_strided_slice %19 {offsets = [0, 0, 0, 0], sizes = [2, 8, 8, 8], strides = [1, 1, 1, 1]} : vector<2x10x8x8xf32> to vector<2x8x8x8xf32>
    %21 = vector.shape_cast %20 : vector<2x8x8x8xf32> to vector<128x8xf32>
    %c0_32 = arith.constant 0 : index
    %c0_33 = arith.constant 0 : index
    %c0_34 = arith.constant 0 : index
    %22 = vector.load %arg1[%c0_32, %c0_33, %c0_34] : memref<9x8x8xf32, #tpu.memory_space<vmem>>, vector<1x8x8xf32>
    %23 = vector.shape_cast %22 : vector<1x8x8xf32> to vector<8x8xf32>
    %cst_35 = arith.constant dense<0.000000e+00> : vector<128x8xf32>
    %24 = tpu.matmul %21, %23, %cst_35 {dimension_numbers = #tpu.dot_dimension_numbers<[1], [0], [0], [1], [0, 0, 1, 1], [], []>} : vector<128x8xf32>, vector<8x8xf32>, vector<128x8xf32> -> vector<128x8xf32>
    %25 = vector.extract_strided_slice %19 {offsets = [0, 1, 0, 0], sizes = [2, 8, 8, 8], strides = [1, 1, 1, 1]} : vector<2x10x8x8xf32> to vector<2x8x8x8xf32>
    %26 = vector.shape_cast %25 : vector<2x8x8x8xf32> to vector<128x8xf32>
    %c3 = arith.constant 3 : index
    %c0_36 = arith.constant 0 : index
    %c0_37 = arith.constant 0 : index
    %27 = vector.load %arg1[%c3, %c0_36, %c0_37] : memref<9x8x8xf32, #tpu.memory_space<vmem>>, vector<1x8x8xf32>
    %28 = vector.shape_cast %27 : vector<1x8x8xf32> to vector<8x8xf32>
    %cst_38 = arith.constant dense<0.000000e+00> : vector<128x8xf32>
    %29 = tpu.matmul %26, %28, %cst_38 {dimension_numbers = #tpu.dot_dimension_numbers<[1], [0], [0], [1], [0, 0, 1, 1], [], []>} : vector<128x8xf32>, vector<8x8xf32>, vector<128x8xf32> -> vector<128x8xf32>
    %30 = arith.addf %24, %29 : vector<128x8xf32>
    %31 = vector.extract_strided_slice %19 {offsets = [0, 2, 0, 0], sizes = [2, 8, 8, 8], strides = [1, 1, 1, 1]} : vector<2x10x8x8xf32> to vector<2x8x8x8xf32>
    %32 = vector.shape_cast %31 : vector<2x8x8x8xf32> to vector<128x8xf32>
    %c6 = arith.constant 6 : index
    %c0_39 = arith.constant 0 : index
    %c0_40 = arith.constant 0 : index
    %33 = vector.load %arg1[%c6, %c0_39, %c0_40] : memref<9x8x8xf32, #tpu.memory_space<vmem>>, vector<1x8x8xf32>
    %34 = vector.shape_cast %33 : vector<1x8x8xf32> to vector<8x8xf32>
    %cst_41 = arith.constant dense<0.000000e+00> : vector<128x8xf32>
    %35 = tpu.matmul %32, %34, %cst_41 {dimension_numbers = #tpu.dot_dimension_numbers<[1], [0], [0], [1], [0, 0, 1, 1], [], []>} : vector<128x8xf32>, vector<8x8xf32>, vector<128x8xf32> -> vector<128x8xf32>
    %36 = arith.addf %30, %35 : vector<128x8xf32>
    %c0_42 = arith.constant 0 : index
    %c0_43 = arith.constant 0 : index
    %c1_44 = arith.constant 1 : index
    %c0_45 = arith.constant 0 : index
    %37 = vector.load %arg8[%c0_42, %c0_43, %c1_44, %c0_45] : memref<2x10x10x8xf32, #tpu.memory_space<vmem>>, vector<2x10x8x8xf32>
    %38 = vector.extract_strided_slice %37 {offsets = [0, 0, 0, 0], sizes = [2, 8, 8, 8], strides = [1, 1, 1, 1]} : vector<2x10x8x8xf32> to vector<2x8x8x8xf32>
    %39 = vector.shape_cast %38 : vector<2x8x8x8xf32> to vector<128x8xf32>
    %c1_46 = arith.constant 1 : index
    %c0_47 = arith.constant 0 : index
    %c0_48 = arith.constant 0 : index
    %40 = vector.load %arg1[%c1_46, %c0_47, %c0_48] : memref<9x8x8xf32, #tpu.memory_space<vmem>>, vector<1x8x8xf32>
    %41 = vector.shape_cast %40 : vector<1x8x8xf32> to vector<8x8xf32>
    %cst_49 = arith.constant dense<0.000000e+00> : vector<128x8xf32>
    %42 = tpu.matmul %39, %41, %cst_49 {dimension_numbers = #tpu.dot_dimension_numbers<[1], [0], [0], [1], [0, 0, 1, 1], [], []>} : vector<128x8xf32>, vector<8x8xf32>, vector<128x8xf32> -> vector<128x8xf32>
    %43 = arith.addf %36, %42 : vector<128x8xf32>
    %44 = vector.extract_strided_slice %37 {offsets = [0, 1, 0, 0], sizes = [2, 8, 8, 8], strides = [1, 1, 1, 1]} : vector<2x10x8x8xf32> to vector<2x8x8x8xf32>
    %45 = vector.shape_cast %44 : vector<2x8x8x8xf32> to vector<128x8xf32>
    %c4 = arith.constant 4 : index
    %c0_50 = arith.constant 0 : index
    %c0_51 = arith.constant 0 : index
    %46 = vector.load %arg1[%c4, %c0_50, %c0_51] : memref<9x8x8xf32, #tpu.memory_space<vmem>>, vector<1x8x8xf32>
    %47 = vector.shape_cast %46 : vector<1x8x8xf32> to vector<8x8xf32>
    %cst_52 = arith.constant dense<0.000000e+00> : vector<128x8xf32>
    %48 = tpu.matmul %45, %47, %cst_52 {dimension_numbers = #tpu.dot_dimension_numbers<[1], [0], [0], [1], [0, 0, 1, 1], [], []>} : vector<128x8xf32>, vector<8x8xf32>, vector<128x8xf32> -> vector<128x8xf32>
    %49 = arith.addf %43, %48 : vector<128x8xf32>
    %50 = vector.extract_strided_slice %37 {offsets = [0, 2, 0, 0], sizes = [2, 8, 8, 8], strides = [1, 1, 1, 1]} : vector<2x10x8x8xf32> to vector<2x8x8x8xf32>
    %51 = vector.shape_cast %50 : vector<2x8x8x8xf32> to vector<128x8xf32>
    %c7 = arith.constant 7 : index
    %c0_53 = arith.constant 0 : index
    %c0_54 = arith.constant 0 : index
    %52 = vector.load %arg1[%c7, %c0_53, %c0_54] : memref<9x8x8xf32, #tpu.memory_space<vmem>>, vector<1x8x8xf32>
    %53 = vector.shape_cast %52 : vector<1x8x8xf32> to vector<8x8xf32>
    %cst_55 = arith.constant dense<0.000000e+00> : vector<128x8xf32>
    %54 = tpu.matmul %51, %53, %cst_55 {dimension_numbers = #tpu.dot_dimension_numbers<[1], [0], [0], [1], [0, 0, 1, 1], [], []>} : vector<128x8xf32>, vector<8x8xf32>, vector<128x8xf32> -> vector<128x8xf32>
    %55 = arith.addf %49, %54 : vector<128x8xf32>
    %c0_56 = arith.constant 0 : index
    %c0_57 = arith.constant 0 : index
    %c2 = arith.constant 2 : index
    %c0_58 = arith.constant 0 : index
    %56 = vector.load %arg8[%c0_56, %c0_57, %c2, %c0_58] : memref<2x10x10x8xf32, #tpu.memory_space<vmem>>, vector<2x10x8x8xf32>
    %57 = vector.extract_strided_slice %56 {offsets = [0, 0, 0, 0], sizes = [2, 8, 8, 8], strides = [1, 1, 1, 1]} : vector<2x10x8x8xf32> to vector<2x8x8x8xf32>
    %58 = vector.shape_cast %57 : vector<2x8x8x8xf32> to vector<128x8xf32>
    %c2_59 = arith.constant 2 : index
    %c0_60 = arith.constant 0 : index
    %c0_61 = arith.constant 0 : index
    %59 = vector.load %arg1[%c2_59, %c0_60, %c0_61] : memref<9x8x8xf32, #tpu.memory_space<vmem>>, vector<1x8x8xf32>
    %60 = vector.shape_cast %59 : vector<1x8x8xf32> to vector<8x8xf32>
    %cst_62 = arith.constant dense<0.000000e+00> : vector<128x8xf32>
    %61 = tpu.matmul %58, %60, %cst_62 {dimension_numbers = #tpu.dot_dimension_numbers<[1], [0], [0], [1], [0, 0, 1, 1], [], []>} : vector<128x8xf32>, vector<8x8xf32>, vector<128x8xf32> -> vector<128x8xf32>
    %62 = arith.addf %55, %61 : vector<128x8xf32>
    %63 = vector.extract_strided_slice %56 {offsets = [0, 1, 0, 0], sizes = [2, 8, 8, 8], strides = [1, 1, 1, 1]} : vector<2x10x8x8xf32> to vector<2x8x8x8xf32>
    %64 = vector.shape_cast %63 : vector<2x8x8x8xf32> to vector<128x8xf32>
    %c5 = arith.constant 5 : index
    %c0_63 = arith.constant 0 : index
    %c0_64 = arith.constant 0 : index
    %65 = vector.load %arg1[%c5, %c0_63, %c0_64] : memref<9x8x8xf32, #tpu.memory_space<vmem>>, vector<1x8x8xf32>
    %66 = vector.shape_cast %65 : vector<1x8x8xf32> to vector<8x8xf32>
    %cst_65 = arith.constant dense<0.000000e+00> : vector<128x8xf32>
    %67 = tpu.matmul %64, %66, %cst_65 {dimension_numbers = #tpu.dot_dimension_numbers<[1], [0], [0], [1], [0, 0, 1, 1], [], []>} : vector<128x8xf32>, vector<8x8xf32>, vector<128x8xf32> -> vector<128x8xf32>
    %68 = arith.addf %62, %67 : vector<128x8xf32>
    %69 = vector.extract_strided_slice %56 {offsets = [0, 2, 0, 0], sizes = [2, 8, 8, 8], strides = [1, 1, 1, 1]} : vector<2x10x8x8xf32> to vector<2x8x8x8xf32>
    %70 = vector.shape_cast %69 : vector<2x8x8x8xf32> to vector<128x8xf32>
    %c8 = arith.constant 8 : index
    %c0_66 = arith.constant 0 : index
    %c0_67 = arith.constant 0 : index
    %71 = vector.load %arg1[%c8, %c0_66, %c0_67] : memref<9x8x8xf32, #tpu.memory_space<vmem>>, vector<1x8x8xf32>
    %72 = vector.shape_cast %71 : vector<1x8x8xf32> to vector<8x8xf32>
    %cst_68 = arith.constant dense<0.000000e+00> : vector<128x8xf32>
    %73 = tpu.matmul %70, %72, %cst_68 {dimension_numbers = #tpu.dot_dimension_numbers<[1], [0], [0], [1], [0, 0, 1, 1], [], []>} : vector<128x8xf32>, vector<8x8xf32>, vector<128x8xf32> -> vector<128x8xf32>
    %74 = arith.addf %68, %73 : vector<128x8xf32>
    %75 = tpu.transpose %74, [1, 0] : vector<128x8xf32> -> vector<8x128xf32>
    %cst_69 = arith.constant dense<0.000000e+00> : vector<8xf32>
    %76 = vector.multi_reduction <add>, %75, %cst_69 [1] : vector<8x128xf32> to vector<8xf32>
    %77 = vector.shape_cast %76 : vector<8xf32> to vector<8x1xf32>
    %cst_70 = arith.constant 7.812500e-03 : f32
    %78 = vector.broadcast %cst_70 : f32 to vector<8x1xf32>
    %79 = arith.mulf %77, %78 : vector<8x1xf32>
    %80 = arith.mulf %75, %75 : vector<8x128xf32>
    %cst_71 = arith.constant dense<0.000000e+00> : vector<8xf32>
    %81 = vector.multi_reduction <add>, %80, %cst_71 [1] : vector<8x128xf32> to vector<8xf32>
    %82 = vector.shape_cast %81 : vector<8xf32> to vector<8x1xf32>
    %cst_72 = arith.constant 7.812500e-03 : f32
    %83 = vector.broadcast %cst_72 : f32 to vector<8x1xf32>
    %84 = arith.mulf %82, %83 : vector<8x1xf32>
    %85 = arith.mulf %79, %79 : vector<8x1xf32>
    %86 = arith.subf %84, %85 : vector<8x1xf32>
    %cst_73 = arith.constant 0.000000e+00 : f32
    %87 = vector.broadcast %cst_73 : f32 to vector<8x1xf32>
    %88 = arith.maximumf %86, %87 : vector<8x1xf32>
    %c0_74 = arith.constant 0 : index
    %c0_75 = arith.constant 0 : index
    %89 = vector.load %arg2[%c0_74, %c0_75] : memref<8x1xf32, #tpu.memory_space<vmem>>, vector<8x1xf32>
    %cst_76 = arith.constant 9.99999974E-6 : f32
    %90 = vector.broadcast %cst_76 : f32 to vector<8x1xf32>
    %91 = arith.addf %88, %90 : vector<8x1xf32>
    %92 = math.rsqrt %91 : vector<8x1xf32>
    %93 = arith.mulf %89, %92 : vector<8x1xf32>
    %c0_77 = arith.constant 0 : index
    %c0_78 = arith.constant 0 : index
    %94 = vector.load %arg3[%c0_77, %c0_78] : memref<8x1xf32, #tpu.memory_space<vmem>>, vector<8x1xf32>
    %95 = arith.mulf %79, %93 : vector<8x1xf32>
    %96 = arith.subf %94, %95 : vector<8x1xf32>
    %97 = vector.broadcast %93 : vector<8x1xf32> to vector<8x128xf32>
    %98 = arith.mulf %75, %97 : vector<8x128xf32>
    %99 = vector.broadcast %96 : vector<8x1xf32> to vector<8x128xf32>
    %100 = arith.addf %98, %99 : vector<8x128xf32>
    %cst_79 = arith.constant 0.000000e+00 : f32
    %101 = vector.broadcast %cst_79 : f32 to vector<8x128xf32>
    %102 = arith.maximumf %100, %101 : vector<8x128xf32>
    %103 = tpu.transpose %102, [1, 0] : vector<8x128xf32> -> vector<128x8xf32>
    %104 = vector.shape_cast %103 : vector<128x8xf32> to vector<2x8x8x8xf32>
    %c0_80 = arith.constant 0 : index
    %c1_81 = arith.constant 1 : index
    %c1_82 = arith.constant 1 : index
    %c0_83 = arith.constant 0 : index
    %105 = vector.load %arg8[%c0_80, %c1_81, %c1_82, %c0_83] : memref<2x10x10x8xf32, #tpu.memory_space<vmem>>, vector<2x8x8x8xf32>
    tpu.vector_store %arg8[%c0_80, %c1_81, %c1_82, %c0_83], %104 {strides = array<i32>} : memref<2x10x10x8xf32, #tpu.memory_space<vmem>>, vector<2x8x8x8xf32>,
    %c0_84 = arith.constant 0 : index
    %c0_85 = arith.constant 0 : index
    %c0_86 = arith.constant 0 : index
    %c0_87 = arith.constant 0 : index
    %106 = vector.load %arg8[%c0_84, %c0_85, %c0_86, %c0_87] : memref<2x10x10x8xf32, #tpu.memory_space<vmem>>, vector<2x10x8x8xf32>
    %107 = vector.extract_strided_slice %106 {offsets = [0, 0, 0, 0], sizes = [2, 8, 8, 8], strides = [1, 1, 1, 1]} : vector<2x10x8x8xf32> to vector<2x8x8x8xf32>
    %108 = vector.shape_cast %107 : vector<2x8x8x8xf32> to vector<128x8xf32>
    %c0_88 = arith.constant 0 : index
    %c0_89 = arith.constant 0 : index
    %c0_90 = arith.constant 0 : index
    %109 = vector.load %arg4[%c0_88, %c0_89, %c0_90] : memref<9x8x8xf32, #tpu.memory_space<vmem>>, vector<1x8x8xf32>
    %110 = vector.shape_cast %109 : vector<1x8x8xf32> to vector<8x8xf32>
    %cst_91 = arith.constant dense<0.000000e+00> : vector<128x8xf32>
    %111 = tpu.matmul %108, %110, %cst_91 {dimension_numbers = #tpu.dot_dimension_numbers<[1], [0], [0], [1], [0, 0, 1, 1], [], []>} : vector<128x8xf32>, vector<8x8xf32>, vector<128x8xf32> -> vector<128x8xf32>
    %112 = vector.extract_strided_slice %106 {offsets = [0, 1, 0, 0], sizes = [2, 8, 8, 8], strides = [1, 1, 1, 1]} : vector<2x10x8x8xf32> to vector<2x8x8x8xf32>
    %113 = vector.shape_cast %112 : vector<2x8x8x8xf32> to vector<128x8xf32>
    %c3_92 = arith.constant 3 : index
    %c0_93 = arith.constant 0 : index
    %c0_94 = arith.constant 0 : index
    %114 = vector.load %arg4[%c3_92, %c0_93, %c0_94] : memref<9x8x8xf32, #tpu.memory_space<vmem>>, vector<1x8x8xf32>
    %115 = vector.shape_cast %114 : vector<1x8x8xf32> to vector<8x8xf32>
    %cst_95 = arith.constant dense<0.000000e+00> : vector<128x8xf32>
    %116 = tpu.matmul %113, %115, %cst_95 {dimension_numbers = #tpu.dot_dimension_numbers<[1], [0], [0], [1], [0, 0, 1, 1], [], []>} : vector<128x8xf32>, vector<8x8xf32>, vector<128x8xf32> -> vector<128x8xf32>
    %117 = arith.addf %111, %116 : vector<128x8xf32>
    %118 = vector.extract_strided_slice %106 {offsets = [0, 2, 0, 0], sizes = [2, 8, 8, 8], strides = [1, 1, 1, 1]} : vector<2x10x8x8xf32> to vector<2x8x8x8xf32>
    %119 = vector.shape_cast %118 : vector<2x8x8x8xf32> to vector<128x8xf32>
    %c6_96 = arith.constant 6 : index
    %c0_97 = arith.constant 0 : index
    %c0_98 = arith.constant 0 : index
    %120 = vector.load %arg4[%c6_96, %c0_97, %c0_98] : memref<9x8x8xf32, #tpu.memory_space<vmem>>, vector<1x8x8xf32>
    %121 = vector.shape_cast %120 : vector<1x8x8xf32> to vector<8x8xf32>
    %cst_99 = arith.constant dense<0.000000e+00> : vector<128x8xf32>
    %122 = tpu.matmul %119, %121, %cst_99 {dimension_numbers = #tpu.dot_dimension_numbers<[1], [0], [0], [1], [0, 0, 1, 1], [], []>} : vector<128x8xf32>, vector<8x8xf32>, vector<128x8xf32> -> vector<128x8xf32>
    %123 = arith.addf %117, %122 : vector<128x8xf32>
    %c0_100 = arith.constant 0 : index
    %c0_101 = arith.constant 0 : index
    %c1_102 = arith.constant 1 : index
    %c0_103 = arith.constant 0 : index
    %124 = vector.load %arg8[%c0_100, %c0_101, %c1_102, %c0_103] : memref<2x10x10x8xf32, #tpu.memory_space<vmem>>, vector<2x10x8x8xf32>
    %125 = vector.extract_strided_slice %124 {offsets = [0, 0, 0, 0], sizes = [2, 8, 8, 8], strides = [1, 1, 1, 1]} : vector<2x10x8x8xf32> to vector<2x8x8x8xf32>
    %126 = vector.shape_cast %125 : vector<2x8x8x8xf32> to vector<128x8xf32>
    %c1_104 = arith.constant 1 : index
    %c0_105 = arith.constant 0 : index
    %c0_106 = arith.constant 0 : index
    %127 = vector.load %arg4[%c1_104, %c0_105, %c0_106] : memref<9x8x8xf32, #tpu.memory_space<vmem>>, vector<1x8x8xf32>
    %128 = vector.shape_cast %127 : vector<1x8x8xf32> to vector<8x8xf32>
    %cst_107 = arith.constant dense<0.000000e+00> : vector<128x8xf32>
    %129 = tpu.matmul %126, %128, %cst_107 {dimension_numbers = #tpu.dot_dimension_numbers<[1], [0], [0], [1], [0, 0, 1, 1], [], []>} : vector<128x8xf32>, vector<8x8xf32>, vector<128x8xf32> -> vector<128x8xf32>
    %130 = arith.addf %123, %129 : vector<128x8xf32>
    %131 = vector.extract_strided_slice %124 {offsets = [0, 1, 0, 0], sizes = [2, 8, 8, 8], strides = [1, 1, 1, 1]} : vector<2x10x8x8xf32> to vector<2x8x8x8xf32>
    %132 = vector.shape_cast %131 : vector<2x8x8x8xf32> to vector<128x8xf32>
    %c4_108 = arith.constant 4 : index
    %c0_109 = arith.constant 0 : index
    %c0_110 = arith.constant 0 : index
    %133 = vector.load %arg4[%c4_108, %c0_109, %c0_110] : memref<9x8x8xf32, #tpu.memory_space<vmem>>, vector<1x8x8xf32>
    %134 = vector.shape_cast %133 : vector<1x8x8xf32> to vector<8x8xf32>
    %cst_111 = arith.constant dense<0.000000e+00> : vector<128x8xf32>
    %135 = tpu.matmul %132, %134, %cst_111 {dimension_numbers = #tpu.dot_dimension_numbers<[1], [0], [0], [1], [0, 0, 1, 1], [], []>} : vector<128x8xf32>, vector<8x8xf32>, vector<128x8xf32> -> vector<128x8xf32>
    %136 = arith.addf %130, %135 : vector<128x8xf32>
    %137 = vector.extract_strided_slice %124 {offsets = [0, 2, 0, 0], sizes = [2, 8, 8, 8], strides = [1, 1, 1, 1]} : vector<2x10x8x8xf32> to vector<2x8x8x8xf32>
    %138 = vector.shape_cast %137 : vector<2x8x8x8xf32> to vector<128x8xf32>
    %c7_112 = arith.constant 7 : index
    %c0_113 = arith.constant 0 : index
    %c0_114 = arith.constant 0 : index
    %139 = vector.load %arg4[%c7_112, %c0_113, %c0_114] : memref<9x8x8xf32, #tpu.memory_space<vmem>>, vector<1x8x8xf32>
    %140 = vector.shape_cast %139 : vector<1x8x8xf32> to vector<8x8xf32>
    %cst_115 = arith.constant dense<0.000000e+00> : vector<128x8xf32>
    %141 = tpu.matmul %138, %140, %cst_115 {dimension_numbers = #tpu.dot_dimension_numbers<[1], [0], [0], [1], [0, 0, 1, 1], [], []>} : vector<128x8xf32>, vector<8x8xf32>, vector<128x8xf32> -> vector<128x8xf32>
    %142 = arith.addf %136, %141 : vector<128x8xf32>
    %c0_116 = arith.constant 0 : index
    %c0_117 = arith.constant 0 : index
    %c2_118 = arith.constant 2 : index
    %c0_119 = arith.constant 0 : index
    %143 = vector.load %arg8[%c0_116, %c0_117, %c2_118, %c0_119] : memref<2x10x10x8xf32, #tpu.memory_space<vmem>>, vector<2x10x8x8xf32>
    %144 = vector.extract_strided_slice %143 {offsets = [0, 0, 0, 0], sizes = [2, 8, 8, 8], strides = [1, 1, 1, 1]} : vector<2x10x8x8xf32> to vector<2x8x8x8xf32>
    %145 = vector.shape_cast %144 : vector<2x8x8x8xf32> to vector<128x8xf32>
    %c2_120 = arith.constant 2 : index
    %c0_121 = arith.constant 0 : index
    %c0_122 = arith.constant 0 : index
    %146 = vector.load %arg4[%c2_120, %c0_121, %c0_122] : memref<9x8x8xf32, #tpu.memory_space<vmem>>, vector<1x8x8xf32>
    %147 = vector.shape_cast %146 : vector<1x8x8xf32> to vector<8x8xf32>
    %cst_123 = arith.constant dense<0.000000e+00> : vector<128x8xf32>
    %148 = tpu.matmul %145, %147, %cst_123 {dimension_numbers = #tpu.dot_dimension_numbers<[1], [0], [0], [1], [0, 0, 1, 1], [], []>} : vector<128x8xf32>, vector<8x8xf32>, vector<128x8xf32> -> vector<128x8xf32>
    %149 = arith.addf %142, %148 : vector<128x8xf32>
    %150 = vector.extract_strided_slice %143 {offsets = [0, 1, 0, 0], sizes = [2, 8, 8, 8], strides = [1, 1, 1, 1]} : vector<2x10x8x8xf32> to vector<2x8x8x8xf32>
    %151 = vector.shape_cast %150 : vector<2x8x8x8xf32> to vector<128x8xf32>
    %c5_124 = arith.constant 5 : index
    %c0_125 = arith.constant 0 : index
    %c0_126 = arith.constant 0 : index
    %152 = vector.load %arg4[%c5_124, %c0_125, %c0_126] : memref<9x8x8xf32, #tpu.memory_space<vmem>>, vector<1x8x8xf32>
    %153 = vector.shape_cast %152 : vector<1x8x8xf32> to vector<8x8xf32>
    %cst_127 = arith.constant dense<0.000000e+00> : vector<128x8xf32>
    %154 = tpu.matmul %151, %153, %cst_127 {dimension_numbers = #tpu.dot_dimension_numbers<[1], [0], [0], [1], [0, 0, 1, 1], [], []>} : vector<128x8xf32>, vector<8x8xf32>, vector<128x8xf32> -> vector<128x8xf32>
    %155 = arith.addf %149, %154 : vector<128x8xf32>
    %156 = vector.extract_strided_slice %143 {offsets = [0, 2, 0, 0], sizes = [2, 8, 8, 8], strides = [1, 1, 1, 1]} : vector<2x10x8x8xf32> to vector<2x8x8x8xf32>
    %157 = vector.shape_cast %156 : vector<2x8x8x8xf32> to vector<128x8xf32>
    %c8_128 = arith.constant 8 : index
    %c0_129 = arith.constant 0 : index
    %c0_130 = arith.constant 0 : index
    %158 = vector.load %arg4[%c8_128, %c0_129, %c0_130] : memref<9x8x8xf32, #tpu.memory_space<vmem>>, vector<1x8x8xf32>
    %159 = vector.shape_cast %158 : vector<1x8x8xf32> to vector<8x8xf32>
    %cst_131 = arith.constant dense<0.000000e+00> : vector<128x8xf32>
    %160 = tpu.matmul %157, %159, %cst_131 {dimension_numbers = #tpu.dot_dimension_numbers<[1], [0], [0], [1], [0, 0, 1, 1], [], []>} : vector<128x8xf32>, vector<8x8xf32>, vector<128x8xf32> -> vector<128x8xf32>
    %161 = arith.addf %155, %160 : vector<128x8xf32>
    %162 = tpu.transpose %161, [1, 0] : vector<128x8xf32> -> vector<8x128xf32>
    %cst_132 = arith.constant dense<0.000000e+00> : vector<8xf32>
    %163 = vector.multi_reduction <add>, %162, %cst_132 [1] : vector<8x128xf32> to vector<8xf32>
    %164 = vector.shape_cast %163 : vector<8xf32> to vector<8x1xf32>
    %cst_133 = arith.constant 7.812500e-03 : f32
    %165 = vector.broadcast %cst_133 : f32 to vector<8x1xf32>
    %166 = arith.mulf %164, %165 : vector<8x1xf32>
    %167 = arith.mulf %162, %162 : vector<8x128xf32>
    %cst_134 = arith.constant dense<0.000000e+00> : vector<8xf32>
    %168 = vector.multi_reduction <add>, %167, %cst_134 [1] : vector<8x128xf32> to vector<8xf32>
    %169 = vector.shape_cast %168 : vector<8xf32> to vector<8x1xf32>
    %cst_135 = arith.constant 7.812500e-03 : f32
    %170 = vector.broadcast %cst_135 : f32 to vector<8x1xf32>
    %171 = arith.mulf %169, %170 : vector<8x1xf32>
    %172 = arith.mulf %166, %166 : vector<8x1xf32>
    %173 = arith.subf %171, %172 : vector<8x1xf32>
    %cst_136 = arith.constant 0.000000e+00 : f32
    %174 = vector.broadcast %cst_136 : f32 to vector<8x1xf32>
    %175 = arith.maximumf %173, %174 : vector<8x1xf32>
    %c0_137 = arith.constant 0 : index
    %c0_138 = arith.constant 0 : index
    %176 = vector.load %arg5[%c0_137, %c0_138] : memref<8x1xf32, #tpu.memory_space<vmem>>, vector<8x1xf32>
    %cst_139 = arith.constant 9.99999974E-6 : f32
    %177 = vector.broadcast %cst_139 : f32 to vector<8x1xf32>
    %178 = arith.addf %175, %177 : vector<8x1xf32>
    %179 = math.rsqrt %178 : vector<8x1xf32>
    %180 = arith.mulf %176, %179 : vector<8x1xf32>
    %c0_140 = arith.constant 0 : index
    %c0_141 = arith.constant 0 : index
    %181 = vector.load %arg6[%c0_140, %c0_141] : memref<8x1xf32, #tpu.memory_space<vmem>>, vector<8x1xf32>
    %182 = arith.mulf %166, %180 : vector<8x1xf32>
    %183 = arith.subf %181, %182 : vector<8x1xf32>
    %184 = vector.broadcast %180 : vector<8x1xf32> to vector<8x128xf32>
    %185 = arith.mulf %162, %184 : vector<8x128xf32>
    %186 = vector.broadcast %183 : vector<8x1xf32> to vector<8x128xf32>
    %187 = arith.addf %185, %186 : vector<8x128xf32>
    %cst_142 = arith.constant 0.000000e+00 : f32
    %188 = vector.broadcast %cst_142 : f32 to vector<8x128xf32>
    %189 = arith.maximumf %187, %188 : vector<8x128xf32>
    %c0_143 = arith.constant 0 : index
    %c0_144 = arith.constant 0 : index
    %190 = vector.load %arg7[%c0_143, %c0_144] : memref<8x128xf32, #tpu.memory_space<vmem>>, vector<8x128xf32>
    tpu.vector_store %arg7[%c0_143, %c0_144], %189 {strides = array<i32>} : memref<8x128xf32, #tpu.memory_space<vmem>>, vector<8x128xf32>,
    return
  }
}

</mosaic_0001>

<llo_original>
// kernel: tpu_custom_call.1
$region0: #{tpu_custom_call.1}
  #allocation0 [shape = 'u32[]', space=smem, size = 0x4, offset = 0x4, fixed_abs, tag = 'smem constant byte address 0x4 - core index']
  #allocation1 [shape = 'u32[144,128]{1,0:T(1,128)}', space=vmem, size = 0x12000, scoped, tag = 'internal scratch']
  #allocation2 [shape = 'f32[2,10,10,8]{3,2,1,0:T(8,128)}', space=vmem, size = 0x28000, scoped, tag = 'scratch operand']
  %s0 = inlined_call_operand.vmem [shape: f32[2,16,16,8], index: 0, kind: input, shape index: {}]
  %s1 = inlined_call_operand.vmem [shape: f32[9,8,8], index: 1, kind: input, shape index: {}]
  %s2 = inlined_call_operand.vmem [shape: f32[8,1], index: 2, kind: input, shape index: {}]
  %s3 = inlined_call_operand.vmem [shape: f32[8,1], index: 3, kind: input, shape index: {}]
  %s4 = inlined_call_operand.vmem [shape: f32[9,8,8], index: 4, kind: input, shape index: {}]
  %s5 = inlined_call_operand.vmem [shape: f32[8,1], index: 5, kind: input, shape index: {}]
  %s6 = inlined_call_operand.vmem [shape: f32[8,1], index: 6, kind: input, shape index: {}]
  %s7 = inlined_call_operand.hbm [shape: f32[8,128], index: 7, kind: output, shape index: {}]
  %s8 = sld [smem:[#allocation0]]
  $region38: #{tpu_custom_call.1} parent=0
    _
  %s10 = ssub.s32 1, %s8
  %s11 = scalar_select 0, %s10, %s8
  $region1: #{tpu_custom_call.1} parent=0
    #allocation3 [shape = 'u8[4096]{0}', space=vmem, size = 0x1000, scoped, tag = 'output window, operand 0, single buffered']
    #allocation4 [shape = 's32[1]{0}', space=sflag, size = 0x4, scoped, tag = 'scoped memory for tpu_custom_call.1']
    %12 = vsyncpa [#allocation4], 0
    // Predicated region
    $region2: #{tpu_custom_call.1} parent=1 // pred_check
      _
    $region3: #{tpu_custom_call.1} parent=1 // pred_check_branch
      %14 = sbr.rel (0) target = $region5
    $region4: #{tpu_custom_call.1} parent=1 // pred_region
      _
    $region5: #{tpu_custom_call.1} parent=1 // pred_fallthru
      _
    // Predicated region
    $region6: #{tpu_custom_call.1} parent=1 // pred_check
      _
    $region7: #{tpu_custom_call.1} parent=1 // pred_check_branch
      %16 = sbr.rel (0) target = $region9
    $region8: #{tpu_custom_call.1} parent=1 // pred_region
      _
    $region9: #{tpu_custom_call.1} parent=1 // pred_fallthru
      _
    // Predicated region
    $region10: #{tpu_custom_call.1} parent=1 // pred_check
      _
    $region11: #{tpu_custom_call.1} parent=1 // pred_check_branch
      %18 = sbr.rel (0) target = $region13
    $region12: #{tpu_custom_call.1} parent=1 // pred_region
      _
    $region13: #{tpu_custom_call.1} parent=1 // pred_fallthru
      _
    // Predicated region
    $region14: #{tpu_custom_call.1} parent=1 // pred_check
      _
    $region15: #{tpu_custom_call.1} parent=1 // pred_check_branch
      %20 = sbr.rel (0) target = $region17
    $region16: #{tpu_custom_call.1} parent=1 // pred_region
      _
    $region17: #{tpu_custom_call.1} parent=1 // pred_fallthru
      _
    // Predicated region
    $region18: #{tpu_custom_call.1} parent=1 // pred_check
      _
    $region19: #{tpu_custom_call.1} parent=1 // pred_check_branch
      %22 = sbr.rel (0) target = $region21
    $region20: #{tpu_custom_call.1} parent=1 // pred_region
      _
    $region21: #{tpu_custom_call.1} parent=1 // pred_fallthru
      _
    // Predicated region
    $region22: #{tpu_custom_call.1} parent=1 // pred_check
      _
    $region23: #{tpu_custom_call.1} parent=1 // pred_check_branch
      %24 = sbr.rel (0) target = $region25
    $region24: #{tpu_custom_call.1} parent=1 // pred_region
      _
    $region25: #{tpu_custom_call.1} parent=1 // pred_fallthru
      _
    // Predicated region
    $region26: #{tpu_custom_call.1} parent=1 // pred_check
      _
    $region27: #{tpu_custom_call.1} parent=1 // pred_check_branch
      %26 = sbr.rel (0) target = $region29
    $region28: #{tpu_custom_call.1} parent=1 // pred_region
      _
    $region29: #{tpu_custom_call.1} parent=1 // pred_fallthru
      _
    %v27 = vld [vmem:[%s0] ss:$2 sm:$0xff]
    %s28 = scalar_lea.vmem %s0, 16
    %v29 = vld [vmem:[%s28] ss:$2 sm:$0xff]
    %s30 = scalar_lea.vmem %s0, 32
    %v31 = vld [vmem:[%s30] ss:$2 sm:$0xff]
    %s32 = scalar_lea.vmem %s0, 48
    %v33 = vld [vmem:[%s32] ss:$2 sm:$0xff]
    %s34 = scalar_lea.vmem %s0, 64
    %v35 = vld [vmem:[%s34] ss:$2 sm:$0xff]
    %s36 = scalar_lea.vmem %s0, 80
    %v37 = vld [vmem:[%s36] ss:$2 sm:$0xff]
    %s38 = scalar_lea.vmem %s0, 96
    %v39 = vld [vmem:[%s38] ss:$2 sm:$0xff]
    %s40 = scalar_lea.vmem %s0, 112
    %v41 = vld [vmem:[%s40] ss:$2 sm:$0xff]
    %s42 = scalar_lea.vmem %s0, 128
    %v43 = vld [vmem:[%s42] ss:$2 sm:$0xff]
    %s44 = scalar_lea.vmem %s0, 144
    %v45 = vld [vmem:[%s44] ss:$2 sm:$0xff]
    %s46 = scalar_lea.vmem %s0, 160
    %v47 = vld [vmem:[%s46] ss:$2 sm:$0xff]
    %s48 = scalar_lea.vmem %s0, 176
    %v49 = vld [vmem:[%s48] ss:$2 sm:$0xff]
    %s50 = scalar_lea.vmem %s0, 192
    %v51 = vld [vmem:[%s50] ss:$2 sm:$0xff]
    %s52 = scalar_lea.vmem %s0, 208
    %v53 = vld [vmem:[%s52] ss:$2 sm:$0xff]
    %s54 = scalar_lea.vmem %s0, 224
    %v55 = vld [vmem:[%s54] ss:$2 sm:$0xff]
    %s56 = scalar_lea.vmem %s0, 240
    %v57 = vld [vmem:[%s56] ss:$2 sm:$0xff]
    %s58 = scalar_lea.vmem %s0, 256
    %v59 = vld [vmem:[%s58] ss:$2 sm:$0xff]
    %s60 = scalar_lea.vmem %s0, 272
    %v61 = vld [vmem:[%s60] ss:$2 sm:$0xff]
    %s62 = scalar_lea.vmem %s0, 288
    %v63 = vld [vmem:[%s62] ss:$2 sm:$0xff]
    %s64 = scalar_lea.vmem %s0, 304
    %v65 = vld [vmem:[%s64] ss:$2 sm:$0xff]
    %s66 = scalar_lea.vmem %s0, 320
    %v67 = vld [vmem:[%s66] ss:$2 sm:$0xff]
    %s68 = scalar_lea.vmem %s0, 336
    %v69 = vld [vmem:[%s68] ss:$2 sm:$0xff]
    %s70 = scalar_lea.vmem %s0, 352
    %v71 = vld [vmem:[%s70] ss:$2 sm:$0xff]
    %s72 = scalar_lea.vmem %s0, 368
    %v73 = vld [vmem:[%s72] ss:$2 sm:$0xff]
    %s74 = scalar_lea.vmem %s0, 384
    %v75 = vld [vmem:[%s74] ss:$2 sm:$0xff]
    %s76 = scalar_lea.vmem %s0, 400
    %v77 = vld [vmem:[%s76] ss:$2 sm:$0xff]
    %s78 = scalar_lea.vmem %s0, 416
    %v79 = vld [vmem:[%s78] ss:$2 sm:$0xff]
    %s80 = scalar_lea.vmem %s0, 432
    %v81 = vld [vmem:[%s80] ss:$2 sm:$0xff]
    %s82 = scalar_lea.vmem %s0, 448
    %v83 = vld [vmem:[%s82] ss:$2 sm:$0xff]
    %s84 = scalar_lea.vmem %s0, 464
    %v85 = vld [vmem:[%s84] ss:$2 sm:$0xff]
    %s86 = scalar_lea.vmem %s0, 480
    %v87 = vld [vmem:[%s86] ss:$2 sm:$0xff]
    %s88 = scalar_lea.vmem %s0, 496
    %v89 = vld [vmem:[%s88] ss:$2 sm:$0xff]
    %s90 = scalar_lea.vmem %s0, 1
    %v91 = vld [vmem:[%s90] ss:$2 sm:$0xff]
    %s92 = scalar_lea.vmem %s0, 17
    %v93 = vld [vmem:[%s92] ss:$2 sm:$0xff]
    %s94 = scalar_lea.vmem %s0, 33
    %v95 = vld [vmem:[%s94] ss:$2 sm:$0xff]
    %s96 = scalar_lea.vmem %s0, 49
    %v97 = vld [vmem:[%s96] ss:$2 sm:$0xff]
    %s98 = scalar_lea.vmem %s0, 65
    %v99 = vld [vmem:[%s98] ss:$2 sm:$0xff]
    %s100 = scalar_lea.vmem %s0, 81
    %v101 = vld [vmem:[%s100] ss:$2 sm:$0xff]
    %s102 = scalar_lea.vmem %s0, 97
    %v103 = vld [vmem:[%s102] ss:$2 sm:$0xff]
    %s104 = scalar_lea.vmem %s0, 113
    %v105 = vld [vmem:[%s104] ss:$2 sm:$0xff]
    %s106 = scalar_lea.vmem %s0, 129
    %v107 = vld [vmem:[%s106] ss:$2 sm:$0xff]
    %s108 = scalar_lea.vmem %s0, 145
    %v109 = vld [vmem:[%s108] ss:$2 sm:$0xff]
    %s110 = scalar_lea.vmem %s0, 161
    %v111 = vld [vmem:[%s110] ss:$2 sm:$0xff]
    %s112 = scalar_lea.vmem %s0, 177
    %v113 = vld [vmem:[%s112] ss:$2 sm:$0xff]
    %s114 = scalar_lea.vmem %s0, 193
    %v115 = vld [vmem:[%s114] ss:$2 sm:$0xff]
    %s116 = scalar_lea.vmem %s0, 209
    %v117 = vld [vmem:[%s116] ss:$2 sm:$0xff]
    %s118 = scalar_lea.vmem %s0, 225
    %v119 = vld [vmem:[%s118] ss:$2 sm:$0xff]
    %s120 = scalar_lea.vmem %s0, 241
    %v121 = vld [vmem:[%s120] ss:$2 sm:$0xff]
    %s122 = scalar_lea.vmem %s0, 257
    %v123 = vld [vmem:[%s122] ss:$2 sm:$0xff]
    %s124 = scalar_lea.vmem %s0, 273
    %v125 = vld [vmem:[%s124] ss:$2 sm:$0xff]
    %s126 = scalar_lea.vmem %s0, 289
    %v127 = vld [vmem:[%s126] ss:$2 sm:$0xff]
    %s128 = scalar_lea.vmem %s0, 305
    %v129 = vld [vmem:[%s128] ss:$2 sm:$0xff]
    %s130 = scalar_lea.vmem %s0, 321
    %v131 = vld [vmem:[%s130] ss:$2 sm:$0xff]
    %s132 = scalar_lea.vmem %s0, 337
    %v133 = vld [vmem:[%s132] ss:$2 sm:$0xff]
    %s134 = scalar_lea.vmem %s0, 353
    %v135 = vld [vmem:[%s134] ss:$2 sm:$0xff]
    %s136 = scalar_lea.vmem %s0, 369
    %v137 = vld [vmem:[%s136] ss:$2 sm:$0xff]
    %s138 = scalar_lea.vmem %s0, 385
    %v139 = vld [vmem:[%s138] ss:$2 sm:$0xff]
    %s140 = scalar_lea.vmem %s0, 401
    %v141 = vld [vmem:[%s140] ss:$2 sm:$0xff]
    %s142 = scalar_lea.vmem %s0, 417
    %v143 = vld [vmem:[%s142] ss:$2 sm:$0xff]
    %s144 = scalar_lea.vmem %s0, 433
    %v145 = vld [vmem:[%s144] ss:$2 sm:$0xff]
    %s146 = scalar_lea.vmem %s0, 449
    %v147 = vld [vmem:[%s146] ss:$2 sm:$0xff]
    %s148 = scalar_lea.vmem %s0, 465
    %v149 = vld [vmem:[%s148] ss:$2 sm:$0xff]
    %s150 = scalar_lea.vmem %s0, 481
    %v151 = vld [vmem:[%s150] ss:$2 sm:$0xff]
    %s152 = scalar_lea.vmem %s0, 497
    %v153 = vld [vmem:[%s152] ss:$2 sm:$0xff]
    %v154 = vmax.f32 %v27, %v91
    %v155 = vmax.f32 %v29, %v93
    %v156 = vmax.f32 %v31, %v95
    %v157 = vmax.f32 %v33, %v97
    %v158 = vmax.f32 %v35, %v99
    %v159 = vmax.f32 %v37, %v101
    %v160 = vmax.f32 %v39, %v103
    %v161 = vmax.f32 %v41, %v105
    %v162 = vmax.f32 %v43, %v107
    %v163 = vmax.f32 %v45, %v109
    %v164 = vmax.f32 %v47, %v111
    %v165 = vmax.f32 %v49, %v113
    %v166 = vmax.f32 %v51, %v115
    %v167 = vmax.f32 %v53, %v117
    %v168 = vmax.f32 %v55, %v119
    %v169 = vmax.f32 %v57, %v121
    %v170 = vmax.f32 %v59, %v123
    %v171 = vmax.f32 %v61, %v125
    %v172 = vmax.f32 %v63, %v127
    %v173 = vmax.f32 %v65, %v129
    %v174 = vmax.f32 %v67, %v131
    %v175 = vmax.f32 %v69, %v133
    %v176 = vmax.f32 %v71, %v135
    %v177 = vmax.f32 %v73, %v137
    %v178 = vmax.f32 %v75, %v139
    %v179 = vmax.f32 %v77, %v141
    %v180 = vmax.f32 %v79, %v143
    %v181 = vmax.f32 %v81, %v145
    %v182 = vmax.f32 %v83, %v147
    %v183 = vmax.f32 %v85, %v149
    %v184 = vmax.f32 %v87, %v151
    %v185 = vmax.f32 %v89, %v153
    %v186 = vmax.f32 %v154, %v155
    %v187 = vmax.f32 %v156, %v157
    %v188 = vmax.f32 %v158, %v159
    %v189 = vmax.f32 %v160, %v161
    %v190 = vmax.f32 %v162, %v163
    %v191 = vmax.f32 %v164, %v165
    %v192 = vmax.f32 %v166, %v167
    %v193 = vmax.f32 %v168, %v169
    %v194 = vmax.f32 %v170, %v171
    %v195 = vmax.f32 %v172, %v173
    %v196 = vmax.f32 %v174, %v175
    %v197 = vmax.f32 %v176, %v177
    %v198 = vmax.f32 %v178, %v179
    %v199 = vmax.f32 %v180, %v181
    %v200 = vmax.f32 %v182, %v183
    %v201 = vmax.f32 %v184, %v185
    %vm202 = vcmask 64512
    %203 = vst.msk [vmem:[#allocation2] sm:$0xff] %vm202, 0.0
    %vm204 = vcmask 58368
    %205 = vst.msk [vmem:[#allocation2 + $0x8] sm:$0x3] %vm204, 0.0
    %206 = vst.msk [vmem:[#allocation2 + $0xa0] sm:$0xff] %vm202, 0.0
    %207 = vst.msk [vmem:[#allocation2 + $0xa8] sm:$0x3] %vm204, 0.0
    %s208 = scalar_lea.vmem [#allocation2], 144
    %209 = vst.msk [vmem:[%s208] sm:$0xff] %vm202, 0.0
    %210 = vst.msk [vmem:[%s208 + $0x8] sm:$0x3] %vm204, 0.0
    %211 = vst.msk [vmem:[%s208 + $0xa0] sm:$0xff] %vm202, 0.0
    %212 = vst.msk [vmem:[%s208 + $0xa8] sm:$0x3] %vm204, 0.0
    %vm213 = vcmask 57344
    %214 = vst.msk [vmem:[#allocation2] sm:$0x1] %vm213, 0.0
    %215 = vst.msk [vmem:[#allocation2 + $0x10] sm:$0x1] %vm213, 0.0
    %216 = vst.msk [vmem:[#allocation2 + $0x20] sm:$0x1] %vm213, 0.0
    %217 = vst.msk [vmem:[#allocation2 + $0x30] sm:$0x1] %vm213, 0.0
    %218 = vst.msk [vmem:[#allocation2 + $0x40] sm:$0x1] %vm213, 0.0
    %219 = vst.msk [vmem:[#allocation2 + $0x50] sm:$0x1] %vm213, 0.0
    %220 = vst.msk [vmem:[#allocation2 + $0x60] sm:$0x1] %vm213, 0.0
    %221 = vst.msk [vmem:[#allocation2 + $0x70] sm:$0x1] %vm213, 0.0
    %222 = vst.msk [vmem:[#allocation2 + $0x80] sm:$0x1] %vm213, 0.0
    %223 = vst.msk [vmem:[#allocation2 + $0x90] sm:$0x1] %vm213, 0.0
    %224 = vst.msk [vmem:[#allocation2 + $0xa0] sm:$0x1] %vm213, 0.0
    %225 = vst.msk [vmem:[#allocation2 + $0xb0] sm:$0x1] %vm213, 0.0
    %226 = vst.msk [vmem:[#allocation2 + $0xc0] sm:$0x1] %vm213, 0.0
    %227 = vst.msk [vmem:[#allocation2 + $0xd0] sm:$0x1] %vm213, 0.0
    %228 = vst.msk [vmem:[#allocation2 + $0xe0] sm:$0x1] %vm213, 0.0
    %229 = vst.msk [vmem:[#allocation2 + $0xf0] sm:$0x1] %vm213, 0.0
    %230 = vst.msk [vmem:[#allocation2 + $0x100] sm:$0x1] %vm213, 0.0
    %231 = vst.msk [vmem:[#allocation2 + $0x110] sm:$0x1] %vm213, 0.0
    %232 = vst.msk [vmem:[#allocation2 + $0x120] sm:$0x1] %vm213, 0.0
    %233 = vst.msk [vmem:[#allocation2 + $0x130] sm:$0x1] %vm213, 0.0
    %234 = vst.msk [vmem:[#allocation2 + $0x9] sm:$0x1] %vm213, 0.0
    %235 = vst.msk [vmem:[#allocation2 + $0x19] sm:$0x1] %vm213, 0.0
    %236 = vst.msk [vmem:[#allocation2 + $0x29] sm:$0x1] %vm213, 0.0
    %237 = vst.msk [vmem:[#allocation2 + $0x39] sm:$0x1] %vm213, 0.0
    %238 = vst.msk [vmem:[#allocation2 + $0x49] sm:$0x1] %vm213, 0.0
    %239 = vst.msk [vmem:[#allocation2 + $0x59] sm:$0x1] %vm213, 0.0
    %240 = vst.msk [vmem:[#allocation2 + $0x69] sm:$0x1] %vm213, 0.0
    %241 = vst.msk [vmem:[#allocation2 + $0x79] sm:$0x1] %vm213, 0.0
    %242 = vst.msk [vmem:[#allocation2 + $0x89] sm:$0x1] %vm213, 0.0
    %243 = vst.msk [vmem:[#allocation2 + $0x99] sm:$0x1] %vm213, 0.0
    %244 = vst.msk [vmem:[#allocation2 + $0xa9] sm:$0x1] %vm213, 0.0
    %245 = vst.msk [vmem:[#allocation2 + $0xb9] sm:$0x1] %vm213, 0.0
    %246 = vst.msk [vmem:[#allocation2 + $0xc9] sm:$0x1] %vm213, 0.0
    %247 = vst.msk [vmem:[#allocation2 + $0xd9] sm:$0x1] %vm213, 0.0
    %248 = vst.msk [vmem:[#allocation2 + $0xe9] sm:$0x1] %vm213, 0.0
    %249 = vst.msk [vmem:[#allocation2 + $0xf9] sm:$0x1] %vm213, 0.0
    %250 = vst.msk [vmem:[#allocation2 + $0x109] sm:$0x1] %vm213, 0.0
    %251 = vst.msk [vmem:[#allocation2 + $0x119] sm:$0x1] %vm213, 0.0
    %252 = vst.msk [vmem:[#allocation2 + $0x129] sm:$0x1] %vm213, 0.0
    %253 = vst.msk [vmem:[#allocation2 + $0x139] sm:$0x1] %vm213, 0.0
    %s254 = scalar_lea.vmem [#allocation2], 16
    %255 = vst.msk [vmem:[%s254 + $0x1] sm:$0xff] %vm202, %v186
    %256 = vst.msk [vmem:[%s254 + $0x11] sm:$0xff] %vm202, %v187
    %257 = vst.msk [vmem:[%s254 + $0x21] sm:$0xff] %vm202, %v188
    %258 = vst.msk [vmem:[%s254 + $0x31] sm:$0xff] %vm202, %v189
    %259 = vst.msk [vmem:[%s254 + $0x41] sm:$0xff] %vm202, %v190
    %260 = vst.msk [vmem:[%s254 + $0x51] sm:$0xff] %vm202, %v191
    %261 = vst.msk [vmem:[%s254 + $0x61] sm:$0xff] %vm202, %v192
    %262 = vst.msk [vmem:[%s254 + $0x71] sm:$0xff] %vm202, %v193
    %263 = vst.msk [vmem:[%s254 + $0xa1] sm:$0xff] %vm202, %v194
    %264 = vst.msk [vmem:[%s254 + $0xb1] sm:$0xff] %vm202, %v195
    %265 = vst.msk [vmem:[%s254 + $0xc1] sm:$0xff] %vm202, %v196
    %266 = vst.msk [vmem:[%s254 + $0xd1] sm:$0xff] %vm202, %v197
    %267 = vst.msk [vmem:[%s254 + $0xe1] sm:$0xff] %vm202, %v198
    %268 = vst.msk [vmem:[%s254 + $0xf1] sm:$0xff] %vm202, %v199
    %269 = vst.msk [vmem:[%s254 + $0x101] sm:$0xff] %vm202, %v200
    %270 = vst.msk [vmem:[%s254 + $0x111] sm:$0xff] %vm202, %v201
    %v271 = vld [vmem:[#allocation2] sm:$0xff]
    %v272 = vld [vmem:[#allocation2 + $0x10] sm:$0xff]
    %v273 = vld [vmem:[#allocation2 + $0x20] sm:$0xff]
    %v274 = vld [vmem:[#allocation2 + $0x30] sm:$0xff]
    %v275 = vld [vmem:[#allocation2 + $0x40] sm:$0xff]
    %v276 = vld [vmem:[#allocation2 + $0x50] sm:$0xff]
    %v277 = vld [vmem:[#allocation2 + $0x60] sm:$0xff]
    %v278 = vld [vmem:[#allocation2 + $0x70] sm:$0xff]
    %v279 = vld [vmem:[#allocation2 + $0x80] sm:$0xff]
    %v280 = vld [vmem:[#allocation2 + $0x90] sm:$0xff]
    %v281 = vld [vmem:[#allocation2 + $0xa0] sm:$0xff]
    %v282 = vld [vmem:[#allocation2 + $0xb0] sm:$0xff]
    %v283 = vld [vmem:[#allocation2 + $0xc0] sm:$0xff]
    %v284 = vld [vmem:[#allocation2 + $0xd0] sm:$0xff]
    %v285 = vld [vmem:[#allocation2 + $0xe0] sm:$0xff]
    %v286 = vld [vmem:[#allocation2 + $0xf0] sm:$0xff]
    %v287 = vld [vmem:[#allocation2 + $0x100] sm:$0xff]
    %v288 = vld [vmem:[#allocation2 + $0x110] sm:$0xff]
    %v289 = vld [vmem:[#allocation2 + $0x120] sm:$0xff]
    %v290 = vld [vmem:[#allocation2 + $0x130] sm:$0xff]
    %v291 = vld [vmem:[%s1] sm:$0xff]
    %s292 = scalar_lea.vmem %s1, 24
    %v293 = vld [vmem:[%s292] sm:$0xff]
    %v295 = vsel %vm202, %v272, 0
    %v298 = vsel %vm202, %v273, 0
    %v301 = vsel %vm202, %v274, 0
    %v304 = vsel %vm202, %v275, 0
    %v307 = vsel %vm202, %v276, 0
    %v310 = vsel %vm202, %v277, 0
    %v313 = vsel %vm202, %v278, 0
    %v316 = vsel %vm202, %v279, 0
    %v319 = vsel %vm202, %v282, 0
    %v322 = vsel %vm202, %v283, 0
    %v325 = vsel %vm202, %v284, 0
    %v328 = vsel %vm202, %v285, 0
    %v331 = vsel %vm202, %v286, 0
    %v334 = vsel %vm202, %v287, 0
    %v337 = vsel %vm202, %v288, 0
    %v340 = vsel %vm202, %v289, 0
    %342 = vmatprep.subr.mxu0 0.0
    %343 = vmatpush1.msra.mxu0 0.0
    %344 = vmatprep.subr.mxu0 0.0
    %345 = vmatpush1.msra.mxu0 0.0
    %346 = vmatprep.subr.mxu0 0.0
    %347 = vmatpush1.msra.mxu0 0.0
    %348 = vmatprep.subr.mxu0 0.0
    %349 = vmatpush1.msra.mxu0 0.0
    %350 = vmatprep.subr.mxu0 0.0
    %351 = vmatpush1.msra.mxu0 0.0
    %352 = vmatprep.subr.mxu0 0.0
    %353 = vmatpush1.msra.mxu0 0.0
    %354 = vmatprep.subr.mxu0 0.0
    %355 = vmatpush1.msra.mxu0 0.0
    %356 = vmatprep.subr.mxu0 0.0
    %357 = vmatpush1.msra.mxu0 0.0
    %358 = vmatprep.subr.mxu0 0.0
    %359 = vmatpush1.msra.mxu0 0.0
    %360 = vmatprep.subr.mxu0 0.0
    %361 = vmatpush1.msra.mxu0 0.0
    %362 = vmatprep.subr.mxu0 0.0
    %363 = vmatpush1.msra.mxu0 0.0
    %364 = vmatprep.subr.mxu0 0.0
    %365 = vmatpush1.msra.mxu0 0.0
    %366 = vmatprep.subr.mxu0 0.0
    %367 = vmatpush1.msra.mxu0 0.0
    %368 = vmatprep.subr.mxu0 0.0
    %369 = vmatpush1.msra.mxu0 0.0
    %370 = vmatprep.subr.mxu0 0.0
    %371 = vmatpush1.msra.mxu0 0.0
    %372 = vmatprep.subr.mxu0 0.0
    %373 = vmatpush1.msra.mxu0 %v293
    %374 = vmatprep.subr.mxu0 0.0
    %375 = vmatpush2.msra.mxu0 0.0
    %376 = vmatprep.subr.mxu0 0.0
    %377 = vmatpush2.msra.mxu0 0.0
    %378 = vmatprep.subr.mxu0 0.0
    %379 = vmatpush2.msra.mxu0 0.0
    %380 = vmatprep.subr.mxu0 0.0
    %381 = vmatpush2.msra.mxu0 0.0
    %382 = vmatprep.subr.mxu0 0.0
    %383 = vmatpush2.msra.mxu0 0.0
    %384 = vmatprep.subr.mxu0 0.0
    %385 = vmatpush2.msra.mxu0 0.0
    %386 = vmatprep.subr.mxu0 0.0
    %387 = vmatpush2.msra.mxu0 0.0
    %388 = vmatprep.subr.mxu0 0.0
    %389 = vmatpush2.msra.mxu0 0.0
    %390 = vmatprep.subr.mxu0 0.0
    %391 = vmatpush2.msra.mxu0 0.0
    %392 = vmatprep.subr.mxu0 0.0
    %393 = vmatpush2.msra.mxu0 0.0
    %394 = vmatprep.subr.mxu0 0.0
    %395 = vmatpush2.msra.mxu0 0.0
    %396 = vmatprep.subr.mxu0 0.0
    %397 = vmatpush2.msra.mxu0 0.0
    %398 = vmatprep.subr.mxu0 0.0
    %399 = vmatpush2.msra.mxu0 0.0
    %400 = vmatprep.subr.mxu0 0.0
    %401 = vmatpush2.msra.mxu0 0.0
    %402 = vmatprep.subr.mxu0 0.0
    %403 = vmatpush2.msra.mxu0 0.0
    %404 = vmatprep.subr.mxu0 0.0
    %405 = vmatpush2.msra.mxu0 0.0
    %406 = vmatprep.mubr.f32.mxu0 0.0
    %407 = vmatmul.mubr.f32.gmra.mxu0 %v295
    %v408 = vpop.f32.mrf.mxu0
    %v409 = vadd.f32 0.0, %v408
    %v410 = vpop.f32.mrf.mxu0
    %411 = vmatprep.mubr.f32.mxu0 0.0
    %412 = vmatmul.mubr.f32.gmra.mxu0 %v298
    %v413 = vpop.f32.mrf.mxu0
    %v414 = vadd.f32 0.0, %v413
    %v415 = vpop.f32.mrf.mxu0
    %416 = vmatprep.mubr.f32.mxu0 0.0
    %417 = vmatmul.mubr.f32.gmra.mxu0 %v301
    %v418 = vpop.f32.mrf.mxu0
    %v419 = vadd.f32 0.0, %v418
    %v420 = vpop.f32.mrf.mxu0
    %421 = vmatprep.mubr.f32.mxu0 0.0
    %422 = vmatmul.mubr.f32.gmra.mxu0 %v304
    %v423 = vpop.f32.mrf.mxu0
    %v424 = vadd.f32 0.0, %v423
    %v425 = vpop.f32.mrf.mxu0
    %426 = vmatprep.mubr.f32.mxu0 0.0
    %427 = vmatmul.mubr.f32.gmra.mxu0 %v307
    %v428 = vpop.f32.mrf.mxu0
    %v429 = vadd.f32 0.0, %v428
    %v430 = vpop.f32.mrf.mxu0
    %431 = vmatprep.mubr.f32.mxu0 0.0
    %432 = vmatmul.mubr.f32.gmra.mxu0 %v310
    %v433 = vpop.f32.mrf.mxu0
    %v434 = vadd.f32 0.0, %v433
    %v435 = vpop.f32.mrf.mxu0
    %436 = vmatprep.mubr.f32.mxu0 0.0
    %437 = vmatmul.mubr.f32.gmra.mxu0 %v313
    %v438 = vpop.f32.mrf.mxu0
    %v439 = vadd.f32 0.0, %v438
    %v440 = vpop.f32.mrf.mxu0
    %441 = vmatprep.mubr.f32.mxu0 0.0
    %442 = vmatmul.mubr.f32.gmra.mxu0 %v316
    %v443 = vpop.f32.mrf.mxu0
    %v444 = vadd.f32 0.0, %v443
    %v445 = vpop.f32.mrf.mxu0
    %446 = vmatprep.mubr.f32.mxu0 0.0
    %447 = vmatmul.mubr.f32.gmra.mxu0 %v319
    %v448 = vpop.f32.mrf.mxu0
    %v449 = vadd.f32 0.0, %v448
    %v450 = vpop.f32.mrf.mxu0
    %451 = vmatprep.mubr.f32.mxu0 0.0
    %452 = vmatmul.mubr.f32.gmra.mxu0 %v322
    %v453 = vpop.f32.mrf.mxu0
    %v454 = vadd.f32 0.0, %v453
    %v455 = vpop.f32.mrf.mxu0
    %456 = vmatprep.mubr.f32.mxu0 0.0
    %457 = vmatmul.mubr.f32.gmra.mxu0 %v325
    %v458 = vpop.f32.mrf.mxu0
    %v459 = vadd.f32 0.0, %v458
    %v460 = vpop.f32.mrf.mxu0
    %461 = vmatprep.mubr.f32.mxu0 0.0
    %462 = vmatmul.mubr.f32.gmra.mxu0 %v328
    %v463 = vpop.f32.mrf.mxu0
    %v464 = vadd.f32 0.0, %v463
    %v465 = vpop.f32.mrf.mxu0
    %466 = vmatprep.mubr.f32.mxu0 0.0
    %467 = vmatmul.mubr.f32.gmra.mxu0 %v331
    %v468 = vpop.f32.mrf.mxu0
    %v469 = vadd.f32 0.0, %v468
    %v470 = vpop.f32.mrf.mxu0
    %471 = vmatprep.mubr.f32.mxu0 0.0
    %472 = vmatmul.mubr.f32.gmra.mxu0 %v334
    %v473 = vpop.f32.mrf.mxu0
    %v474 = vadd.f32 0.0, %v473
    %v475 = vpop.f32.mrf.mxu0
    %476 = vmatprep.mubr.f32.mxu0 0.0
    %477 = vmatmul.mubr.f32.gmra.mxu0 %v337
    %v478 = vpop.f32.mrf.mxu0
    %v479 = vadd.f32 0.0, %v478
    %v480 = vpop.f32.mrf.mxu0
    %481 = vmatprep.mubr.f32.mxu0 0.0
    %482 = vmatmul.mubr.f32.gmra.mxu0 %v340
    %v483 = vpop.f32.mrf.mxu0
    %v484 = vadd.f32 0.0, %v483
    %v485 = vpop.f32.mrf.mxu0
    %486 = vdwg.mxu0
    %v488 = vsel %vm202, %v271, 0
    %v491 = vsel %vm202, %v281, 0
    %493 = vmatprep.subr.mxu0 0.0
    %494 = vmatpush1.msra.mxu0 0.0
    %495 = vmatprep.subr.mxu0 0.0
    %496 = vmatpush1.msra.mxu0 0.0
    %497 = vmatprep.subr.mxu0 0.0
    %498 = vmatpush1.msra.mxu0 0.0
    %499 = vmatprep.subr.mxu0 0.0
    %500 = vmatpush1.msra.mxu0 0.0
    %501 = vmatprep.subr.mxu0 0.0
    %502 = vmatpush1.msra.mxu0 0.0
    %503 = vmatprep.subr.mxu0 0.0
    %504 = vmatpush1.msra.mxu0 0.0
    %505 = vmatprep.subr.mxu0 0.0
    %506 = vmatpush1.msra.mxu0 0.0
    %507 = vmatprep.subr.mxu0 0.0
    %508 = vmatpush1.msra.mxu0 0.0
    %509 = vmatprep.subr.mxu0 0.0
    %510 = vmatpush1.msra.mxu0 0.0
    %511 = vmatprep.subr.mxu0 0.0
    %512 = vmatpush1.msra.mxu0 0.0
    %513 = vmatprep.subr.mxu0 0.0
    %514 = vmatpush1.msra.mxu0 0.0
    %515 = vmatprep.subr.mxu0 0.0
    %516 = vmatpush1.msra.mxu0 0.0
    %517 = vmatprep.subr.mxu0 0.0
    %518 = vmatpush1.msra.mxu0 0.0
    %519 = vmatprep.subr.mxu0 0.0
    %520 = vmatpush1.msra.mxu0 0.0
    %521 = vmatprep.subr.mxu0 0.0
    %522 = vmatpush1.msra.mxu0 0.0
    %523 = vmatprep.subr.mxu0 0.0
    %524 = vmatpush1.msra.mxu0 %v291
    %525 = vmatprep.subr.mxu0 0.0
    %526 = vmatpush2.msra.mxu0 0.0
    %527 = vmatprep.subr.mxu0 0.0
    %528 = vmatpush2.msra.mxu0 0.0
    %529 = vmatprep.subr.mxu0 0.0
    %530 = vmatpush2.msra.mxu0 0.0
    %531 = vmatprep.subr.mxu0 0.0
    %532 = vmatpush2.msra.mxu0 0.0
    %533 = vmatprep.subr.mxu0 0.0
    %534 = vmatpush2.msra.mxu0 0.0
    %535 = vmatprep.subr.mxu0 0.0
    %536 = vmatpush2.msra.mxu0 0.0
    %537 = vmatprep.subr.mxu0 0.0
    %538 = vmatpush2.msra.mxu0 0.0
    %539 = vmatprep.subr.mxu0 0.0
    %540 = vmatpush2.msra.mxu0 0.0
    %541 = vmatprep.subr.mxu0 0.0
    %542 = vmatpush2.msra.mxu0 0.0
    %543 = vmatprep.subr.mxu0 0.0
    %544 = vmatpush2.msra.mxu0 0.0
    %545 = vmatprep.subr.mxu0 0.0
    %546 = vmatpush2.msra.mxu0 0.0
    %547 = vmatprep.subr.mxu0 0.0
    %548 = vmatpush2.msra.mxu0 0.0
    %549 = vmatprep.subr.mxu0 0.0
    %550 = vmatpush2.msra.mxu0 0.0
    %551 = vmatprep.subr.mxu0 0.0
    %552 = vmatpush2.msra.mxu0 0.0
    %553 = vmatprep.subr.mxu0 0.0
    %554 = vmatpush2.msra.mxu0 0.0
    %555 = vmatprep.subr.mxu0 0.0
    %556 = vmatpush2.msra.mxu0 0.0
    %557 = vmatprep.mubr.f32.mxu0 0.0
    %558 = vmatmul.mubr.f32.gmra.mxu0 %v488
    %v559 = vpop.f32.mrf.mxu0
    %v560 = vadd.f32 %v409, %v559
    %v561 = vpop.f32.mrf.mxu0
    %562 = vmatprep.mubr.f32.mxu0 0.0
    %563 = vmatmul.mubr.f32.gmra.mxu0 %v295
    %v564 = vpop.f32.mrf.mxu0
    %v565 = vadd.f32 %v414, %v564
    %v566 = vpop.f32.mrf.mxu0
    %567 = vmatprep.mubr.f32.mxu0 0.0
    %568 = vmatmul.mubr.f32.gmra.mxu0 %v298
    %v569 = vpop.f32.mrf.mxu0
    %v570 = vadd.f32 %v419, %v569
    %v571 = vpop.f32.mrf.mxu0
    %572 = vmatprep.mubr.f32.mxu0 0.0
    %573 = vmatmul.mubr.f32.gmra.mxu0 %v301
    %v574 = vpop.f32.mrf.mxu0
    %v575 = vadd.f32 %v424, %v574
    %v576 = vpop.f32.mrf.mxu0
    %577 = vmatprep.mubr.f32.mxu0 0.0
    %578 = vmatmul.mubr.f32.gmra.mxu0 %v304
    %v579 = vpop.f32.mrf.mxu0
    %v580 = vadd.f32 %v429, %v579
    %v581 = vpop.f32.mrf.mxu0
    %582 = vmatprep.mubr.f32.mxu0 0.0
    %583 = vmatmul.mubr.f32.gmra.mxu0 %v307
    %v584 = vpop.f32.mrf.mxu0
    %v585 = vadd.f32 %v434, %v584
    %v586 = vpop.f32.mrf.mxu0
    %587 = vmatprep.mubr.f32.mxu0 0.0
    %588 = vmatmul.mubr.f32.gmra.mxu0 %v310
    %v589 = vpop.f32.mrf.mxu0
    %v590 = vadd.f32 %v439, %v589
    %v591 = vpop.f32.mrf.mxu0
    %592 = vmatprep.mubr.f32.mxu0 0.0
    %593 = vmatmul.mubr.f32.gmra.mxu0 %v313
    %v594 = vpop.f32.mrf.mxu0
    %v595 = vadd.f32 %v444, %v594
    %v596 = vpop.f32.mrf.mxu0
    %597 = vmatprep.mubr.f32.mxu0 0.0
    %598 = vmatmul.mubr.f32.gmra.mxu0 %v491
    %v599 = vpop.f32.mrf.mxu0
    %v600 = vadd.f32 %v449, %v599
    %v601 = vpop.f32.mrf.mxu0
    %602 = vmatprep.mubr.f32.mxu0 0.0
    %603 = vmatmul.mubr.f32.gmra.mxu0 %v319
    %v604 = vpop.f32.mrf.mxu0
    %v605 = vadd.f32 %v454, %v604
    %v606 = vpop.f32.mrf.mxu0
    %607 = vmatprep.mubr.f32.mxu0 0.0
    %608 = vmatmul.mubr.f32.gmra.mxu0 %v322
    %v609 = vpop.f32.mrf.mxu0
    %v610 = vadd.f32 %v459, %v609
    %v611 = vpop.f32.mrf.mxu0
    %612 = vmatprep.mubr.f32.mxu0 0.0
    %613 = vmatmul.mubr.f32.gmra.mxu0 %v325
    %v614 = vpop.f32.mrf.mxu0
    %v615 = vadd.f32 %v464, %v614
    %v616 = vpop.f32.mrf.mxu0
    %617 = vmatprep.mubr.f32.mxu0 0.0
    %618 = vmatmul.mubr.f32.gmra.mxu0 %v328
    %v619 = vpop.f32.mrf.mxu0
    %v620 = vadd.f32 %v469, %v619
    %v621 = vpop.f32.mrf.mxu0
    %622 = vmatprep.mubr.f32.mxu0 0.0
    %623 = vmatmul.mubr.f32.gmra.mxu0 %v331
    %v624 = vpop.f32.mrf.mxu0
    %v625 = vadd.f32 %v474, %v624
    %v626 = vpop.f32.mrf.mxu0
    %627 = vmatprep.mubr.f32.mxu0 0.0
    %628 = vmatmul.mubr.f32.gmra.mxu0 %v334
    %v629 = vpop.f32.mrf.mxu0
    %v630 = vadd.f32 %v479, %v629
    %v631 = vpop.f32.mrf.mxu0
    %632 = vmatprep.mubr.f32.mxu0 0.0
    %633 = vmatmul.mubr.f32.gmra.mxu0 %v337
    %v634 = vpop.f32.mrf.mxu0
    %v635 = vadd.f32 %v484, %v634
    %v636 = vpop.f32.mrf.mxu0
    %637 = vdwg.mxu0
    %s638 = scalar_lea.vmem %s1, 48
    %v639 = vld [vmem:[%s638] sm:$0xff]
    %v641 = vsel %vm202, %v280, 0
    %v644 = vsel %vm202, %v290, 0
    %646 = vmatprep.subr.mxu0 0.0
    %647 = vmatpush1.msra.mxu0 0.0
    %648 = vmatprep.subr.mxu0 0.0
    %649 = vmatpush1.msra.mxu0 0.0
    %650 = vmatprep.subr.mxu0 0.0
    %651 = vmatpush1.msra.mxu0 0.0
    %652 = vmatprep.subr.mxu0 0.0
    %653 = vmatpush1.msra.mxu0 0.0
    %654 = vmatprep.subr.mxu0 0.0
    %655 = vmatpush1.msra.mxu0 0.0
    %656 = vmatprep.subr.mxu0 0.0
    %657 = vmatpush1.msra.mxu0 0.0
    %658 = vmatprep.subr.mxu0 0.0
    %659 = vmatpush1.msra.mxu0 0.0
    %660 = vmatprep.subr.mxu0 0.0
    %661 = vmatpush1.msra.mxu0 0.0
    %662 = vmatprep.subr.mxu0 0.0
    %663 = vmatpush1.msra.mxu0 0.0
    %664 = vmatprep.subr.mxu0 0.0
    %665 = vmatpush1.msra.mxu0 0.0
    %666 = vmatprep.subr.mxu0 0.0
    %667 = vmatpush1.msra.mxu0 0.0
    %668 = vmatprep.subr.mxu0 0.0
    %669 = vmatpush1.msra.mxu0 0.0
    %670 = vmatprep.subr.mxu0 0.0
    %671 = vmatpush1.msra.mxu0 0.0
    %672 = vmatprep.subr.mxu0 0.0
    %673 = vmatpush1.msra.mxu0 0.0
    %674 = vmatprep.subr.mxu0 0.0
    %675 = vmatpush1.msra.mxu0 0.0
    %676 = vmatprep.subr.mxu0 0.0
    %677 = vmatpush1.msra.mxu0 %v639
    %678 = vmatprep.subr.mxu0 0.0
    %679 = vmatpush2.msra.mxu0 0.0
    %680 = vmatprep.subr.mxu0 0.0
    %681 = vmatpush2.msra.mxu0 0.0
    %682 = vmatprep.subr.mxu0 0.0
    %683 = vmatpush2.msra.mxu0 0.0
    %684 = vmatprep.subr.mxu0 0.0
    %685 = vmatpush2.msra.mxu0 0.0
    %686 = vmatprep.subr.mxu0 0.0
    %687 = vmatpush2.msra.mxu0 0.0
    %688 = vmatprep.subr.mxu0 0.0
    %689 = vmatpush2.msra.mxu0 0.0
    %690 = vmatprep.subr.mxu0 0.0
    %691 = vmatpush2.msra.mxu0 0.0
    %692 = vmatprep.subr.mxu0 0.0
    %693 = vmatpush2.msra.mxu0 0.0
    %694 = vmatprep.subr.mxu0 0.0
    %695 = vmatpush2.msra.mxu0 0.0
    %696 = vmatprep.subr.mxu0 0.0
    %697 = vmatpush2.msra.mxu0 0.0
    %698 = vmatprep.subr.mxu0 0.0
    %699 = vmatpush2.msra.mxu0 0.0
    %700 = vmatprep.subr.mxu0 0.0
    %701 = vmatpush2.msra.mxu0 0.0
    %702 = vmatprep.subr.mxu0 0.0
    %703 = vmatpush2.msra.mxu0 0.0
    %704 = vmatprep.subr.mxu0 0.0
    %705 = vmatpush2.msra.mxu0 0.0
    %706 = vmatprep.subr.mxu0 0.0
    %707 = vmatpush2.msra.mxu0 0.0
    %708 = vmatprep.subr.mxu0 0.0
    %709 = vmatpush2.msra.mxu0 0.0
    %710 = vmatprep.mubr.f32.mxu0 0.0
    %711 = vmatmul.mubr.f32.gmra.mxu0 %v298
    %v712 = vpop.f32.mrf.mxu0
    %v713 = vadd.f32 0.0, %v712
    %v714 = vpop.f32.mrf.mxu0
    %715 = vmatprep.mubr.f32.mxu0 0.0
    %716 = vmatmul.mubr.f32.gmra.mxu0 %v301
    %v717 = vpop.f32.mrf.mxu0
    %v718 = vadd.f32 0.0, %v717
    %v719 = vpop.f32.mrf.mxu0
    %720 = vmatprep.mubr.f32.mxu0 0.0
    %721 = vmatmul.mubr.f32.gmra.mxu0 %v304
    %v722 = vpop.f32.mrf.mxu0
    %v723 = vadd.f32 0.0, %v722
    %v724 = vpop.f32.mrf.mxu0
    %725 = vmatprep.mubr.f32.mxu0 0.0
    %726 = vmatmul.mubr.f32.gmra.mxu0 %v307
    %v727 = vpop.f32.mrf.mxu0
    %v728 = vadd.f32 0.0, %v727
    %v729 = vpop.f32.mrf.mxu0
    %730 = vmatprep.mubr.f32.mxu0 0.0
    %731 = vmatmul.mubr.f32.gmra.mxu0 %v310
    %v732 = vpop.f32.mrf.mxu0
    %v733 = vadd.f32 0.0, %v732
    %v734 = vpop.f32.mrf.mxu0
    %735 = vmatprep.mubr.f32.mxu0 0.0
    %736 = vmatmul.mubr.f32.gmra.mxu0 %v313
    %v737 = vpop.f32.mrf.mxu0
    %v738 = vadd.f32 0.0, %v737
    %v739 = vpop.f32.mrf.mxu0
    %740 = vmatprep.mubr.f32.mxu0 0.0
    %741 = vmatmul.mubr.f32.gmra.mxu0 %v316
    %v742 = vpop.f32.mrf.mxu0
    %v743 = vadd.f32 0.0, %v742
    %v744 = vpop.f32.mrf.mxu0
    %745 = vmatprep.mubr.f32.mxu0 0.0
    %746 = vmatmul.mubr.f32.gmra.mxu0 %v641
    %v747 = vpop.f32.mrf.mxu0
    %v748 = vadd.f32 0.0, %v747
    %v749 = vpop.f32.mrf.mxu0
    %750 = vmatprep.mubr.f32.mxu0 0.0
    %751 = vmatmul.mubr.f32.gmra.mxu0 %v322
    %v752 = vpop.f32.mrf.mxu0
    %v753 = vadd.f32 0.0, %v752
    %v754 = vpop.f32.mrf.mxu0
    %755 = vmatprep.mubr.f32.mxu0 0.0
    %756 = vmatmul.mubr.f32.gmra.mxu0 %v325
    %v757 = vpop.f32.mrf.mxu0
    %v758 = vadd.f32 0.0, %v757
    %v759 = vpop.f32.mrf.mxu0
    %760 = vmatprep.mubr.f32.mxu0 0.0
    %761 = vmatmul.mubr.f32.gmra.mxu0 %v328
    %v762 = vpop.f32.mrf.mxu0
    %v763 = vadd.f32 0.0, %v762
    %v764 = vpop.f32.mrf.mxu0
    %765 = vmatprep.mubr.f32.mxu0 0.0
    %766 = vmatmul.mubr.f32.gmra.mxu0 %v331
    %v767 = vpop.f32.mrf.mxu0
    %v768 = vadd.f32 0.0, %v767
    %v769 = vpop.f32.mrf.mxu0
    %770 = vmatprep.mubr.f32.mxu0 0.0
    %771 = vmatmul.mubr.f32.gmra.mxu0 %v334
    %v772 = vpop.f32.mrf.mxu0
    %v773 = vadd.f32 0.0, %v772
    %v774 = vpop.f32.mrf.mxu0
    %775 = vmatprep.mubr.f32.mxu0 0.0
    %776 = vmatmul.mubr.f32.gmra.mxu0 %v337
    %v777 = vpop.f32.mrf.mxu0
    %v778 = vadd.f32 0.0, %v777
    %v779 = vpop.f32.mrf.mxu0
    %780 = vmatprep.mubr.f32.mxu0 0.0
    %781 = vmatmul.mubr.f32.gmra.mxu0 %v340
    %v782 = vpop.f32.mrf.mxu0
    %v783 = vadd.f32 0.0, %v782
    %v784 = vpop.f32.mrf.mxu0
    %785 = vmatprep.mubr.f32.mxu0 0.0
    %786 = vmatmul.mubr.f32.gmra.mxu0 %v644
    %v787 = vpop.f32.mrf.mxu0
    %v788 = vadd.f32 0.0, %v787
    %v789 = vpop.f32.mrf.mxu0
    %790 = vdwg.mxu0
    %v791 = vadd.f32 %v560, %v713
    %v792 = vadd.f32 %v565, %v718
    %v793 = vadd.f32 %v570, %v723
    %v794 = vadd.f32 %v575, %v728
    %v795 = vadd.f32 %v580, %v733
    %v796 = vadd.f32 %v585, %v738
    %v797 = vadd.f32 %v590, %v743
    %v798 = vadd.f32 %v595, %v748
    %v799 = vadd.f32 %v600, %v753
    %v800 = vadd.f32 %v605, %v758
    %v801 = vadd.f32 %v610, %v763
    %v802 = vadd.f32 %v615, %v768
    %v803 = vadd.f32 %v620, %v773
    %v804 = vadd.f32 %v625, %v778
    %v805 = vadd.f32 %v630, %v783
    %v806 = vadd.f32 %v635, %v788
    %v807 = vld [vmem:[#allocation2 + $0x1] sm:$0xff]
    %v808 = vld [vmem:[#allocation2 + $0x11] sm:$0xff]
    %v809 = vld [vmem:[#allocation2 + $0x21] sm:$0xff]
    %v810 = vld [vmem:[#allocation2 + $0x31] sm:$0xff]
    %v811 = vld [vmem:[#allocation2 + $0x41] sm:$0xff]
    %v812 = vld [vmem:[#allocation2 + $0x51] sm:$0xff]
    %v813 = vld [vmem:[#allocation2 + $0x61] sm:$0xff]
    %v814 = vld [vmem:[#allocation2 + $0x71] sm:$0xff]
    %v815 = vld [vmem:[#allocation2 + $0x81] sm:$0xff]
    %v816 = vld [vmem:[#allocation2 + $0x91] sm:$0xff]
    %v817 = vld [vmem:[#allocation2 + $0xa1] sm:$0xff]
    %v818 = vld [vmem:[#allocation2 + $0xb1] sm:$0xff]
    %v819 = vld [vmem:[#allocation2 + $0xc1] sm:$0xff]
    %v820 = vld [vmem:[#allocation2 + $0xd1] sm:$0xff]
    %v821 = vld [vmem:[#allocation2 + $0xe1] sm:$0xff]
    %v822 = vld [vmem:[#allocation2 + $0xf1] sm:$0xff]
    %v823 = vld [vmem:[#allocation2 + $0x101] sm:$0xff]
    %v824 = vld [vmem:[#allocation2 + $0x111] sm:$0xff]
    %v825 = vld [vmem:[#allocation2 + $0x121] sm:$0xff]
    %v826 = vld [vmem:[#allocation2 + $0x131] sm:$0xff]
    %s827 = scalar_lea.vmem %s1, 8
    %v828 = vld [vmem:[%s827] sm:$0xff]
    %v830 = vsel %vm202, %v807, 0
    %v833 = vsel %vm202, %v808, 0
    %v836 = vsel %vm202, %v809, 0
    %v839 = vsel %vm202, %v810, 0
    %v842 = vsel %vm202, %v811, 0
    %v845 = vsel %vm202, %v812, 0
    %v848 = vsel %vm202, %v813, 0
    %v851 = vsel %vm202, %v814, 0
    %v854 = vsel %vm202, %v817, 0
    %v857 = vsel %vm202, %v818, 0
    %v860 = vsel %vm202, %v819, 0
    %v863 = vsel %vm202, %v820, 0
    %v866 = vsel %vm202, %v821, 0
    %v869 = vsel %vm202, %v822, 0
    %v872 = vsel %vm202, %v823, 0
    %v875 = vsel %vm202, %v824, 0
    %877 = vmatprep.subr.mxu0 0.0
    %878 = vmatpush1.msra.mxu0 0.0
    %879 = vmatprep.subr.mxu0 0.0
    %880 = vmatpush1.msra.mxu0 0.0
    %881 = vmatprep.subr.mxu0 0.0
    %882 = vmatpush1.msra.mxu0 0.0
    %883 = vmatprep.subr.mxu0 0.0
    %884 = vmatpush1.msra.mxu0 0.0
    %885 = vmatprep.subr.mxu0 0.0
    %886 = vmatpush1.msra.mxu0 0.0
    %887 = vmatprep.subr.mxu0 0.0
    %888 = vmatpush1.msra.mxu0 0.0
    %889 = vmatprep.subr.mxu0 0.0
    %890 = vmatpush1.msra.mxu0 0.0
    %891 = vmatprep.subr.mxu0 0.0
    %892 = vmatpush1.msra.mxu0 0.0
    %893 = vmatprep.subr.mxu0 0.0
    %894 = vmatpush1.msra.mxu0 0.0
    %895 = vmatprep.subr.mxu0 0.0
    %896 = vmatpush1.msra.mxu0 0.0
    %897 = vmatprep.subr.mxu0 0.0
    %898 = vmatpush1.msra.mxu0 0.0
    %899 = vmatprep.subr.mxu0 0.0
    %900 = vmatpush1.msra.mxu0 0.0
    %901 = vmatprep.subr.mxu0 0.0
    %902 = vmatpush1.msra.mxu0 0.0
    %903 = vmatprep.subr.mxu0 0.0
    %904 = vmatpush1.msra.mxu0 0.0
    %905 = vmatprep.subr.mxu0 0.0
    %906 = vmatpush1.msra.mxu0 0.0
    %907 = vmatprep.subr.mxu0 0.0
    %908 = vmatpush1.msra.mxu0 %v828
    %909 = vmatprep.subr.mxu0 0.0
    %910 = vmatpush2.msra.mxu0 0.0
    %911 = vmatprep.subr.mxu0 0.0
    %912 = vmatpush2.msra.mxu0 0.0
    %913 = vmatprep.subr.mxu0 0.0
    %914 = vmatpush2.msra.mxu0 0.0
    %915 = vmatprep.subr.mxu0 0.0
    %916 = vmatpush2.msra.mxu0 0.0
    %917 = vmatprep.subr.mxu0 0.0
    %918 = vmatpush2.msra.mxu0 0.0
    %919 = vmatprep.subr.mxu0 0.0
    %920 = vmatpush2.msra.mxu0 0.0
    %921 = vmatprep.subr.mxu0 0.0
    %922 = vmatpush2.msra.mxu0 0.0
    %923 = vmatprep.subr.mxu0 0.0
    %924 = vmatpush2.msra.mxu0 0.0
    %925 = vmatprep.subr.mxu0 0.0
    %926 = vmatpush2.msra.mxu0 0.0
    %927 = vmatprep.subr.mxu0 0.0
    %928 = vmatpush2.msra.mxu0 0.0
    %929 = vmatprep.subr.mxu0 0.0
    %930 = vmatpush2.msra.mxu0 0.0
    %931 = vmatprep.subr.mxu0 0.0
    %932 = vmatpush2.msra.mxu0 0.0
    %933 = vmatprep.subr.mxu0 0.0
    %934 = vmatpush2.msra.mxu0 0.0
    %935 = vmatprep.subr.mxu0 0.0
    %936 = vmatpush2.msra.mxu0 0.0
    %937 = vmatprep.subr.mxu0 0.0
    %938 = vmatpush2.msra.mxu0 0.0
    %939 = vmatprep.subr.mxu0 0.0
    %940 = vmatpush2.msra.mxu0 0.0
    %941 = vmatprep.mubr.f32.mxu0 0.0
    %942 = vmatmul.mubr.f32.gmra.mxu0 %v830
    %v943 = vpop.f32.mrf.mxu0
    %v944 = vadd.f32 0.0, %v943
    %v945 = vpop.f32.mrf.mxu0
    %946 = vmatprep.mubr.f32.mxu0 0.0
    %947 = vmatmul.mubr.f32.gmra.mxu0 %v833
    %v948 = vpop.f32.mrf.mxu0
    %v949 = vadd.f32 0.0, %v948
    %v950 = vpop.f32.mrf.mxu0
    %951 = vmatprep.mubr.f32.mxu0 0.0
    %952 = vmatmul.mubr.f32.gmra.mxu0 %v836
    %v953 = vpop.f32.mrf.mxu0
    %v954 = vadd.f32 0.0, %v953
    %v955 = vpop.f32.mrf.mxu0
    %956 = vmatprep.mubr.f32.mxu0 0.0
    %957 = vmatmul.mubr.f32.gmra.mxu0 %v839
    %v958 = vpop.f32.mrf.mxu0
    %v959 = vadd.f32 0.0, %v958
    %v960 = vpop.f32.mrf.mxu0
    %961 = vmatprep.mubr.f32.mxu0 0.0
    %962 = vmatmul.mubr.f32.gmra.mxu0 %v842
    %v963 = vpop.f32.mrf.mxu0
    %v964 = vadd.f32 0.0, %v963
    %v965 = vpop.f32.mrf.mxu0
    %966 = vmatprep.mubr.f32.mxu0 0.0
    %967 = vmatmul.mubr.f32.gmra.mxu0 %v845
    %v968 = vpop.f32.mrf.mxu0
    %v969 = vadd.f32 0.0, %v968
    %v970 = vpop.f32.mrf.mxu0
    %971 = vmatprep.mubr.f32.mxu0 0.0
    %972 = vmatmul.mubr.f32.gmra.mxu0 %v848
    %v973 = vpop.f32.mrf.mxu0
    %v974 = vadd.f32 0.0, %v973
    %v975 = vpop.f32.mrf.mxu0
    %976 = vmatprep.mubr.f32.mxu0 0.0
    %977 = vmatmul.mubr.f32.gmra.mxu0 %v851
    %v978 = vpop.f32.mrf.mxu0
    %v979 = vadd.f32 0.0, %v978
    %v980 = vpop.f32.mrf.mxu0
    %981 = vmatprep.mubr.f32.mxu0 0.0
    %982 = vmatmul.mubr.f32.gmra.mxu0 %v854
    %v983 = vpop.f32.mrf.mxu0
    %v984 = vadd.f32 0.0, %v983
    %v985 = vpop.f32.mrf.mxu0
    %986 = vmatprep.mubr.f32.mxu0 0.0
    %987 = vmatmul.mubr.f32.gmra.mxu0 %v857
    %v988 = vpop.f32.mrf.mxu0
    %v989 = vadd.f32 0.0, %v988
    %v990 = vpop.f32.mrf.mxu0
    %991 = vmatprep.mubr.f32.mxu0 0.0
    %992 = vmatmul.mubr.f32.gmra.mxu0 %v860
    %v993 = vpop.f32.mrf.mxu0
    %v994 = vadd.f32 0.0, %v993
    %v995 = vpop.f32.mrf.mxu0
    %996 = vmatprep.mubr.f32.mxu0 0.0
    %997 = vmatmul.mubr.f32.gmra.mxu0 %v863
    %v998 = vpop.f32.mrf.mxu0
    %v999 = vadd.f32 0.0, %v998
    %v1000 = vpop.f32.mrf.mxu0
    %1001 = vmatprep.mubr.f32.mxu0 0.0
    %1002 = vmatmul.mubr.f32.gmra.mxu0 %v866
    %v1003 = vpop.f32.mrf.mxu0
    %v1004 = vadd.f32 0.0, %v1003
    %v1005 = vpop.f32.mrf.mxu0
    %1006 = vmatprep.mubr.f32.mxu0 0.0
    %1007 = vmatmul.mubr.f32.gmra.mxu0 %v869
    %v1008 = vpop.f32.mrf.mxu0
    %v1009 = vadd.f32 0.0, %v1008
    %v1010 = vpop.f32.mrf.mxu0
    %1011 = vmatprep.mubr.f32.mxu0 0.0
    %1012 = vmatmul.mubr.f32.gmra.mxu0 %v872
    %v1013 = vpop.f32.mrf.mxu0
    %v1014 = vadd.f32 0.0, %v1013
    %v1015 = vpop.f32.mrf.mxu0
    %1016 = vmatprep.mubr.f32.mxu0 0.0
    %1017 = vmatmul.mubr.f32.gmra.mxu0 %v875
    %v1018 = vpop.f32.mrf.mxu0
    %v1019 = vadd.f32 0.0, %v1018
    %v1020 = vpop.f32.mrf.mxu0
    %1021 = vdwg.mxu0
    %v1022 = vadd.f32 %v791, %v944
    %v1023 = vadd.f32 %v792, %v949
    %v1024 = vadd.f32 %v793, %v954
    %v1025 = vadd.f32 %v794, %v959
    %v1026 = vadd.f32 %v795, %v964
    %v1027 = vadd.f32 %v796, %v969
    %v1028 = vadd.f32 %v797, %v974
    %v1029 = vadd.f32 %v798, %v979
    %v1030 = vadd.f32 %v799, %v984
    %v1031 = vadd.f32 %v800, %v989
    %v1032 = vadd.f32 %v801, %v994
    %v1033 = vadd.f32 %v802, %v999
    %v1034 = vadd.f32 %v803, %v1004
    %v1035 = vadd.f32 %v804, %v1009
    %v1036 = vadd.f32 %v805, %v1014
    %v1037 = vadd.f32 %v806, %v1019
    %s1038 = scalar_lea.vmem %s1, 32
    %v1039 = vld [vmem:[%s1038] sm:$0xff]
    %v1041 = vsel %vm202, %v815, 0
    %v1044 = vsel %vm202, %v825, 0
    %1046 = vmatprep.subr.mxu0 0.0
    %1047 = vmatpush1.msra.mxu0 0.0
    %1048 = vmatprep.subr.mxu0 0.0
    %1049 = vmatpush1.msra.mxu0 0.0
    %1050 = vmatprep.subr.mxu0 0.0
    %1051 = vmatpush1.msra.mxu0 0.0
    %1052 = vmatprep.subr.mxu0 0.0
    %1053 = vmatpush1.msra.mxu0 0.0
    %1054 = vmatprep.subr.mxu0 0.0
    %1055 = vmatpush1.msra.mxu0 0.0
    %1056 = vmatprep.subr.mxu0 0.0
    %1057 = vmatpush1.msra.mxu0 0.0
    %1058 = vmatprep.subr.mxu0 0.0
    %1059 = vmatpush1.msra.mxu0 0.0
    %1060 = vmatprep.subr.mxu0 0.0
    %1061 = vmatpush1.msra.mxu0 0.0
    %1062 = vmatprep.subr.mxu0 0.0
    %1063 = vmatpush1.msra.mxu0 0.0
    %1064 = vmatprep.subr.mxu0 0.0
    %1065 = vmatpush1.msra.mxu0 0.0
    %1066 = vmatprep.subr.mxu0 0.0
    %1067 = vmatpush1.msra.mxu0 0.0
    %1068 = vmatprep.subr.mxu0 0.0
    %1069 = vmatpush1.msra.mxu0 0.0
    %1070 = vmatprep.subr.mxu0 0.0
    %1071 = vmatpush1.msra.mxu0 0.0
    %1072 = vmatprep.subr.mxu0 0.0
    %1073 = vmatpush1.msra.mxu0 0.0
    %1074 = vmatprep.subr.mxu0 0.0
    %1075 = vmatpush1.msra.mxu0 0.0
    %1076 = vmatprep.subr.mxu0 0.0
    %1077 = vmatpush1.msra.mxu0 %v1039
    %1078 = vmatprep.subr.mxu0 0.0
    %1079 = vmatpush2.msra.mxu0 0.0
    %1080 = vmatprep.subr.mxu0 0.0
    %1081 = vmatpush2.msra.mxu0 0.0
    %1082 = vmatprep.subr.mxu0 0.0
    %1083 = vmatpush2.msra.mxu0 0.0
    %1084 = vmatprep.subr.mxu0 0.0
    %1085 = vmatpush2.msra.mxu0 0.0
    %1086 = vmatprep.subr.mxu0 0.0
    %1087 = vmatpush2.msra.mxu0 0.0
    %1088 = vmatprep.subr.mxu0 0.0
    %1089 = vmatpush2.msra.mxu0 0.0
    %1090 = vmatprep.subr.mxu0 0.0
    %1091 = vmatpush2.msra.mxu0 0.0
    %1092 = vmatprep.subr.mxu0 0.0
    %1093 = vmatpush2.msra.mxu0 0.0
    %1094 = vmatprep.subr.mxu0 0.0
    %1095 = vmatpush2.msra.mxu0 0.0
    %1096 = vmatprep.subr.mxu0 0.0
    %1097 = vmatpush2.msra.mxu0 0.0
    %1098 = vmatprep.subr.mxu0 0.0
    %1099 = vmatpush2.msra.mxu0 0.0
    %1100 = vmatprep.subr.mxu0 0.0
    %1101 = vmatpush2.msra.mxu0 0.0
    %1102 = vmatprep.subr.mxu0 0.0
    %1103 = vmatpush2.msra.mxu0 0.0
    %1104 = vmatprep.subr.mxu0 0.0
    %1105 = vmatpush2.msra.mxu0 0.0
    %1106 = vmatprep.subr.mxu0 0.0
    %1107 = vmatpush2.msra.mxu0 0.0
    %1108 = vmatprep.subr.mxu0 0.0
    %1109 = vmatpush2.msra.mxu0 0.0
    %1110 = vmatprep.mubr.f32.mxu0 0.0
    %1111 = vmatmul.mubr.f32.gmra.mxu0 %v833
    %v1112 = vpop.f32.mrf.mxu0
    %v1113 = vadd.f32 0.0, %v1112
    %v1114 = vpop.f32.mrf.mxu0
    %1115 = vmatprep.mubr.f32.mxu0 0.0
    %1116 = vmatmul.mubr.f32.gmra.mxu0 %v836
    %v1117 = vpop.f32.mrf.mxu0
    %v1118 = vadd.f32 0.0, %v1117
    %v1119 = vpop.f32.mrf.mxu0
    %1120 = vmatprep.mubr.f32.mxu0 0.0
    %1121 = vmatmul.mubr.f32.gmra.mxu0 %v839
    %v1122 = vpop.f32.mrf.mxu0
    %v1123 = vadd.f32 0.0, %v1122
    %v1124 = vpop.f32.mrf.mxu0
    %1125 = vmatprep.mubr.f32.mxu0 0.0
    %1126 = vmatmul.mubr.f32.gmra.mxu0 %v842
    %v1127 = vpop.f32.mrf.mxu0
    %v1128 = vadd.f32 0.0, %v1127
    %v1129 = vpop.f32.mrf.mxu0
    %1130 = vmatprep.mubr.f32.mxu0 0.0
    %1131 = vmatmul.mubr.f32.gmra.mxu0 %v845
    %v1132 = vpop.f32.mrf.mxu0
    %v1133 = vadd.f32 0.0, %v1132
    %v1134 = vpop.f32.mrf.mxu0
    %1135 = vmatprep.mubr.f32.mxu0 0.0
    %1136 = vmatmul.mubr.f32.gmra.mxu0 %v848
    %v1137 = vpop.f32.mrf.mxu0
    %v1138 = vadd.f32 0.0, %v1137
    %v1139 = vpop.f32.mrf.mxu0
    %1140 = vmatprep.mubr.f32.mxu0 0.0
    %1141 = vmatmul.mubr.f32.gmra.mxu0 %v851
    %v1142 = vpop.f32.mrf.mxu0
    %v1143 = vadd.f32 0.0, %v1142
    %v1144 = vpop.f32.mrf.mxu0
    %1145 = vmatprep.mubr.f32.mxu0 0.0
    %1146 = vmatmul.mubr.f32.gmra.mxu0 %v1041
    %v1147 = vpop.f32.mrf.mxu0
    %v1148 = vadd.f32 0.0, %v1147
    %v1149 = vpop.f32.mrf.mxu0
    %1150 = vmatprep.mubr.f32.mxu0 0.0
    %1151 = vmatmul.mubr.f32.gmra.mxu0 %v857
    %v1152 = vpop.f32.mrf.mxu0
    %v1153 = vadd.f32 0.0, %v1152
    %v1154 = vpop.f32.mrf.mxu0
    %1155 = vmatprep.mubr.f32.mxu0 0.0
    %1156 = vmatmul.mubr.f32.gmra.mxu0 %v860
    %v1157 = vpop.f32.mrf.mxu0
    %v1158 = vadd.f32 0.0, %v1157
    %v1159 = vpop.f32.mrf.mxu0
    %1160 = vmatprep.mubr.f32.mxu0 0.0
    %1161 = vmatmul.mubr.f32.gmra.mxu0 %v863
    %v1162 = vpop.f32.mrf.mxu0
    %v1163 = vadd.f32 0.0, %v1162
    %v1164 = vpop.f32.mrf.mxu0
    %1165 = vmatprep.mubr.f32.mxu0 0.0
    %1166 = vmatmul.mubr.f32.gmra.mxu0 %v866
    %v1167 = vpop.f32.mrf.mxu0
    %v1168 = vadd.f32 0.0, %v1167
    %v1169 = vpop.f32.mrf.mxu0
    %1170 = vmatprep.mubr.f32.mxu0 0.0
    %1171 = vmatmul.mubr.f32.gmra.mxu0 %v869
    %v1172 = vpop.f32.mrf.mxu0
    %v1173 = vadd.f32 0.0, %v1172
    %v1174 = vpop.f32.mrf.mxu0
    %1175 = vmatprep.mubr.f32.mxu0 0.0
    %1176 = vmatmul.mubr.f32.gmra.mxu0 %v872
    %v1177 = vpop.f32.mrf.mxu0
    %v1178 = vadd.f32 0.0, %v1177
    %v1179 = vpop.f32.mrf.mxu0
    %1180 = vmatprep.mubr.f32.mxu0 0.0
    %1181 = vmatmul.mubr.f32.gmra.mxu0 %v875
    %v1182 = vpop.f32.mrf.mxu0
    %v1183 = vadd.f32 0.0, %v1182
    %v1184 = vpop.f32.mrf.mxu0
    %1185 = vmatprep.mubr.f32.mxu0 0.0
    %1186 = vmatmul.mubr.f32.gmra.mxu0 %v1044
    %v1187 = vpop.f32.mrf.mxu0
    %v1188 = vadd.f32 0.0, %v1187
    %v1189 = vpop.f32.mrf.mxu0
    %1190 = vdwg.mxu0
    %v1191 = vadd.f32 %v1022, %v1113
    %v1192 = vadd.f32 %v1023, %v1118
    %v1193 = vadd.f32 %v1024, %v1123
    %v1194 = vadd.f32 %v1025, %v1128
    %v1195 = vadd.f32 %v1026, %v1133
    %v1196 = vadd.f32 %v1027, %v1138
    %v1197 = vadd.f32 %v1028, %v1143
    %v1198 = vadd.f32 %v1029, %v1148
    %v1199 = vadd.f32 %v1030, %v1153
    %v1200 = vadd.f32 %v1031, %v1158
    %v1201 = vadd.f32 %v1032, %v1163
    %v1202 = vadd.f32 %v1033, %v1168
    %v1203 = vadd.f32 %v1034, %v1173
    %v1204 = vadd.f32 %v1035, %v1178
    %v1205 = vadd.f32 %v1036, %v1183
    %v1206 = vadd.f32 %v1037, %v1188
    %s1207 = scalar_lea.vmem %s1, 56
    %v1208 = vld [vmem:[%s1207] sm:$0xff]
    %v1210 = vsel %vm202, %v816, 0
    %v1213 = vsel %vm202, %v826, 0
    %1215 = vmatprep.subr.mxu0 0.0
    %1216 = vmatpush1.msra.mxu0 0.0
    %1217 = vmatprep.subr.mxu0 0.0
    %1218 = vmatpush1.msra.mxu0 0.0
    %1219 = vmatprep.subr.mxu0 0.0
    %1220 = vmatpush1.msra.mxu0 0.0
    %1221 = vmatprep.subr.mxu0 0.0
    %1222 = vmatpush1.msra.mxu0 0.0
    %1223 = vmatprep.subr.mxu0 0.0
    %1224 = vmatpush1.msra.mxu0 0.0
    %1225 = vmatprep.subr.mxu0 0.0
    %1226 = vmatpush1.msra.mxu0 0.0
    %1227 = vmatprep.subr.mxu0 0.0
    %1228 = vmatpush1.msra.mxu0 0.0
    %1229 = vmatprep.subr.mxu0 0.0
    %1230 = vmatpush1.msra.mxu0 0.0
    %1231 = vmatprep.subr.mxu0 0.0
    %1232 = vmatpush1.msra.mxu0 0.0
    %1233 = vmatprep.subr.mxu0 0.0
    %1234 = vmatpush1.msra.mxu0 0.0
    %1235 = vmatprep.subr.mxu0 0.0
    %1236 = vmatpush1.msra.mxu0 0.0
    %1237 = vmatprep.subr.mxu0 0.0
    %1238 = vmatpush1.msra.mxu0 0.0
    %1239 = vmatprep.subr.mxu0 0.0
    %1240 = vmatpush1.msra.mxu0 0.0
    %1241 = vmatprep.subr.mxu0 0.0
    %1242 = vmatpush1.msra.mxu0 0.0
    %1243 = vmatprep.subr.mxu0 0.0
    %1244 = vmatpush1.msra.mxu0 0.0
    %1245 = vmatprep.subr.mxu0 0.0
    %1246 = vmatpush1.msra.mxu0 %v1208
    %1247 = vmatprep.subr.mxu0 0.0
    %1248 = vmatpush2.msra.mxu0 0.0
    %1249 = vmatprep.subr.mxu0 0.0
    %1250 = vmatpush2.msra.mxu0 0.0
    %1251 = vmatprep.subr.mxu0 0.0
    %1252 = vmatpush2.msra.mxu0 0.0
    %1253 = vmatprep.subr.mxu0 0.0
    %1254 = vmatpush2.msra.mxu0 0.0
    %1255 = vmatprep.subr.mxu0 0.0
    %1256 = vmatpush2.msra.mxu0 0.0
    %1257 = vmatprep.subr.mxu0 0.0
    %1258 = vmatpush2.msra.mxu0 0.0
    %1259 = vmatprep.subr.mxu0 0.0
    %1260 = vmatpush2.msra.mxu0 0.0
    %1261 = vmatprep.subr.mxu0 0.0
    %1262 = vmatpush2.msra.mxu0 0.0
    %1263 = vmatprep.subr.mxu0 0.0
    %1264 = vmatpush2.msra.mxu0 0.0
    %1265 = vmatprep.subr.mxu0 0.0
    %1266 = vmatpush2.msra.mxu0 0.0
    %1267 = vmatprep.subr.mxu0 0.0
    %1268 = vmatpush2.msra.mxu0 0.0
    %1269 = vmatprep.subr.mxu0 0.0
    %1270 = vmatpush2.msra.mxu0 0.0
    %1271 = vmatprep.subr.mxu0 0.0
    %1272 = vmatpush2.msra.mxu0 0.0
    %1273 = vmatprep.subr.mxu0 0.0
    %1274 = vmatpush2.msra.mxu0 0.0
    %1275 = vmatprep.subr.mxu0 0.0
    %1276 = vmatpush2.msra.mxu0 0.0
    %1277 = vmatprep.subr.mxu0 0.0
    %1278 = vmatpush2.msra.mxu0 0.0
    %1279 = vmatprep.mubr.f32.mxu0 0.0
    %1280 = vmatmul.mubr.f32.gmra.mxu0 %v836
    %v1281 = vpop.f32.mrf.mxu0
    %v1282 = vadd.f32 0.0, %v1281
    %v1283 = vpop.f32.mrf.mxu0
    %1284 = vmatprep.mubr.f32.mxu0 0.0
    %1285 = vmatmul.mubr.f32.gmra.mxu0 %v839
    %v1286 = vpop.f32.mrf.mxu0
    %v1287 = vadd.f32 0.0, %v1286
    %v1288 = vpop.f32.mrf.mxu0
    %1289 = vmatprep.mubr.f32.mxu0 0.0
    %1290 = vmatmul.mubr.f32.gmra.mxu0 %v842
    %v1291 = vpop.f32.mrf.mxu0
    %v1292 = vadd.f32 0.0, %v1291
    %v1293 = vpop.f32.mrf.mxu0
    %1294 = vmatprep.mubr.f32.mxu0 0.0
    %1295 = vmatmul.mubr.f32.gmra.mxu0 %v845
    %v1296 = vpop.f32.mrf.mxu0
    %v1297 = vadd.f32 0.0, %v1296
    %v1298 = vpop.f32.mrf.mxu0
    %1299 = vmatprep.mubr.f32.mxu0 0.0
    %1300 = vmatmul.mubr.f32.gmra.mxu0 %v848
    %v1301 = vpop.f32.mrf.mxu0
    %v1302 = vadd.f32 0.0, %v1301
    %v1303 = vpop.f32.mrf.mxu0
    %1304 = vmatprep.mubr.f32.mxu0 0.0
    %1305 = vmatmul.mubr.f32.gmra.mxu0 %v851
    %v1306 = vpop.f32.mrf.mxu0
    %v1307 = vadd.f32 0.0, %v1306
    %v1308 = vpop.f32.mrf.mxu0
    %1309 = vmatprep.mubr.f32.mxu0 0.0
    %1310 = vmatmul.mubr.f32.gmra.mxu0 %v1041
    %v1311 = vpop.f32.mrf.mxu0
    %v1312 = vadd.f32 0.0, %v1311
    %v1313 = vpop.f32.mrf.mxu0
    %1314 = vmatprep.mubr.f32.mxu0 0.0
    %1315 = vmatmul.mubr.f32.gmra.mxu0 %v1210
    %v1316 = vpop.f32.mrf.mxu0
    %v1317 = vadd.f32 0.0, %v1316
    %v1318 = vpop.f32.mrf.mxu0
    %1319 = vmatprep.mubr.f32.mxu0 0.0
    %1320 = vmatmul.mubr.f32.gmra.mxu0 %v860
    %v1321 = vpop.f32.mrf.mxu0
    %v1322 = vadd.f32 0.0, %v1321
    %v1323 = vpop.f32.mrf.mxu0
    %1324 = vmatprep.mubr.f32.mxu0 0.0
    %1325 = vmatmul.mubr.f32.gmra.mxu0 %v863
    %v1326 = vpop.f32.mrf.mxu0
    %v1327 = vadd.f32 0.0, %v1326
    %v1328 = vpop.f32.mrf.mxu0
    %1329 = vmatprep.mubr.f32.mxu0 0.0
    %1330 = vmatmul.mubr.f32.gmra.mxu0 %v866
    %v1331 = vpop.f32.mrf.mxu0
    %v1332 = vadd.f32 0.0, %v1331
    %v1333 = vpop.f32.mrf.mxu0
    %1334 = vmatprep.mubr.f32.mxu0 0.0
    %1335 = vmatmul.mubr.f32.gmra.mxu0 %v869
    %v1336 = vpop.f32.mrf.mxu0
    %v1337 = vadd.f32 0.0, %v1336
    %v1338 = vpop.f32.mrf.mxu0
    %1339 = vmatprep.mubr.f32.mxu0 0.0
    %1340 = vmatmul.mubr.f32.gmra.mxu0 %v872
    %v1341 = vpop.f32.mrf.mxu0
    %v1342 = vadd.f32 0.0, %v1341
    %v1343 = vpop.f32.mrf.mxu0
    %1344 = vmatprep.mubr.f32.mxu0 0.0
    %1345 = vmatmul.mubr.f32.gmra.mxu0 %v875
    %v1346 = vpop.f32.mrf.mxu0
    %v1347 = vadd.f32 0.0, %v1346
    %v1348 = vpop.f32.mrf.mxu0
    %1349 = vmatprep.mubr.f32.mxu0 0.0
    %1350 = vmatmul.mubr.f32.gmra.mxu0 %v1044
    %v1351 = vpop.f32.mrf.mxu0
    %v1352 = vadd.f32 0.0, %v1351
    %v1353 = vpop.f32.mrf.mxu0
    %1354 = vmatprep.mubr.f32.mxu0 0.0
    %1355 = vmatmul.mubr.f32.gmra.mxu0 %v1213
    %v1356 = vpop.f32.mrf.mxu0
    %v1357 = vadd.f32 0.0, %v1356
    %v1358 = vpop.f32.mrf.mxu0
    %1359 = vdwg.mxu0
    %v1360 = vadd.f32 %v1191, %v1282
    %v1361 = vadd.f32 %v1192, %v1287
    %v1362 = vadd.f32 %v1193, %v1292
    %v1363 = vadd.f32 %v1194, %v1297
    %v1364 = vadd.f32 %v1195, %v1302
    %v1365 = vadd.f32 %v1196, %v1307
    %v1366 = vadd.f32 %v1197, %v1312
    %v1367 = vadd.f32 %v1198, %v1317
    %v1368 = vadd.f32 %v1199, %v1322
    %v1369 = vadd.f32 %v1200, %v1327
    %v1370 = vadd.f32 %v1201, %v1332
    %v1371 = vadd.f32 %v1202, %v1337
    %v1372 = vadd.f32 %v1203, %v1342
    %v1373 = vadd.f32 %v1204, %v1347
    %v1374 = vadd.f32 %v1205, %v1352
    %v1375 = vadd.f32 %v1206, %v1357
    %v1376 = vld [vmem:[#allocation2 + $0x2] sm:$0xff]
    %v1377 = vld [vmem:[#allocation2 + $0x12] sm:$0xff]
    %v1378 = vld [vmem:[#allocation2 + $0x22] sm:$0xff]
    %v1379 = vld [vmem:[#allocation2 + $0x32] sm:$0xff]
    %v1380 = vld [vmem:[#allocation2 + $0x42] sm:$0xff]
    %v1381 = vld [vmem:[#allocation2 + $0x52] sm:$0xff]
    %v1382 = vld [vmem:[#allocation2 + $0x62] sm:$0xff]
    %v1383 = vld [vmem:[#allocation2 + $0x72] sm:$0xff]
    %v1384 = vld [vmem:[#allocation2 + $0x82] sm:$0xff]
    %v1385 = vld [vmem:[#allocation2 + $0x92] sm:$0xff]
    %v1386 = vld [vmem:[#allocation2 + $0xa2] sm:$0xff]
    %v1387 = vld [vmem:[#allocation2 + $0xb2] sm:$0xff]
    %v1388 = vld [vmem:[#allocation2 + $0xc2] sm:$0xff]
    %v1389 = vld [vmem:[#allocation2 + $0xd2] sm:$0xff]
    %v1390 = vld [vmem:[#allocation2 + $0xe2] sm:$0xff]
    %v1391 = vld [vmem:[#allocation2 + $0xf2] sm:$0xff]
    %v1392 = vld [vmem:[#allocation2 + $0x102] sm:$0xff]
    %v1393 = vld [vmem:[#allocation2 + $0x112] sm:$0xff]
    %v1394 = vld [vmem:[#allocation2 + $0x122] sm:$0xff]
    %v1395 = vld [vmem:[#allocation2 + $0x132] sm:$0xff]
    %s1396 = scalar_lea.vmem %s1, 16
    %v1397 = vld [vmem:[%s1396] sm:$0xff]
    %v1399 = vsel %vm202, %v1376, 0
    %v1402 = vsel %vm202, %v1377, 0
    %v1405 = vsel %vm202, %v1378, 0
    %v1408 = vsel %vm202, %v1379, 0
    %v1411 = vsel %vm202, %v1380, 0
    %v1414 = vsel %vm202, %v1381, 0
    %v1417 = vsel %vm202, %v1382, 0
    %v1420 = vsel %vm202, %v1383, 0
    %v1423 = vsel %vm202, %v1386, 0
    %v1426 = vsel %vm202, %v1387, 0
    %v1429 = vsel %vm202, %v1388, 0
    %v1432 = vsel %vm202, %v1389, 0
    %v1435 = vsel %vm202, %v1390, 0
    %v1438 = vsel %vm202, %v1391, 0
    %v1441 = vsel %vm202, %v1392, 0
    %v1444 = vsel %vm202, %v1393, 0
    %1446 = vmatprep.subr.mxu0 0.0
    %1447 = vmatpush1.msra.mxu0 0.0
    %1448 = vmatprep.subr.mxu0 0.0
    %1449 = vmatpush1.msra.mxu0 0.0
    %1450 = vmatprep.subr.mxu0 0.0
    %1451 = vmatpush1.msra.mxu0 0.0
    %1452 = vmatprep.subr.mxu0 0.0
    %1453 = vmatpush1.msra.mxu0 0.0
    %1454 = vmatprep.subr.mxu0 0.0
    %1455 = vmatpush1.msra.mxu0 0.0
    %1456 = vmatprep.subr.mxu0 0.0
    %1457 = vmatpush1.msra.mxu0 0.0
    %1458 = vmatprep.subr.mxu0 0.0
    %1459 = vmatpush1.msra.mxu0 0.0
    %1460 = vmatprep.subr.mxu0 0.0
    %1461 = vmatpush1.msra.mxu0 0.0
    %1462 = vmatprep.subr.mxu0 0.0
    %1463 = vmatpush1.msra.mxu0 0.0
    %1464 = vmatprep.subr.mxu0 0.0
    %1465 = vmatpush1.msra.mxu0 0.0
    %1466 = vmatprep.subr.mxu0 0.0
    %1467 = vmatpush1.msra.mxu0 0.0
    %1468 = vmatprep.subr.mxu0 0.0
    %1469 = vmatpush1.msra.mxu0 0.0
    %1470 = vmatprep.subr.mxu0 0.0
    %1471 = vmatpush1.msra.mxu0 0.0
    %1472 = vmatprep.subr.mxu0 0.0
    %1473 = vmatpush1.msra.mxu0 0.0
    %1474 = vmatprep.subr.mxu0 0.0
    %1475 = vmatpush1.msra.mxu0 0.0
    %1476 = vmatprep.subr.mxu0 0.0
    %1477 = vmatpush1.msra.mxu0 %v1397
    %1478 = vmatprep.subr.mxu0 0.0
    %1479 = vmatpush2.msra.mxu0 0.0
    %1480 = vmatprep.subr.mxu0 0.0
    %1481 = vmatpush2.msra.mxu0 0.0
    %1482 = vmatprep.subr.mxu0 0.0
    %1483 = vmatpush2.msra.mxu0 0.0
    %1484 = vmatprep.subr.mxu0 0.0
    %1485 = vmatpush2.msra.mxu0 0.0
    %1486 = vmatprep.subr.mxu0 0.0
    %1487 = vmatpush2.msra.mxu0 0.0
    %1488 = vmatprep.subr.mxu0 0.0
    %1489 = vmatpush2.msra.mxu0 0.0
    %1490 = vmatprep.subr.mxu0 0.0
    %1491 = vmatpush2.msra.mxu0 0.0
    %1492 = vmatprep.subr.mxu0 0.0
    %1493 = vmatpush2.msra.mxu0 0.0
    %1494 = vmatprep.subr.mxu0 0.0
    %1495 = vmatpush2.msra.mxu0 0.0
    %1496 = vmatprep.subr.mxu0 0.0
    %1497 = vmatpush2.msra.mxu0 0.0
    %1498 = vmatprep.subr.mxu0 0.0
    %1499 = vmatpush2.msra.mxu0 0.0
    %1500 = vmatprep.subr.mxu0 0.0
    %1501 = vmatpush2.msra.mxu0 0.0
    %1502 = vmatprep.subr.mxu0 0.0
    %1503 = vmatpush2.msra.mxu0 0.0
    %1504 = vmatprep.subr.mxu0 0.0
    %1505 = vmatpush2.msra.mxu0 0.0
    %1506 = vmatprep.subr.mxu0 0.0
    %1507 = vmatpush2.msra.mxu0 0.0
    %1508 = vmatprep.subr.mxu0 0.0
    %1509 = vmatpush2.msra.mxu0 0.0
    %1510 = vmatprep.mubr.f32.mxu0 0.0
    %1511 = vmatmul.mubr.f32.gmra.mxu0 %v1399
    %v1512 = vpop.f32.mrf.mxu0
    %v1513 = vadd.f32 0.0, %v1512
    %v1514 = vpop.f32.mrf.mxu0
    %1515 = vmatprep.mubr.f32.mxu0 0.0
    %1516 = vmatmul.mubr.f32.gmra.mxu0 %v1402
    %v1517 = vpop.f32.mrf.mxu0
    %v1518 = vadd.f32 0.0, %v1517
    %v1519 = vpop.f32.mrf.mxu0
    %1520 = vmatprep.mubr.f32.mxu0 0.0
    %1521 = vmatmul.mubr.f32.gmra.mxu0 %v1405
    %v1522 = vpop.f32.mrf.mxu0
    %v1523 = vadd.f32 0.0, %v1522
    %v1524 = vpop.f32.mrf.mxu0
    %1525 = vmatprep.mubr.f32.mxu0 0.0
    %1526 = vmatmul.mubr.f32.gmra.mxu0 %v1408
    %v1527 = vpop.f32.mrf.mxu0
    %v1528 = vadd.f32 0.0, %v1527
    %v1529 = vpop.f32.mrf.mxu0
    %1530 = vmatprep.mubr.f32.mxu0 0.0
    %1531 = vmatmul.mubr.f32.gmra.mxu0 %v1411
    %v1532 = vpop.f32.mrf.mxu0
    %v1533 = vadd.f32 0.0, %v1532
    %v1534 = vpop.f32.mrf.mxu0
    %1535 = vmatprep.mubr.f32.mxu0 0.0
    %1536 = vmatmul.mubr.f32.gmra.mxu0 %v1414
    %v1537 = vpop.f32.mrf.mxu0
    %v1538 = vadd.f32 0.0, %v1537
    %v1539 = vpop.f32.mrf.mxu0
    %1540 = vmatprep.mubr.f32.mxu0 0.0
    %1541 = vmatmul.mubr.f32.gmra.mxu0 %v1417
    %v1542 = vpop.f32.mrf.mxu0
    %v1543 = vadd.f32 0.0, %v1542
    %v1544 = vpop.f32.mrf.mxu0
    %1545 = vmatprep.mubr.f32.mxu0 0.0
    %1546 = vmatmul.mubr.f32.gmra.mxu0 %v1420
    %v1547 = vpop.f32.mrf.mxu0
    %v1548 = vadd.f32 0.0, %v1547
    %v1549 = vpop.f32.mrf.mxu0
    %1550 = vmatprep.mubr.f32.mxu0 0.0
    %1551 = vmatmul.mubr.f32.gmra.mxu0 %v1423
    %v1552 = vpop.f32.mrf.mxu0
    %v1553 = vadd.f32 0.0, %v1552
    %v1554 = vpop.f32.mrf.mxu0
    %1555 = vmatprep.mubr.f32.mxu0 0.0
    %1556 = vmatmul.mubr.f32.gmra.mxu0 %v1426
    %v1557 = vpop.f32.mrf.mxu0
    %v1558 = vadd.f32 0.0, %v1557
    %v1559 = vpop.f32.mrf.mxu0
    %1560 = vmatprep.mubr.f32.mxu0 0.0
    %1561 = vmatmul.mubr.f32.gmra.mxu0 %v1429
    %v1562 = vpop.f32.mrf.mxu0
    %v1563 = vadd.f32 0.0, %v1562
    %v1564 = vpop.f32.mrf.mxu0
    %1565 = vmatprep.mubr.f32.mxu0 0.0
    %1566 = vmatmul.mubr.f32.gmra.mxu0 %v1432
    %v1567 = vpop.f32.mrf.mxu0
    %v1568 = vadd.f32 0.0, %v1567
    %v1569 = vpop.f32.mrf.mxu0
    %1570 = vmatprep.mubr.f32.mxu0 0.0
    %1571 = vmatmul.mubr.f32.gmra.mxu0 %v1435
    %v1572 = vpop.f32.mrf.mxu0
    %v1573 = vadd.f32 0.0, %v1572
    %v1574 = vpop.f32.mrf.mxu0
    %1575 = vmatprep.mubr.f32.mxu0 0.0
    %1576 = vmatmul.mubr.f32.gmra.mxu0 %v1438
    %v1577 = vpop.f32.mrf.mxu0
    %v1578 = vadd.f32 0.0, %v1577
    %v1579 = vpop.f32.mrf.mxu0
    %1580 = vmatprep.mubr.f32.mxu0 0.0
    %1581 = vmatmul.mubr.f32.gmra.mxu0 %v1441
    %v1582 = vpop.f32.mrf.mxu0
    %v1583 = vadd.f32 0.0, %v1582
    %v1584 = vpop.f32.mrf.mxu0
    %1585 = vmatprep.mubr.f32.mxu0 0.0
    %1586 = vmatmul.mubr.f32.gmra.mxu0 %v1444
    %v1587 = vpop.f32.mrf.mxu0
    %v1588 = vadd.f32 0.0, %v1587
    %v1589 = vpop.f32.mrf.mxu0
    %1590 = vdwg.mxu0
    %v1591 = vadd.f32 %v1360, %v1513
    %v1592 = vadd.f32 %v1361, %v1518
    %v1593 = vadd.f32 %v1362, %v1523
    %v1594 = vadd.f32 %v1363, %v1528
    %v1595 = vadd.f32 %v1364, %v1533
    %v1596 = vadd.f32 %v1365, %v1538
    %v1597 = vadd.f32 %v1366, %v1543
    %v1598 = vadd.f32 %v1367, %v1548
    %v1599 = vadd.f32 %v1368, %v1553
    %v1600 = vadd.f32 %v1369, %v1558
    %v1601 = vadd.f32 %v1370, %v1563
    %v1602 = vadd.f32 %v1371, %v1568
    %v1603 = vadd.f32 %v1372, %v1573
    %v1604 = vadd.f32 %v1373, %v1578
    %v1605 = vadd.f32 %v1374, %v1583
    %v1606 = vadd.f32 %v1375, %v1588
    %s1607 = scalar_lea.vmem %s1, 40
    %v1608 = vld [vmem:[%s1607] sm:$0xff]
    %v1610 = vsel %vm202, %v1384, 0
    %v1613 = vsel %vm202, %v1394, 0
    %1615 = vmatprep.subr.mxu0 0.0
    %1616 = vmatpush1.msra.mxu0 0.0
    %1617 = vmatprep.subr.mxu0 0.0
    %1618 = vmatpush1.msra.mxu0 0.0
    %1619 = vmatprep.subr.mxu0 0.0
    %1620 = vmatpush1.msra.mxu0 0.0
    %1621 = vmatprep.subr.mxu0 0.0
    %1622 = vmatpush1.msra.mxu0 0.0
    %1623 = vmatprep.subr.mxu0 0.0
    %1624 = vmatpush1.msra.mxu0 0.0
    %1625 = vmatprep.subr.mxu0 0.0
    %1626 = vmatpush1.msra.mxu0 0.0
    %1627 = vmatprep.subr.mxu0 0.0
    %1628 = vmatpush1.msra.mxu0 0.0
    %1629 = vmatprep.subr.mxu0 0.0
    %1630 = vmatpush1.msra.mxu0 0.0
    %1631 = vmatprep.subr.mxu0 0.0
    %1632 = vmatpush1.msra.mxu0 0.0
    %1633 = vmatprep.subr.mxu0 0.0
    %1634 = vmatpush1.msra.mxu0 0.0
    %1635 = vmatprep.subr.mxu0 0.0
    %1636 = vmatpush1.msra.mxu0 0.0
    %1637 = vmatprep.subr.mxu0 0.0
    %1638 = vmatpush1.msra.mxu0 0.0
    %1639 = vmatprep.subr.mxu0 0.0
    %1640 = vmatpush1.msra.mxu0 0.0
    %1641 = vmatprep.subr.mxu0 0.0
    %1642 = vmatpush1.msra.mxu0 0.0
    %1643 = vmatprep.subr.mxu0 0.0
    %1644 = vmatpush1.msra.mxu0 0.0
    %1645 = vmatprep.subr.mxu0 0.0
    %1646 = vmatpush1.msra.mxu0 %v1608
    %1647 = vmatprep.subr.mxu0 0.0
    %1648 = vmatpush2.msra.mxu0 0.0
    %1649 = vmatprep.subr.mxu0 0.0
    %1650 = vmatpush2.msra.mxu0 0.0
    %1651 = vmatprep.subr.mxu0 0.0
    %1652 = vmatpush2.msra.mxu0 0.0
    %1653 = vmatprep.subr.mxu0 0.0
    %1654 = vmatpush2.msra.mxu0 0.0
    %1655 = vmatprep.subr.mxu0 0.0
    %1656 = vmatpush2.msra.mxu0 0.0
    %1657 = vmatprep.subr.mxu0 0.0
    %1658 = vmatpush2.msra.mxu0 0.0
    %1659 = vmatprep.subr.mxu0 0.0
    %1660 = vmatpush2.msra.mxu0 0.0
    %1661 = vmatprep.subr.mxu0 0.0
    %1662 = vmatpush2.msra.mxu0 0.0
    %1663 = vmatprep.subr.mxu0 0.0
    %1664 = vmatpush2.msra.mxu0 0.0
    %1665 = vmatprep.subr.mxu0 0.0
    %1666 = vmatpush2.msra.mxu0 0.0
    %1667 = vmatprep.subr.mxu0 0.0
    %1668 = vmatpush2.msra.mxu0 0.0
    %1669 = vmatprep.subr.mxu0 0.0
    %1670 = vmatpush2.msra.mxu0 0.0
    %1671 = vmatprep.subr.mxu0 0.0
    %1672 = vmatpush2.msra.mxu0 0.0
    %1673 = vmatprep.subr.mxu0 0.0
    %1674 = vmatpush2.msra.mxu0 0.0
    %1675 = vmatprep.subr.mxu0 0.0
    %1676 = vmatpush2.msra.mxu0 0.0
    %1677 = vmatprep.subr.mxu0 0.0
    %1678 = vmatpush2.msra.mxu0 0.0
    %1679 = vmatprep.mubr.f32.mxu0 0.0
    %1680 = vmatmul.mubr.f32.gmra.mxu0 %v1402
    %v1681 = vpop.f32.mrf.mxu0
    %v1682 = vadd.f32 0.0, %v1681
    %v1683 = vpop.f32.mrf.mxu0
    %1684 = vmatprep.mubr.f32.mxu0 0.0
    %1685 = vmatmul.mubr.f32.gmra.mxu0 %v1405
    %v1686 = vpop.f32.mrf.mxu0
    %v1687 = vadd.f32 0.0, %v1686
    %v1688 = vpop.f32.mrf.mxu0
    %1689 = vmatprep.mubr.f32.mxu0 0.0
    %1690 = vmatmul.mubr.f32.gmra.mxu0 %v1408
    %v1691 = vpop.f32.mrf.mxu0
    %v1692 = vadd.f32 0.0, %v1691
    %v1693 = vpop.f32.mrf.mxu0
    %1694 = vmatprep.mubr.f32.mxu0 0.0
    %1695 = vmatmul.mubr.f32.gmra.mxu0 %v1411
    %v1696 = vpop.f32.mrf.mxu0
    %v1697 = vadd.f32 0.0, %v1696
    %v1698 = vpop.f32.mrf.mxu0
    %1699 = vmatprep.mubr.f32.mxu0 0.0
    %1700 = vmatmul.mubr.f32.gmra.mxu0 %v1414
    %v1701 = vpop.f32.mrf.mxu0
    %v1702 = vadd.f32 0.0, %v1701
    %v1703 = vpop.f32.mrf.mxu0
    %1704 = vmatprep.mubr.f32.mxu0 0.0
    %1705 = vmatmul.mubr.f32.gmra.mxu0 %v1417
    %v1706 = vpop.f32.mrf.mxu0
    %v1707 = vadd.f32 0.0, %v1706
    %v1708 = vpop.f32.mrf.mxu0
    %1709 = vmatprep.mubr.f32.mxu0 0.0
    %1710 = vmatmul.mubr.f32.gmra.mxu0 %v1420
    %v1711 = vpop.f32.mrf.mxu0
    %v1712 = vadd.f32 0.0, %v1711
    %v1713 = vpop.f32.mrf.mxu0
    %1714 = vmatprep.mubr.f32.mxu0 0.0
    %1715 = vmatmul.mubr.f32.gmra.mxu0 %v1610
    %v1716 = vpop.f32.mrf.mxu0
    %v1717 = vadd.f32 0.0, %v1716
    %v1718 = vpop.f32.mrf.mxu0
    %1719 = vmatprep.mubr.f32.mxu0 0.0
    %1720 = vmatmul.mubr.f32.gmra.mxu0 %v1426
    %v1721 = vpop.f32.mrf.mxu0
    %v1722 = vadd.f32 0.0, %v1721
    %v1723 = vpop.f32.mrf.mxu0
    %1724 = vmatprep.mubr.f32.mxu0 0.0
    %1725 = vmatmul.mubr.f32.gmra.mxu0 %v1429
    %v1726 = vpop.f32.mrf.mxu0
    %v1727 = vadd.f32 0.0, %v1726
    %v1728 = vpop.f32.mrf.mxu0
    %1729 = vmatprep.mubr.f32.mxu0 0.0
    %1730 = vmatmul.mubr.f32.gmra.mxu0 %v1432
    %v1731 = vpop.f32.mrf.mxu0
    %v1732 = vadd.f32 0.0, %v1731
    %v1733 = vpop.f32.mrf.mxu0
    %1734 = vmatprep.mubr.f32.mxu0 0.0
    %1735 = vmatmul.mubr.f32.gmra.mxu0 %v1435
    %v1736 = vpop.f32.mrf.mxu0
    %v1737 = vadd.f32 0.0, %v1736
    %v1738 = vpop.f32.mrf.mxu0
    %1739 = vmatprep.mubr.f32.mxu0 0.0
    %1740 = vmatmul.mubr.f32.gmra.mxu0 %v1438
    %v1741 = vpop.f32.mrf.mxu0
    %v1742 = vadd.f32 0.0, %v1741
    %v1743 = vpop.f32.mrf.mxu0
    %1744 = vmatprep.mubr.f32.mxu0 0.0
    %1745 = vmatmul.mubr.f32.gmra.mxu0 %v1441
    %v1746 = vpop.f32.mrf.mxu0
    %v1747 = vadd.f32 0.0, %v1746
    %v1748 = vpop.f32.mrf.mxu0
    %1749 = vmatprep.mubr.f32.mxu0 0.0
    %1750 = vmatmul.mubr.f32.gmra.mxu0 %v1444
    %v1751 = vpop.f32.mrf.mxu0
    %v1752 = vadd.f32 0.0, %v1751
    %v1753 = vpop.f32.mrf.mxu0
    %1754 = vmatprep.mubr.f32.mxu0 0.0
    %1755 = vmatmul.mubr.f32.gmra.mxu0 %v1613
    %v1756 = vpop.f32.mrf.mxu0
    %v1757 = vadd.f32 0.0, %v1756
    %v1758 = vpop.f32.mrf.mxu0
    %1759 = vdwg.mxu0
    %v1760 = vadd.f32 %v1591, %v1682
    %v1761 = vadd.f32 %v1592, %v1687
    %v1762 = vadd.f32 %v1593, %v1692
    %v1763 = vadd.f32 %v1594, %v1697
    %v1764 = vadd.f32 %v1595, %v1702
    %v1765 = vadd.f32 %v1596, %v1707
    %v1766 = vadd.f32 %v1597, %v1712
    %v1767 = vadd.f32 %v1598, %v1717
    %v1768 = vadd.f32 %v1599, %v1722
    %v1769 = vadd.f32 %v1600, %v1727
    %v1770 = vadd.f32 %v1601, %v1732
    %v1771 = vadd.f32 %v1602, %v1737
    %v1772 = vadd.f32 %v1603, %v1742
    %v1773 = vadd.f32 %v1604, %v1747
    %v1774 = vadd.f32 %v1605, %v1752
    %v1775 = vadd.f32 %v1606, %v1757
    %s1776 = scalar_lea.vmem %s1, 64
    %v1777 = vld [vmem:[%s1776] sm:$0xff]
    %v1779 = vsel %vm202, %v1385, 0
    %v1782 = vsel %vm202, %v1395, 0
    %1784 = vmatprep.subr.mxu0 0.0
    %1785 = vmatpush1.msra.mxu0 0.0
    %1786 = vmatprep.subr.mxu0 0.0
    %1787 = vmatpush1.msra.mxu0 0.0
    %1788 = vmatprep.subr.mxu0 0.0
    %1789 = vmatpush1.msra.mxu0 0.0
    %1790 = vmatprep.subr.mxu0 0.0
    %1791 = vmatpush1.msra.mxu0 0.0
    %1792 = vmatprep.subr.mxu0 0.0
    %1793 = vmatpush1.msra.mxu0 0.0
    %1794 = vmatprep.subr.mxu0 0.0
    %1795 = vmatpush1.msra.mxu0 0.0
    %1796 = vmatprep.subr.mxu0 0.0
    %1797 = vmatpush1.msra.mxu0 0.0
    %1798 = vmatprep.subr.mxu0 0.0
    %1799 = vmatpush1.msra.mxu0 0.0
    %1800 = vmatprep.subr.mxu0 0.0
    %1801 = vmatpush1.msra.mxu0 0.0
    %1802 = vmatprep.subr.mxu0 0.0
    %1803 = vmatpush1.msra.mxu0 0.0
    %1804 = vmatprep.subr.mxu0 0.0
    %1805 = vmatpush1.msra.mxu0 0.0
    %1806 = vmatprep.subr.mxu0 0.0
    %1807 = vmatpush1.msra.mxu0 0.0
    %1808 = vmatprep.subr.mxu0 0.0
    %1809 = vmatpush1.msra.mxu0 0.0
    %1810 = vmatprep.subr.mxu0 0.0
    %1811 = vmatpush1.msra.mxu0 0.0
    %1812 = vmatprep.subr.mxu0 0.0
    %1813 = vmatpush1.msra.mxu0 0.0
    %1814 = vmatprep.subr.mxu0 0.0
    %1815 = vmatpush1.msra.mxu0 %v1777
    %1816 = vmatprep.subr.mxu0 0.0
    %1817 = vmatpush2.msra.mxu0 0.0
    %1818 = vmatprep.subr.mxu0 0.0
    %1819 = vmatpush2.msra.mxu0 0.0
    %1820 = vmatprep.subr.mxu0 0.0
    %1821 = vmatpush2.msra.mxu0 0.0
    %1822 = vmatprep.subr.mxu0 0.0
    %1823 = vmatpush2.msra.mxu0 0.0
    %1824 = vmatprep.subr.mxu0 0.0
    %1825 = vmatpush2.msra.mxu0 0.0
    %1826 = vmatprep.subr.mxu0 0.0
    %1827 = vmatpush2.msra.mxu0 0.0
    %1828 = vmatprep.subr.mxu0 0.0
    %1829 = vmatpush2.msra.mxu0 0.0
    %1830 = vmatprep.subr.mxu0 0.0
    %1831 = vmatpush2.msra.mxu0 0.0
    %1832 = vmatprep.subr.mxu0 0.0
    %1833 = vmatpush2.msra.mxu0 0.0
    %1834 = vmatprep.subr.mxu0 0.0
    %1835 = vmatpush2.msra.mxu0 0.0
    %1836 = vmatprep.subr.mxu0 0.0
    %1837 = vmatpush2.msra.mxu0 0.0
    %1838 = vmatprep.subr.mxu0 0.0
    %1839 = vmatpush2.msra.mxu0 0.0
    %1840 = vmatprep.subr.mxu0 0.0
    %1841 = vmatpush2.msra.mxu0 0.0
    %1842 = vmatprep.subr.mxu0 0.0
    %1843 = vmatpush2.msra.mxu0 0.0
    %1844 = vmatprep.subr.mxu0 0.0
    %1845 = vmatpush2.msra.mxu0 0.0
    %1846 = vmatprep.subr.mxu0 0.0
    %1847 = vmatpush2.msra.mxu0 0.0
    %1848 = vmatprep.mubr.f32.mxu0 0.0
    %1849 = vmatmul.mubr.f32.gmra.mxu0 %v1405
    %v1850 = vpop.f32.mrf.mxu0
    %v1851 = vadd.f32 0.0, %v1850
    %v1852 = vpop.f32.mrf.mxu0
    %1853 = vmatprep.mubr.f32.mxu0 0.0
    %1854 = vmatmul.mubr.f32.gmra.mxu0 %v1408
    %v1855 = vpop.f32.mrf.mxu0
    %v1856 = vadd.f32 0.0, %v1855
    %v1857 = vpop.f32.mrf.mxu0
    %1858 = vmatprep.mubr.f32.mxu0 0.0
    %1859 = vmatmul.mubr.f32.gmra.mxu0 %v1411
    %v1860 = vpop.f32.mrf.mxu0
    %v1861 = vadd.f32 0.0, %v1860
    %v1862 = vpop.f32.mrf.mxu0
    %1863 = vmatprep.mubr.f32.mxu0 0.0
    %1864 = vmatmul.mubr.f32.gmra.mxu0 %v1414
    %v1865 = vpop.f32.mrf.mxu0
    %v1866 = vadd.f32 0.0, %v1865
    %v1867 = vpop.f32.mrf.mxu0
    %1868 = vmatprep.mubr.f32.mxu0 0.0
    %1869 = vmatmul.mubr.f32.gmra.mxu0 %v1417
    %v1870 = vpop.f32.mrf.mxu0
    %v1871 = vadd.f32 0.0, %v1870
    %v1872 = vpop.f32.mrf.mxu0
    %1873 = vmatprep.mubr.f32.mxu0 0.0
    %1874 = vmatmul.mubr.f32.gmra.mxu0 %v1420
    %v1875 = vpop.f32.mrf.mxu0
    %v1876 = vadd.f32 0.0, %v1875
    %v1877 = vpop.f32.mrf.mxu0
    %1878 = vmatprep.mubr.f32.mxu0 0.0
    %1879 = vmatmul.mubr.f32.gmra.mxu0 %v1610
    %v1880 = vpop.f32.mrf.mxu0
    %v1881 = vadd.f32 0.0, %v1880
    %v1882 = vpop.f32.mrf.mxu0
    %1883 = vmatprep.mubr.f32.mxu0 0.0
    %1884 = vmatmul.mubr.f32.gmra.mxu0 %v1779
    %v1885 = vpop.f32.mrf.mxu0
    %v1886 = vadd.f32 0.0, %v1885
    %v1887 = vpop.f32.mrf.mxu0
    %1888 = vmatprep.mubr.f32.mxu0 0.0
    %1889 = vmatmul.mubr.f32.gmra.mxu0 %v1429
    %v1890 = vpop.f32.mrf.mxu0
    %v1891 = vadd.f32 0.0, %v1890
    %v1892 = vpop.f32.mrf.mxu0
    %1893 = vmatprep.mubr.f32.mxu0 0.0
    %1894 = vmatmul.mubr.f32.gmra.mxu0 %v1432
    %v1895 = vpop.f32.mrf.mxu0
    %v1896 = vadd.f32 0.0, %v1895
    %v1897 = vpop.f32.mrf.mxu0
    %1898 = vmatprep.mubr.f32.mxu0 0.0
    %1899 = vmatmul.mubr.f32.gmra.mxu0 %v1435
    %v1900 = vpop.f32.mrf.mxu0
    %v1901 = vadd.f32 0.0, %v1900
    %v1902 = vpop.f32.mrf.mxu0
    %1903 = vmatprep.mubr.f32.mxu0 0.0
    %1904 = vmatmul.mubr.f32.gmra.mxu0 %v1438
    %v1905 = vpop.f32.mrf.mxu0
    %v1906 = vadd.f32 0.0, %v1905
    %v1907 = vpop.f32.mrf.mxu0
    %1908 = vmatprep.mubr.f32.mxu0 0.0
    %1909 = vmatmul.mubr.f32.gmra.mxu0 %v1441
    %v1910 = vpop.f32.mrf.mxu0
    %v1911 = vadd.f32 0.0, %v1910
    %v1912 = vpop.f32.mrf.mxu0
    %1913 = vmatprep.mubr.f32.mxu0 0.0
    %1914 = vmatmul.mubr.f32.gmra.mxu0 %v1444
    %v1915 = vpop.f32.mrf.mxu0
    %v1916 = vadd.f32 0.0, %v1915
    %v1917 = vpop.f32.mrf.mxu0
    %1918 = vmatprep.mubr.f32.mxu0 0.0
    %1919 = vmatmul.mubr.f32.gmra.mxu0 %v1613
    %v1920 = vpop.f32.mrf.mxu0
    %v1921 = vadd.f32 0.0, %v1920
    %v1922 = vpop.f32.mrf.mxu0
    %1923 = vmatprep.mubr.f32.mxu0 0.0
    %1924 = vmatmul.mubr.f32.gmra.mxu0 %v1782
    %v1925 = vpop.f32.mrf.mxu0
    %v1926 = vadd.f32 0.0, %v1925
    %v1927 = vpop.f32.mrf.mxu0
    %1928 = vdwg.mxu0
    %v1929 = vadd.f32 %v1760, %v1851
    %v1930 = vadd.f32 %v1761, %v1856
    %v1931 = vadd.f32 %v1762, %v1861
    %v1932 = vadd.f32 %v1763, %v1866
    %v1933 = vadd.f32 %v1764, %v1871
    %v1934 = vadd.f32 %v1765, %v1876
    %v1935 = vadd.f32 %v1766, %v1881
    %v1936 = vadd.f32 %v1767, %v1886
    %v1937 = vadd.f32 %v1768, %v1891
    %v1938 = vadd.f32 %v1769, %v1896
    %v1939 = vadd.f32 %v1770, %v1901
    %v1940 = vadd.f32 %v1771, %v1906
    %v1941 = vadd.f32 %v1772, %v1911
    %v1942 = vadd.f32 %v1773, %v1916
    %v1943 = vadd.f32 %v1774, %v1921
    %v1944 = vadd.f32 %v1775, %v1926
    %1945 = vxpose.xlu0.b32.start [1/16] %v1929, 128
    %1946 = vxpose.xlu0.b32.cont [2/16] %v1930, 128
    %1947 = vxpose.xlu0.b32.cont [3/16] %v1931, 128
    %1948 = vxpose.xlu0.b32.cont [4/16] %v1932, 128
    %1949 = vxpose.xlu0.b32.cont [5/16] %v1933, 128
    %1950 = vxpose.xlu0.b32.cont [6/16] %v1934, 128
    %1951 = vxpose.xlu0.b32.cont [7/16] %v1935, 128
    %1952 = vxpose.xlu0.b32.cont [8/16] %v1936, 128
    %1953 = vxpose.xlu0.b32.cont [9/16] %v1937, 128
    %1954 = vxpose.xlu0.b32.cont [10/16] %v1938, 128
    %1955 = vxpose.xlu0.b32.cont [11/16] %v1939, 128
    %1956 = vxpose.xlu0.b32.cont [12/16] %v1940, 128
    %1957 = vxpose.xlu0.b32.cont [13/16] %v1941, 128
    %1958 = vxpose.xlu0.b32.cont [14/16] %v1942, 128
    %1959 = vxpose.xlu0.b32.cont [15/16] %v1943, 128
    %1960 = vxpose.xlu0.b32.end [16/16] %v1944, 128
    %v1961 = vpop.trf.xlu0
    %v1962 = vpop.trf.xlu0
    %v1963 = vpop.trf.xlu0
    %v1964 = vpop.trf.xlu0
    %v1965 = vpop.trf.xlu0
    %v1966 = vpop.trf.xlu0
    %v1967 = vpop.trf.xlu0
    %v1968 = vpop.trf.xlu0
    %v1969 = vpop.trf.xlu0
    %v1970 = vpop.trf.xlu0
    %v1971 = vpop.trf.xlu0
    %v1972 = vpop.trf.xlu0
    %v1973 = vpop.trf.xlu0
    %v1974 = vpop.trf.xlu0
    %v1975 = vpop.trf.xlu0
    %v1976 = vpop.trf.xlu0
    %1977 = vadd.xlane.f32.xlu0 %v1961
    %v1978 = vpop.xlane.xlu0 %1977
    %v1979 = vmul.f32 %v1978, 0.0078125
    %v1980 = vmul.f32 %v1961, %v1961
    %1981 = vadd.xlane.f32.xlu0 %v1980
    %v1982 = vpop.xlane.xlu0 %1981
    %v1983 = vmul.f32 %v1982, 0.0078125
    %v1984 = vmul.f32 %v1979, %v1979
    %v1985 = vsub.f32 %v1983, %v1984
    %v1986 = vmax.f32 %v1985, 0.0
    %v1987 = vld [vmem:[%s2] sm:$0xff]
    %v1988 = vadd.f32 %v1986, 1e-05
    %v1989 = vrsqrt.pop %v1988
    %v1990 = vmul.f32 %v1987, %v1989
    %v1991 = vld [vmem:[%s3] sm:$0xff]
    %v1992 = vmul.f32 %v1979, %v1990
    %v1993 = vsub.f32 %v1991, %v1992
    %1995 = vset.pattern.permute.xlu0 0
    %1996 = vperm.xlu0 %1995, %v1990
    %v1997 = vpop.permute.xlu0 %1996
    %v1999 = vmul.f32 %v1961, %v1997
    %2001 = vset.pattern.permute.xlu0 0
    %2002 = vperm.xlu0 %2001, %v1993
    %v2003 = vpop.permute.xlu0 %2002
    %v2005 = vadd.f32 %v1999, %v2003
    %v2006 = vmax.f32 %v2005, 0.0
    %2007 = vxpose.xlu0.b32.start [1/16] %v2006, 128
    %2008 = vxpose.xlu0.b32.cont [2/16] 0.0, 128
    %2009 = vxpose.xlu0.b32.cont [3/16] 0.0, 128
    %2010 = vxpose.xlu0.b32.cont [4/16] 0.0, 128
    %2011 = vxpose.xlu0.b32.cont [5/16] 0.0, 128
    %2012 = vxpose.xlu0.b32.cont [6/16] 0.0, 128
    %2013 = vxpose.xlu0.b32.cont [7/16] 0.0, 128
    %2014 = vxpose.xlu0.b32.cont [8/16] 0.0, 128
    %2015 = vxpose.xlu0.b32.cont [9/16] 0.0, 128
    %2016 = vxpose.xlu0.b32.cont [10/16] 0.0, 128
    %2017 = vxpose.xlu0.b32.cont [11/16] 0.0, 128
    %2018 = vxpose.xlu0.b32.cont [12/16] 0.0, 128
    %2019 = vxpose.xlu0.b32.cont [13/16] 0.0, 128
    %2020 = vxpose.xlu0.b32.cont [14/16] 0.0, 128
    %2021 = vxpose.xlu0.b32.cont [15/16] 0.0, 128
    %2022 = vxpose.xlu0.b32.end [16/16] 0.0, 128
    %v2023 = vpop.trf.xlu0
    %v2024 = vpop.trf.xlu0
    %v2025 = vpop.trf.xlu0
    %v2026 = vpop.trf.xlu0
    %v2027 = vpop.trf.xlu0
    %v2028 = vpop.trf.xlu0
    %v2029 = vpop.trf.xlu0
    %v2030 = vpop.trf.xlu0
    %v2031 = vpop.trf.xlu0
    %v2032 = vpop.trf.xlu0
    %v2033 = vpop.trf.xlu0
    %v2034 = vpop.trf.xlu0
    %v2035 = vpop.trf.xlu0
    %v2036 = vpop.trf.xlu0
    %v2037 = vpop.trf.xlu0
    %v2038 = vpop.trf.xlu0
    %2039 = vst.msk [vmem:[%s254 + $0x1] sm:$0xff] %vm202, %v2023
    %2040 = vst.msk [vmem:[%s254 + $0x11] sm:$0xff] %vm202, %v2024
    %2041 = vst.msk [vmem:[%s254 + $0x21] sm:$0xff] %vm202, %v2025
    %2042 = vst.msk [vmem:[%s254 + $0x31] sm:$0xff] %vm202, %v2026
    %2043 = vst.msk [vmem:[%s254 + $0x41] sm:$0xff] %vm202, %v2027
    %2044 = vst.msk [vmem:[%s254 + $0x51] sm:$0xff] %vm202, %v2028
    %2045 = vst.msk [vmem:[%s254 + $0x61] sm:$0xff] %vm202, %v2029
    %2046 = vst.msk [vmem:[%s254 + $0x71] sm:$0xff] %vm202, %v2030
    %2047 = vst.msk [vmem:[%s254 + $0xa1] sm:$0xff] %vm202, %v2031
    %2048 = vst.msk [vmem:[%s254 + $0xb1] sm:$0xff] %vm202, %v2032
    %2049 = vst.msk [vmem:[%s254 + $0xc1] sm:$0xff] %vm202, %v2033
    %2050 = vst.msk [vmem:[%s254 + $0xd1] sm:$0xff] %vm202, %v2034
    %2051 = vst.msk [vmem:[%s254 + $0xe1] sm:$0xff] %vm202, %v2035
    %2052 = vst.msk [vmem:[%s254 + $0xf1] sm:$0xff] %vm202, %v2036
    %2053 = vst.msk [vmem:[%s254 + $0x101] sm:$0xff] %vm202, %v2037
    %2054 = vst.msk [vmem:[%s254 + $0x111] sm:$0xff] %vm202, %v2038
    %v2055 = vld [vmem:[#allocation2] sm:$0xff]
    %v2056 = vld [vmem:[#allocation2 + $0x10] sm:$0xff]
    %v2057 = vld [vmem:[#allocation2 + $0x20] sm:$0xff]
    %v2058 = vld [vmem:[#allocation2 + $0x30] sm:$0xff]
    %v2059 = vld [vmem:[#allocation2 + $0x40] sm:$0xff]
    %v2060 = vld [vmem:[#allocation2 + $0x50] sm:$0xff]
    %v2061 = vld [vmem:[#allocation2 + $0x60] sm:$0xff]
    %v2062 = vld [vmem:[#allocation2 + $0x70] sm:$0xff]
    %v2063 = vld [vmem:[#allocation2 + $0x80] sm:$0xff]
    %v2064 = vld [vmem:[#allocation2 + $0x90] sm:$0xff]
    %v2065 = vld [vmem:[#allocation2 + $0xa0] sm:$0xff]
    %v2066 = vld [vmem:[#allocation2 + $0xb0] sm:$0xff]
    %v2067 = vld [vmem:[#allocation2 + $0xc0] sm:$0xff]
    %v2068 = vld [vmem:[#allocation2 + $0xd0] sm:$0xff]
    %v2069 = vld [vmem:[#allocation2 + $0xe0] sm:$0xff]
    %v2070 = vld [vmem:[#allocation2 + $0xf0] sm:$0xff]
    %v2071 = vld [vmem:[#allocation2 + $0x100] sm:$0xff]
    %v2072 = vld [vmem:[#allocation2 + $0x110] sm:$0xff]
    %v2073 = vld [vmem:[#allocation2 + $0x120] sm:$0xff]
    %v2074 = vld [vmem:[#allocation2 + $0x130] sm:$0xff]
    %v2075 = vld [vmem:[%s4] sm:$0xff]
    %s2076 = scalar_lea.vmem %s4, 24
    %v2077 = vld [vmem:[%s2076] sm:$0xff]
    %v2079 = vsel %vm202, %v2056, 0
    %v2082 = vsel %vm202, %v2057, 0
    %v2085 = vsel %vm202, %v2058, 0
    %v2088 = vsel %vm202, %v2059, 0
    %v2091 = vsel %vm202, %v2060, 0
    %v2094 = vsel %vm202, %v2061, 0
    %v2097 = vsel %vm202, %v2062, 0
    %v2100 = vsel %vm202, %v2063, 0
    %v2103 = vsel %vm202, %v2066, 0
    %v2106 = vsel %vm202, %v2067, 0
    %v2109 = vsel %vm202, %v2068, 0
    %v2112 = vsel %vm202, %v2069, 0
    %v2115 = vsel %vm202, %v2070, 0
    %v2118 = vsel %vm202, %v2071, 0
    %v2121 = vsel %vm202, %v2072, 0
    %v2124 = vsel %vm202, %v2073, 0
    %2126 = vmatprep.subr.mxu0 0.0
    %2127 = vmatpush1.msra.mxu0 0.0
    %2128 = vmatprep.subr.mxu0 0.0
    %2129 = vmatpush1.msra.mxu0 0.0
    %2130 = vmatprep.subr.mxu0 0.0
    %2131 = vmatpush1.msra.mxu0 0.0
    %2132 = vmatprep.subr.mxu0 0.0
    %2133 = vmatpush1.msra.mxu0 0.0
    %2134 = vmatprep.subr.mxu0 0.0
    %2135 = vmatpush1.msra.mxu0 0.0
    %2136 = vmatprep.subr.mxu0 0.0
    %2137 = vmatpush1.msra.mxu0 0.0
    %2138 = vmatprep.subr.mxu0 0.0
    %2139 = vmatpush1.msra.mxu0 0.0
    %2140 = vmatprep.subr.mxu0 0.0
    %2141 = vmatpush1.msra.mxu0 0.0
    %2142 = vmatprep.subr.mxu0 0.0
    %2143 = vmatpush1.msra.mxu0 0.0
    %2144 = vmatprep.subr.mxu0 0.0
    %2145 = vmatpush1.msra.mxu0 0.0
    %2146 = vmatprep.subr.mxu0 0.0
    %2147 = vmatpush1.msra.mxu0 0.0
    %2148 = vmatprep.subr.mxu0 0.0
    %2149 = vmatpush1.msra.mxu0 0.0
    %2150 = vmatprep.subr.mxu0 0.0
    %2151 = vmatpush1.msra.mxu0 0.0
    %2152 = vmatprep.subr.mxu0 0.0
    %2153 = vmatpush1.msra.mxu0 0.0
    %2154 = vmatprep.subr.mxu0 0.0
    %2155 = vmatpush1.msra.mxu0 0.0
    %2156 = vmatprep.subr.mxu0 0.0
    %2157 = vmatpush1.msra.mxu0 %v2077
    %2158 = vmatprep.subr.mxu0 0.0
    %2159 = vmatpush2.msra.mxu0 0.0
    %2160 = vmatprep.subr.mxu0 0.0
    %2161 = vmatpush2.msra.mxu0 0.0
    %2162 = vmatprep.subr.mxu0 0.0
    %2163 = vmatpush2.msra.mxu0 0.0
    %2164 = vmatprep.subr.mxu0 0.0
    %2165 = vmatpush2.msra.mxu0 0.0
    %2166 = vmatprep.subr.mxu0 0.0
    %2167 = vmatpush2.msra.mxu0 0.0
    %2168 = vmatprep.subr.mxu0 0.0
    %2169 = vmatpush2.msra.mxu0 0.0
    %2170 = vmatprep.subr.mxu0 0.0
    %2171 = vmatpush2.msra.mxu0 0.0
    %2172 = vmatprep.subr.mxu0 0.0
    %2173 = vmatpush2.msra.mxu0 0.0
    %2174 = vmatprep.subr.mxu0 0.0
    %2175 = vmatpush2.msra.mxu0 0.0
    %2176 = vmatprep.subr.mxu0 0.0
    %2177 = vmatpush2.msra.mxu0 0.0
    %2178 = vmatprep.subr.mxu0 0.0
    %2179 = vmatpush2.msra.mxu0 0.0
    %2180 = vmatprep.subr.mxu0 0.0
    %2181 = vmatpush2.msra.mxu0 0.0
    %2182 = vmatprep.subr.mxu0 0.0
    %2183 = vmatpush2.msra.mxu0 0.0
    %2184 = vmatprep.subr.mxu0 0.0
    %2185 = vmatpush2.msra.mxu0 0.0
    %2186 = vmatprep.subr.mxu0 0.0
    %2187 = vmatpush2.msra.mxu0 0.0
    %2188 = vmatprep.subr.mxu0 0.0
    %2189 = vmatpush2.msra.mxu0 0.0
    %2190 = vmatprep.mubr.f32.mxu0 0.0
    %2191 = vmatmul.mubr.f32.gmra.mxu0 %v2079
    %v2192 = vpop.f32.mrf.mxu0
    %v2193 = vadd.f32 0.0, %v2192
    %v2194 = vpop.f32.mrf.mxu0
    %2195 = vmatprep.mubr.f32.mxu0 0.0
    %2196 = vmatmul.mubr.f32.gmra.mxu0 %v2082
    %v2197 = vpop.f32.mrf.mxu0
    %v2198 = vadd.f32 0.0, %v2197
    %v2199 = vpop.f32.mrf.mxu0
    %2200 = vmatprep.mubr.f32.mxu0 0.0
    %2201 = vmatmul.mubr.f32.gmra.mxu0 %v2085
    %v2202 = vpop.f32.mrf.mxu0
    %v2203 = vadd.f32 0.0, %v2202
    %v2204 = vpop.f32.mrf.mxu0
    %2205 = vmatprep.mubr.f32.mxu0 0.0
    %2206 = vmatmul.mubr.f32.gmra.mxu0 %v2088
    %v2207 = vpop.f32.mrf.mxu0
    %v2208 = vadd.f32 0.0, %v2207
    %v2209 = vpop.f32.mrf.mxu0
    %2210 = vmatprep.mubr.f32.mxu0 0.0
    %2211 = vmatmul.mubr.f32.gmra.mxu0 %v2091
    %v2212 = vpop.f32.mrf.mxu0
    %v2213 = vadd.f32 0.0, %v2212
    %v2214 = vpop.f32.mrf.mxu0
    %2215 = vmatprep.mubr.f32.mxu0 0.0
    %2216 = vmatmul.mubr.f32.gmra.mxu0 %v2094
    %v2217 = vpop.f32.mrf.mxu0
    %v2218 = vadd.f32 0.0, %v2217
    %v2219 = vpop.f32.mrf.mxu0
    %2220 = vmatprep.mubr.f32.mxu0 0.0
    %2221 = vmatmul.mubr.f32.gmra.mxu0 %v2097
    %v2222 = vpop.f32.mrf.mxu0
    %v2223 = vadd.f32 0.0, %v2222
    %v2224 = vpop.f32.mrf.mxu0
    %2225 = vmatprep.mubr.f32.mxu0 0.0
    %2226 = vmatmul.mubr.f32.gmra.mxu0 %v2100
    %v2227 = vpop.f32.mrf.mxu0
    %v2228 = vadd.f32 0.0, %v2227
    %v2229 = vpop.f32.mrf.mxu0
    %2230 = vmatprep.mubr.f32.mxu0 0.0
    %2231 = vmatmul.mubr.f32.gmra.mxu0 %v2103
    %v2232 = vpop.f32.mrf.mxu0
    %v2233 = vadd.f32 0.0, %v2232
    %v2234 = vpop.f32.mrf.mxu0
    %2235 = vmatprep.mubr.f32.mxu0 0.0
    %2236 = vmatmul.mubr.f32.gmra.mxu0 %v2106
    %v2237 = vpop.f32.mrf.mxu0
    %v2238 = vadd.f32 0.0, %v2237
    %v2239 = vpop.f32.mrf.mxu0
    %2240 = vmatprep.mubr.f32.mxu0 0.0
    %2241 = vmatmul.mubr.f32.gmra.mxu0 %v2109
    %v2242 = vpop.f32.mrf.mxu0
    %v2243 = vadd.f32 0.0, %v2242
    %v2244 = vpop.f32.mrf.mxu0
    %2245 = vmatprep.mubr.f32.mxu0 0.0
    %2246 = vmatmul.mubr.f32.gmra.mxu0 %v2112
    %v2247 = vpop.f32.mrf.mxu0
    %v2248 = vadd.f32 0.0, %v2247
    %v2249 = vpop.f32.mrf.mxu0
    %2250 = vmatprep.mubr.f32.mxu0 0.0
    %2251 = vmatmul.mubr.f32.gmra.mxu0 %v2115
    %v2252 = vpop.f32.mrf.mxu0
    %v2253 = vadd.f32 0.0, %v2252
    %v2254 = vpop.f32.mrf.mxu0
    %2255 = vmatprep.mubr.f32.mxu0 0.0
    %2256 = vmatmul.mubr.f32.gmra.mxu0 %v2118
    %v2257 = vpop.f32.mrf.mxu0
    %v2258 = vadd.f32 0.0, %v2257
    %v2259 = vpop.f32.mrf.mxu0
    %2260 = vmatprep.mubr.f32.mxu0 0.0
    %2261 = vmatmul.mubr.f32.gmra.mxu0 %v2121
    %v2262 = vpop.f32.mrf.mxu0
    %v2263 = vadd.f32 0.0, %v2262
    %v2264 = vpop.f32.mrf.mxu0
    %2265 = vmatprep.mubr.f32.mxu0 0.0
    %2266 = vmatmul.mubr.f32.gmra.mxu0 %v2124
    %v2267 = vpop.f32.mrf.mxu0
    %v2268 = vadd.f32 0.0, %v2267
    %v2269 = vpop.f32.mrf.mxu0
    %2270 = vdwg.mxu0
    %v2272 = vsel %vm202, %v2055, 0
    %v2275 = vsel %vm202, %v2065, 0
    %2277 = vmatprep.subr.mxu0 0.0
    %2278 = vmatpush1.msra.mxu0 0.0
    %2279 = vmatprep.subr.mxu0 0.0
    %2280 = vmatpush1.msra.mxu0 0.0
    %2281 = vmatprep.subr.mxu0 0.0
    %2282 = vmatpush1.msra.mxu0 0.0
    %2283 = vmatprep.subr.mxu0 0.0
    %2284 = vmatpush1.msra.mxu0 0.0
    %2285 = vmatprep.subr.mxu0 0.0
    %2286 = vmatpush1.msra.mxu0 0.0
    %2287 = vmatprep.subr.mxu0 0.0
    %2288 = vmatpush1.msra.mxu0 0.0
    %2289 = vmatprep.subr.mxu0 0.0
    %2290 = vmatpush1.msra.mxu0 0.0
    %2291 = vmatprep.subr.mxu0 0.0
    %2292 = vmatpush1.msra.mxu0 0.0
    %2293 = vmatprep.subr.mxu0 0.0
    %2294 = vmatpush1.msra.mxu0 0.0
    %2295 = vmatprep.subr.mxu0 0.0
    %2296 = vmatpush1.msra.mxu0 0.0
    %2297 = vmatprep.subr.mxu0 0.0
    %2298 = vmatpush1.msra.mxu0 0.0
    %2299 = vmatprep.subr.mxu0 0.0
    %2300 = vmatpush1.msra.mxu0 0.0
    %2301 = vmatprep.subr.mxu0 0.0
    %2302 = vmatpush1.msra.mxu0 0.0
    %2303 = vmatprep.subr.mxu0 0.0
    %2304 = vmatpush1.msra.mxu0 0.0
    %2305 = vmatprep.subr.mxu0 0.0
    %2306 = vmatpush1.msra.mxu0 0.0
    %2307 = vmatprep.subr.mxu0 0.0
    %2308 = vmatpush1.msra.mxu0 %v2075
    %2309 = vmatprep.subr.mxu0 0.0
    %2310 = vmatpush2.msra.mxu0 0.0
    %2311 = vmatprep.subr.mxu0 0.0
    %2312 = vmatpush2.msra.mxu0 0.0
    %2313 = vmatprep.subr.mxu0 0.0
    %2314 = vmatpush2.msra.mxu0 0.0
    %2315 = vmatprep.subr.mxu0 0.0
    %2316 = vmatpush2.msra.mxu0 0.0
    %2317 = vmatprep.subr.mxu0 0.0
    %2318 = vmatpush2.msra.mxu0 0.0
    %2319 = vmatprep.subr.mxu0 0.0
    %2320 = vmatpush2.msra.mxu0 0.0
    %2321 = vmatprep.subr.mxu0 0.0
    %2322 = vmatpush2.msra.mxu0 0.0
    %2323 = vmatprep.subr.mxu0 0.0
    %2324 = vmatpush2.msra.mxu0 0.0
    %2325 = vmatprep.subr.mxu0 0.0
    %2326 = vmatpush2.msra.mxu0 0.0
    %2327 = vmatprep.subr.mxu0 0.0
    %2328 = vmatpush2.msra.mxu0 0.0
    %2329 = vmatprep.subr.mxu0 0.0
    %2330 = vmatpush2.msra.mxu0 0.0
    %2331 = vmatprep.subr.mxu0 0.0
    %2332 = vmatpush2.msra.mxu0 0.0
    %2333 = vmatprep.subr.mxu0 0.0
    %2334 = vmatpush2.msra.mxu0 0.0
    %2335 = vmatprep.subr.mxu0 0.0
    %2336 = vmatpush2.msra.mxu0 0.0
    %2337 = vmatprep.subr.mxu0 0.0
    %2338 = vmatpush2.msra.mxu0 0.0
    %2339 = vmatprep.subr.mxu0 0.0
    %2340 = vmatpush2.msra.mxu0 0.0
    %2341 = vmatprep.mubr.f32.mxu0 0.0
    %2342 = vmatmul.mubr.f32.gmra.mxu0 %v2272
    %v2343 = vpop.f32.mrf.mxu0
    %v2344 = vadd.f32 %v2193, %v2343
    %v2345 = vpop.f32.mrf.mxu0
    %2346 = vmatprep.mubr.f32.mxu0 0.0
    %2347 = vmatmul.mubr.f32.gmra.mxu0 %v2079
    %v2348 = vpop.f32.mrf.mxu0
    %v2349 = vadd.f32 %v2198, %v2348
    %v2350 = vpop.f32.mrf.mxu0
    %2351 = vmatprep.mubr.f32.mxu0 0.0
    %2352 = vmatmul.mubr.f32.gmra.mxu0 %v2082
    %v2353 = vpop.f32.mrf.mxu0
    %v2354 = vadd.f32 %v2203, %v2353
    %v2355 = vpop.f32.mrf.mxu0
    %2356 = vmatprep.mubr.f32.mxu0 0.0
    %2357 = vmatmul.mubr.f32.gmra.mxu0 %v2085
    %v2358 = vpop.f32.mrf.mxu0
    %v2359 = vadd.f32 %v2208, %v2358
    %v2360 = vpop.f32.mrf.mxu0
    %2361 = vmatprep.mubr.f32.mxu0 0.0
    %2362 = vmatmul.mubr.f32.gmra.mxu0 %v2088
    %v2363 = vpop.f32.mrf.mxu0
    %v2364 = vadd.f32 %v2213, %v2363
    %v2365 = vpop.f32.mrf.mxu0
    %2366 = vmatprep.mubr.f32.mxu0 0.0
    %2367 = vmatmul.mubr.f32.gmra.mxu0 %v2091
    %v2368 = vpop.f32.mrf.mxu0
    %v2369 = vadd.f32 %v2218, %v2368
    %v2370 = vpop.f32.mrf.mxu0
    %2371 = vmatprep.mubr.f32.mxu0 0.0
    %2372 = vmatmul.mubr.f32.gmra.mxu0 %v2094
    %v2373 = vpop.f32.mrf.mxu0
    %v2374 = vadd.f32 %v2223, %v2373
    %v2375 = vpop.f32.mrf.mxu0
    %2376 = vmatprep.mubr.f32.mxu0 0.0
    %2377 = vmatmul.mubr.f32.gmra.mxu0 %v2097
    %v2378 = vpop.f32.mrf.mxu0
    %v2379 = vadd.f32 %v2228, %v2378
    %v2380 = vpop.f32.mrf.mxu0
    %2381 = vmatprep.mubr.f32.mxu0 0.0
    %2382 = vmatmul.mubr.f32.gmra.mxu0 %v2275
    %v2383 = vpop.f32.mrf.mxu0
    %v2384 = vadd.f32 %v2233, %v2383
    %v2385 = vpop.f32.mrf.mxu0
    %2386 = vmatprep.mubr.f32.mxu0 0.0
    %2387 = vmatmul.mubr.f32.gmra.mxu0 %v2103
    %v2388 = vpop.f32.mrf.mxu0
    %v2389 = vadd.f32 %v2238, %v2388
    %v2390 = vpop.f32.mrf.mxu0
    %2391 = vmatprep.mubr.f32.mxu0 0.0
    %2392 = vmatmul.mubr.f32.gmra.mxu0 %v2106
    %v2393 = vpop.f32.mrf.mxu0
    %v2394 = vadd.f32 %v2243, %v2393
    %v2395 = vpop.f32.mrf.mxu0
    %2396 = vmatprep.mubr.f32.mxu0 0.0
    %2397 = vmatmul.mubr.f32.gmra.mxu0 %v2109
    %v2398 = vpop.f32.mrf.mxu0
    %v2399 = vadd.f32 %v2248, %v2398
    %v2400 = vpop.f32.mrf.mxu0
    %2401 = vmatprep.mubr.f32.mxu0 0.0
    %2402 = vmatmul.mubr.f32.gmra.mxu0 %v2112
    %v2403 = vpop.f32.mrf.mxu0
    %v2404 = vadd.f32 %v2253, %v2403
    %v2405 = vpop.f32.mrf.mxu0
    %2406 = vmatprep.mubr.f32.mxu0 0.0
    %2407 = vmatmul.mubr.f32.gmra.mxu0 %v2115
    %v2408 = vpop.f32.mrf.mxu0
    %v2409 = vadd.f32 %v2258, %v2408
    %v2410 = vpop.f32.mrf.mxu0
    %2411 = vmatprep.mubr.f32.mxu0 0.0
    %2412 = vmatmul.mubr.f32.gmra.mxu0 %v2118
    %v2413 = vpop.f32.mrf.mxu0
    %v2414 = vadd.f32 %v2263, %v2413
    %v2415 = vpop.f32.mrf.mxu0
    %2416 = vmatprep.mubr.f32.mxu0 0.0
    %2417 = vmatmul.mubr.f32.gmra.mxu0 %v2121
    %v2418 = vpop.f32.mrf.mxu0
    %v2419 = vadd.f32 %v2268, %v2418
    %v2420 = vpop.f32.mrf.mxu0
    %2421 = vdwg.mxu0
    %s2422 = scalar_lea.vmem %s4, 48
    %v2423 = vld [vmem:[%s2422] sm:$0xff]
    %v2425 = vsel %vm202, %v2064, 0
    %v2428 = vsel %vm202, %v2074, 0
    %2430 = vmatprep.subr.mxu0 0.0
    %2431 = vmatpush1.msra.mxu0 0.0
    %2432 = vmatprep.subr.mxu0 0.0
    %2433 = vmatpush1.msra.mxu0 0.0
    %2434 = vmatprep.subr.mxu0 0.0
    %2435 = vmatpush1.msra.mxu0 0.0
    %2436 = vmatprep.subr.mxu0 0.0
    %2437 = vmatpush1.msra.mxu0 0.0
    %2438 = vmatprep.subr.mxu0 0.0
    %2439 = vmatpush1.msra.mxu0 0.0
    %2440 = vmatprep.subr.mxu0 0.0
    %2441 = vmatpush1.msra.mxu0 0.0
    %2442 = vmatprep.subr.mxu0 0.0
    %2443 = vmatpush1.msra.mxu0 0.0
    %2444 = vmatprep.subr.mxu0 0.0
    %2445 = vmatpush1.msra.mxu0 0.0
    %2446 = vmatprep.subr.mxu0 0.0
    %2447 = vmatpush1.msra.mxu0 0.0
    %2448 = vmatprep.subr.mxu0 0.0
    %2449 = vmatpush1.msra.mxu0 0.0
    %2450 = vmatprep.subr.mxu0 0.0
    %2451 = vmatpush1.msra.mxu0 0.0
    %2452 = vmatprep.subr.mxu0 0.0
    %2453 = vmatpush1.msra.mxu0 0.0
    %2454 = vmatprep.subr.mxu0 0.0
    %2455 = vmatpush1.msra.mxu0 0.0
    %2456 = vmatprep.subr.mxu0 0.0
    %2457 = vmatpush1.msra.mxu0 0.0
    %2458 = vmatprep.subr.mxu0 0.0
    %2459 = vmatpush1.msra.mxu0 0.0
    %2460 = vmatprep.subr.mxu0 0.0
    %2461 = vmatpush1.msra.mxu0 %v2423
    %2462 = vmatprep.subr.mxu0 0.0
    %2463 = vmatpush2.msra.mxu0 0.0
    %2464 = vmatprep.subr.mxu0 0.0
    %2465 = vmatpush2.msra.mxu0 0.0
    %2466 = vmatprep.subr.mxu0 0.0
    %2467 = vmatpush2.msra.mxu0 0.0
    %2468 = vmatprep.subr.mxu0 0.0
    %2469 = vmatpush2.msra.mxu0 0.0
    %2470 = vmatprep.subr.mxu0 0.0
    %2471 = vmatpush2.msra.mxu0 0.0
    %2472 = vmatprep.subr.mxu0 0.0
    %2473 = vmatpush2.msra.mxu0 0.0
    %2474 = vmatprep.subr.mxu0 0.0
    %2475 = vmatpush2.msra.mxu0 0.0
    %2476 = vmatprep.subr.mxu0 0.0
    %2477 = vmatpush2.msra.mxu0 0.0
    %2478 = vmatprep.subr.mxu0 0.0
    %2479 = vmatpush2.msra.mxu0 0.0
    %2480 = vmatprep.subr.mxu0 0.0
    %2481 = vmatpush2.msra.mxu0 0.0
    %2482 = vmatprep.subr.mxu0 0.0
    %2483 = vmatpush2.msra.mxu0 0.0
    %2484 = vmatprep.subr.mxu0 0.0
    %2485 = vmatpush2.msra.mxu0 0.0
    %2486 = vmatprep.subr.mxu0 0.0
    %2487 = vmatpush2.msra.mxu0 0.0
    %2488 = vmatprep.subr.mxu0 0.0
    %2489 = vmatpush2.msra.mxu0 0.0
    %2490 = vmatprep.subr.mxu0 0.0
    %2491 = vmatpush2.msra.mxu0 0.0
    %2492 = vmatprep.subr.mxu0 0.0
    %2493 = vmatpush2.msra.mxu0 0.0
    %2494 = vmatprep.mubr.f32.mxu0 0.0
    %2495 = vmatmul.mubr.f32.gmra.mxu0 %v2082
    %v2496 = vpop.f32.mrf.mxu0
    %v2497 = vadd.f32 0.0, %v2496
    %v2498 = vpop.f32.mrf.mxu0
    %2499 = vmatprep.mubr.f32.mxu0 0.0
    %2500 = vmatmul.mubr.f32.gmra.mxu0 %v2085
    %v2501 = vpop.f32.mrf.mxu0
    %v2502 = vadd.f32 0.0, %v2501
    %v2503 = vpop.f32.mrf.mxu0
    %2504 = vmatprep.mubr.f32.mxu0 0.0
    %2505 = vmatmul.mubr.f32.gmra.mxu0 %v2088
    %v2506 = vpop.f32.mrf.mxu0
    %v2507 = vadd.f32 0.0, %v2506
    %v2508 = vpop.f32.mrf.mxu0
    %2509 = vmatprep.mubr.f32.mxu0 0.0
    %2510 = vmatmul.mubr.f32.gmra.mxu0 %v2091
    %v2511 = vpop.f32.mrf.mxu0
    %v2512 = vadd.f32 0.0, %v2511
    %v2513 = vpop.f32.mrf.mxu0
    %2514 = vmatprep.mubr.f32.mxu0 0.0
    %2515 = vmatmul.mubr.f32.gmra.mxu0 %v2094
    %v2516 = vpop.f32.mrf.mxu0
    %v2517 = vadd.f32 0.0, %v2516
    %v2518 = vpop.f32.mrf.mxu0
    %2519 = vmatprep.mubr.f32.mxu0 0.0
    %2520 = vmatmul.mubr.f32.gmra.mxu0 %v2097
    %v2521 = vpop.f32.mrf.mxu0
    %v2522 = vadd.f32 0.0, %v2521
    %v2523 = vpop.f32.mrf.mxu0
    %2524 = vmatprep.mubr.f32.mxu0 0.0
    %2525 = vmatmul.mubr.f32.gmra.mxu0 %v2100
    %v2526 = vpop.f32.mrf.mxu0
    %v2527 = vadd.f32 0.0, %v2526
    %v2528 = vpop.f32.mrf.mxu0
    %2529 = vmatprep.mubr.f32.mxu0 0.0
    %2530 = vmatmul.mubr.f32.gmra.mxu0 %v2425
    %v2531 = vpop.f32.mrf.mxu0
    %v2532 = vadd.f32 0.0, %v2531
    %v2533 = vpop.f32.mrf.mxu0
    %2534 = vmatprep.mubr.f32.mxu0 0.0
    %2535 = vmatmul.mubr.f32.gmra.mxu0 %v2106
    %v2536 = vpop.f32.mrf.mxu0
    %v2537 = vadd.f32 0.0, %v2536
    %v2538 = vpop.f32.mrf.mxu0
    %2539 = vmatprep.mubr.f32.mxu0 0.0
    %2540 = vmatmul.mubr.f32.gmra.mxu0 %v2109
    %v2541 = vpop.f32.mrf.mxu0
    %v2542 = vadd.f32 0.0, %v2541
    %v2543 = vpop.f32.mrf.mxu0
    %2544 = vmatprep.mubr.f32.mxu0 0.0
    %2545 = vmatmul.mubr.f32.gmra.mxu0 %v2112
    %v2546 = vpop.f32.mrf.mxu0
    %v2547 = vadd.f32 0.0, %v2546
    %v2548 = vpop.f32.mrf.mxu0
    %2549 = vmatprep.mubr.f32.mxu0 0.0
    %2550 = vmatmul.mubr.f32.gmra.mxu0 %v2115
    %v2551 = vpop.f32.mrf.mxu0
    %v2552 = vadd.f32 0.0, %v2551
    %v2553 = vpop.f32.mrf.mxu0
    %2554 = vmatprep.mubr.f32.mxu0 0.0
    %2555 = vmatmul.mubr.f32.gmra.mxu0 %v2118
    %v2556 = vpop.f32.mrf.mxu0
    %v2557 = vadd.f32 0.0, %v2556
    %v2558 = vpop.f32.mrf.mxu0
    %2559 = vmatprep.mubr.f32.mxu0 0.0
    %2560 = vmatmul.mubr.f32.gmra.mxu0 %v2121
    %v2561 = vpop.f32.mrf.mxu0
    %v2562 = vadd.f32 0.0, %v2561
    %v2563 = vpop.f32.mrf.mxu0
    %2564 = vmatprep.mubr.f32.mxu0 0.0
    %2565 = vmatmul.mubr.f32.gmra.mxu0 %v2124
    %v2566 = vpop.f32.mrf.mxu0
    %v2567 = vadd.f32 0.0, %v2566
    %v2568 = vpop.f32.mrf.mxu0
    %2569 = vmatprep.mubr.f32.mxu0 0.0
    %2570 = vmatmul.mubr.f32.gmra.mxu0 %v2428
    %v2571 = vpop.f32.mrf.mxu0
    %v2572 = vadd.f32 0.0, %v2571
    %v2573 = vpop.f32.mrf.mxu0
    %2574 = vdwg.mxu0
    %v2575 = vadd.f32 %v2344, %v2497
    %v2576 = vadd.f32 %v2349, %v2502
    %v2577 = vadd.f32 %v2354, %v2507
    %v2578 = vadd.f32 %v2359, %v2512
    %v2579 = vadd.f32 %v2364, %v2517
    %v2580 = vadd.f32 %v2369, %v2522
    %v2581 = vadd.f32 %v2374, %v2527
    %v2582 = vadd.f32 %v2379, %v2532
    %v2583 = vadd.f32 %v2384, %v2537
    %v2584 = vadd.f32 %v2389, %v2542
    %v2585 = vadd.f32 %v2394, %v2547
    %v2586 = vadd.f32 %v2399, %v2552
    %v2587 = vadd.f32 %v2404, %v2557
    %v2588 = vadd.f32 %v2409, %v2562
    %v2589 = vadd.f32 %v2414, %v2567
    %v2590 = vadd.f32 %v2419, %v2572
    %v2591 = vld [vmem:[#allocation2 + $0x1] sm:$0xff]
    %v2592 = vld [vmem:[#allocation2 + $0x11] sm:$0xff]
    %v2593 = vld [vmem:[#allocation2 + $0x21] sm:$0xff]
    %v2594 = vld [vmem:[#allocation2 + $0x31] sm:$0xff]
    %v2595 = vld [vmem:[#allocation2 + $0x41] sm:$0xff]
    %v2596 = vld [vmem:[#allocation2 + $0x51] sm:$0xff]
    %v2597 = vld [vmem:[#allocation2 + $0x61] sm:$0xff]
    %v2598 = vld [vmem:[#allocation2 + $0x71] sm:$0xff]
    %v2599 = vld [vmem:[#allocation2 + $0x81] sm:$0xff]
    %v2600 = vld [vmem:[#allocation2 + $0x91] sm:$0xff]
    %v2601 = vld [vmem:[#allocation2 + $0xa1] sm:$0xff]
    %v2602 = vld [vmem:[#allocation2 + $0xb1] sm:$0xff]
    %v2603 = vld [vmem:[#allocation2 + $0xc1] sm:$0xff]
    %v2604 = vld [vmem:[#allocation2 + $0xd1] sm:$0xff]
    %v2605 = vld [vmem:[#allocation2 + $0xe1] sm:$0xff]
    %v2606 = vld [vmem:[#allocation2 + $0xf1] sm:$0xff]
    %v2607 = vld [vmem:[#allocation2 + $0x101] sm:$0xff]
    %v2608 = vld [vmem:[#allocation2 + $0x111] sm:$0xff]
    %v2609 = vld [vmem:[#allocation2 + $0x121] sm:$0xff]
    %v2610 = vld [vmem:[#allocation2 + $0x131] sm:$0xff]
    %s2611 = scalar_lea.vmem %s4, 8
    %v2612 = vld [vmem:[%s2611] sm:$0xff]
    %v2614 = vsel %vm202, %v2591, 0
    %v2617 = vsel %vm202, %v2592, 0
    %v2620 = vsel %vm202, %v2593, 0
    %v2623 = vsel %vm202, %v2594, 0
    %v2626 = vsel %vm202, %v2595, 0
    %v2629 = vsel %vm202, %v2596, 0
    %v2632 = vsel %vm202, %v2597, 0
    %v2635 = vsel %vm202, %v2598, 0
    %v2638 = vsel %vm202, %v2601, 0
    %v2641 = vsel %vm202, %v2602, 0
    %v2644 = vsel %vm202, %v2603, 0
    %v2647 = vsel %vm202, %v2604, 0
    %v2650 = vsel %vm202, %v2605, 0
    %v2653 = vsel %vm202, %v2606, 0
    %v2656 = vsel %vm202, %v2607, 0
    %v2659 = vsel %vm202, %v2608, 0
    %2661 = vmatprep.subr.mxu0 0.0
    %2662 = vmatpush1.msra.mxu0 0.0
    %2663 = vmatprep.subr.mxu0 0.0
    %2664 = vmatpush1.msra.mxu0 0.0
    %2665 = vmatprep.subr.mxu0 0.0
    %2666 = vmatpush1.msra.mxu0 0.0
    %2667 = vmatprep.subr.mxu0 0.0
    %2668 = vmatpush1.msra.mxu0 0.0
    %2669 = vmatprep.subr.mxu0 0.0
    %2670 = vmatpush1.msra.mxu0 0.0
    %2671 = vmatprep.subr.mxu0 0.0
    %2672 = vmatpush1.msra.mxu0 0.0
    %2673 = vmatprep.subr.mxu0 0.0
    %2674 = vmatpush1.msra.mxu0 0.0
    %2675 = vmatprep.subr.mxu0 0.0
    %2676 = vmatpush1.msra.mxu0 0.0
    %2677 = vmatprep.subr.mxu0 0.0
    %2678 = vmatpush1.msra.mxu0 0.0
    %2679 = vmatprep.subr.mxu0 0.0
    %2680 = vmatpush1.msra.mxu0 0.0
    %2681 = vmatprep.subr.mxu0 0.0
    %2682 = vmatpush1.msra.mxu0 0.0
    %2683 = vmatprep.subr.mxu0 0.0
    %2684 = vmatpush1.msra.mxu0 0.0
    %2685 = vmatprep.subr.mxu0 0.0
    %2686 = vmatpush1.msra.mxu0 0.0
    %2687 = vmatprep.subr.mxu0 0.0
    %2688 = vmatpush1.msra.mxu0 0.0
    %2689 = vmatprep.subr.mxu0 0.0
    %2690 = vmatpush1.msra.mxu0 0.0
    %2691 = vmatprep.subr.mxu0 0.0
    %2692 = vmatpush1.msra.mxu0 %v2612
    %2693 = vmatprep.subr.mxu0 0.0
    %2694 = vmatpush2.msra.mxu0 0.0
    %2695 = vmatprep.subr.mxu0 0.0
    %2696 = vmatpush2.msra.mxu0 0.0
    %2697 = vmatprep.subr.mxu0 0.0
    %2698 = vmatpush2.msra.mxu0 0.0
    %2699 = vmatprep.subr.mxu0 0.0
    %2700 = vmatpush2.msra.mxu0 0.0
    %2701 = vmatprep.subr.mxu0 0.0
    %2702 = vmatpush2.msra.mxu0 0.0
    %2703 = vmatprep.subr.mxu0 0.0
    %2704 = vmatpush2.msra.mxu0 0.0
    %2705 = vmatprep.subr.mxu0 0.0
    %2706 = vmatpush2.msra.mxu0 0.0
    %2707 = vmatprep.subr.mxu0 0.0
    %2708 = vmatpush2.msra.mxu0 0.0
    %2709 = vmatprep.subr.mxu0 0.0
    %2710 = vmatpush2.msra.mxu0 0.0
    %2711 = vmatprep.subr.mxu0 0.0
    %2712 = vmatpush2.msra.mxu0 0.0
    %2713 = vmatprep.subr.mxu0 0.0
    %2714 = vmatpush2.msra.mxu0 0.0
    %2715 = vmatprep.subr.mxu0 0.0
    %2716 = vmatpush2.msra.mxu0 0.0
    %2717 = vmatprep.subr.mxu0 0.0
    %2718 = vmatpush2.msra.mxu0 0.0
    %2719 = vmatprep.subr.mxu0 0.0
    %2720 = vmatpush2.msra.mxu0 0.0
    %2721 = vmatprep.subr.mxu0 0.0
    %2722 = vmatpush2.msra.mxu0 0.0
    %2723 = vmatprep.subr.mxu0 0.0
    %2724 = vmatpush2.msra.mxu0 0.0
    %2725 = vmatprep.mubr.f32.mxu0 0.0
    %2726 = vmatmul.mubr.f32.gmra.mxu0 %v2614
    %v2727 = vpop.f32.mrf.mxu0
    %v2728 = vadd.f32 0.0, %v2727
    %v2729 = vpop.f32.mrf.mxu0
    %2730 = vmatprep.mubr.f32.mxu0 0.0
    %2731 = vmatmul.mubr.f32.gmra.mxu0 %v2617
    %v2732 = vpop.f32.mrf.mxu0
    %v2733 = vadd.f32 0.0, %v2732
    %v2734 = vpop.f32.mrf.mxu0
    %2735 = vmatprep.mubr.f32.mxu0 0.0
    %2736 = vmatmul.mubr.f32.gmra.mxu0 %v2620
    %v2737 = vpop.f32.mrf.mxu0
    %v2738 = vadd.f32 0.0, %v2737
    %v2739 = vpop.f32.mrf.mxu0
    %2740 = vmatprep.mubr.f32.mxu0 0.0
    %2741 = vmatmul.mubr.f32.gmra.mxu0 %v2623
    %v2742 = vpop.f32.mrf.mxu0
    %v2743 = vadd.f32 0.0, %v2742
    %v2744 = vpop.f32.mrf.mxu0
    %2745 = vmatprep.mubr.f32.mxu0 0.0
    %2746 = vmatmul.mubr.f32.gmra.mxu0 %v2626
    %v2747 = vpop.f32.mrf.mxu0
    %v2748 = vadd.f32 0.0, %v2747
    %v2749 = vpop.f32.mrf.mxu0
    %2750 = vmatprep.mubr.f32.mxu0 0.0
    %2751 = vmatmul.mubr.f32.gmra.mxu0 %v2629
    %v2752 = vpop.f32.mrf.mxu0
    %v2753 = vadd.f32 0.0, %v2752
    %v2754 = vpop.f32.mrf.mxu0
    %2755 = vmatprep.mubr.f32.mxu0 0.0
    %2756 = vmatmul.mubr.f32.gmra.mxu0 %v2632
    %v2757 = vpop.f32.mrf.mxu0
    %v2758 = vadd.f32 0.0, %v2757
    %v2759 = vpop.f32.mrf.mxu0
    %2760 = vmatprep.mubr.f32.mxu0 0.0
    %2761 = vmatmul.mubr.f32.gmra.mxu0 %v2635
    %v2762 = vpop.f32.mrf.mxu0
    %v2763 = vadd.f32 0.0, %v2762
    %v2764 = vpop.f32.mrf.mxu0
    %2765 = vmatprep.mubr.f32.mxu0 0.0
    %2766 = vmatmul.mubr.f32.gmra.mxu0 %v2638
    %v2767 = vpop.f32.mrf.mxu0
    %v2768 = vadd.f32 0.0, %v2767
    %v2769 = vpop.f32.mrf.mxu0
    %2770 = vmatprep.mubr.f32.mxu0 0.0
    %2771 = vmatmul.mubr.f32.gmra.mxu0 %v2641
    %v2772 = vpop.f32.mrf.mxu0
    %v2773 = vadd.f32 0.0, %v2772
    %v2774 = vpop.f32.mrf.mxu0
    %2775 = vmatprep.mubr.f32.mxu0 0.0
    %2776 = vmatmul.mubr.f32.gmra.mxu0 %v2644
    %v2777 = vpop.f32.mrf.mxu0
    %v2778 = vadd.f32 0.0, %v2777
    %v2779 = vpop.f32.mrf.mxu0
    %2780 = vmatprep.mubr.f32.mxu0 0.0
    %2781 = vmatmul.mubr.f32.gmra.mxu0 %v2647
    %v2782 = vpop.f32.mrf.mxu0
    %v2783 = vadd.f32 0.0, %v2782
    %v2784 = vpop.f32.mrf.mxu0
    %2785 = vmatprep.mubr.f32.mxu0 0.0
    %2786 = vmatmul.mubr.f32.gmra.mxu0 %v2650
    %v2787 = vpop.f32.mrf.mxu0
    %v2788 = vadd.f32 0.0, %v2787
    %v2789 = vpop.f32.mrf.mxu0
    %2790 = vmatprep.mubr.f32.mxu0 0.0
    %2791 = vmatmul.mubr.f32.gmra.mxu0 %v2653
    %v2792 = vpop.f32.mrf.mxu0
    %v2793 = vadd.f32 0.0, %v2792
    %v2794 = vpop.f32.mrf.mxu0
    %2795 = vmatprep.mubr.f32.mxu0 0.0
    %2796 = vmatmul.mubr.f32.gmra.mxu0 %v2656
    %v2797 = vpop.f32.mrf.mxu0
    %v2798 = vadd.f32 0.0, %v2797
    %v2799 = vpop.f32.mrf.mxu0
    %2800 = vmatprep.mubr.f32.mxu0 0.0
    %2801 = vmatmul.mubr.f32.gmra.mxu0 %v2659
    %v2802 = vpop.f32.mrf.mxu0
    %v2803 = vadd.f32 0.0, %v2802
    %v2804 = vpop.f32.mrf.mxu0
    %2805 = vdwg.mxu0
    %v2806 = vadd.f32 %v2575, %v2728
    %v2807 = vadd.f32 %v2576, %v2733
    %v2808 = vadd.f32 %v2577, %v2738
    %v2809 = vadd.f32 %v2578, %v2743
    %v2810 = vadd.f32 %v2579, %v2748
    %v2811 = vadd.f32 %v2580, %v2753
    %v2812 = vadd.f32 %v2581, %v2758
    %v2813 = vadd.f32 %v2582, %v2763
    %v2814 = vadd.f32 %v2583, %v2768
    %v2815 = vadd.f32 %v2584, %v2773
    %v2816 = vadd.f32 %v2585, %v2778
    %v2817 = vadd.f32 %v2586, %v2783
    %v2818 = vadd.f32 %v2587, %v2788
    %v2819 = vadd.f32 %v2588, %v2793
    %v2820 = vadd.f32 %v2589, %v2798
    %v2821 = vadd.f32 %v2590, %v2803
    %s2822 = scalar_lea.vmem %s4, 32
    %v2823 = vld [vmem:[%s2822] sm:$0xff]
    %v2825 = vsel %vm202, %v2599, 0
    %v2828 = vsel %vm202, %v2609, 0
    %2830 = vmatprep.subr.mxu0 0.0
    %2831 = vmatpush1.msra.mxu0 0.0
    %2832 = vmatprep.subr.mxu0 0.0
    %2833 = vmatpush1.msra.mxu0 0.0
    %2834 = vmatprep.subr.mxu0 0.0
    %2835 = vmatpush1.msra.mxu0 0.0
    %2836 = vmatprep.subr.mxu0 0.0
    %2837 = vmatpush1.msra.mxu0 0.0
    %2838 = vmatprep.subr.mxu0 0.0
    %2839 = vmatpush1.msra.mxu0 0.0
    %2840 = vmatprep.subr.mxu0 0.0
    %2841 = vmatpush1.msra.mxu0 0.0
    %2842 = vmatprep.subr.mxu0 0.0
    %2843 = vmatpush1.msra.mxu0 0.0
    %2844 = vmatprep.subr.mxu0 0.0
    %2845 = vmatpush1.msra.mxu0 0.0
    %2846 = vmatprep.subr.mxu0 0.0
    %2847 = vmatpush1.msra.mxu0 0.0
    %2848 = vmatprep.subr.mxu0 0.0
    %2849 = vmatpush1.msra.mxu0 0.0
    %2850 = vmatprep.subr.mxu0 0.0
    %2851 = vmatpush1.msra.mxu0 0.0
    %2852 = vmatprep.subr.mxu0 0.0
    %2853 = vmatpush1.msra.mxu0 0.0
    %2854 = vmatprep.subr.mxu0 0.0
    %2855 = vmatpush1.msra.mxu0 0.0
    %2856 = vmatprep.subr.mxu0 0.0
    %2857 = vmatpush1.msra.mxu0 0.0
    %2858 = vmatprep.subr.mxu0 0.0
    %2859 = vmatpush1.msra.mxu0 0.0
    %2860 = vmatprep.subr.mxu0 0.0
    %2861 = vmatpush1.msra.mxu0 %v2823
    %2862 = vmatprep.subr.mxu0 0.0
    %2863 = vmatpush2.msra.mxu0 0.0
    %2864 = vmatprep.subr.mxu0 0.0
    %2865 = vmatpush2.msra.mxu0 0.0
    %2866 = vmatprep.subr.mxu0 0.0
    %2867 = vmatpush2.msra.mxu0 0.0
    %2868 = vmatprep.subr.mxu0 0.0
    %2869 = vmatpush2.msra.mxu0 0.0
    %2870 = vmatprep.subr.mxu0 0.0
    %2871 = vmatpush2.msra.mxu0 0.0
    %2872 = vmatprep.subr.mxu0 0.0
    %2873 = vmatpush2.msra.mxu0 0.0
    %2874 = vmatprep.subr.mxu0 0.0
    %2875 = vmatpush2.msra.mxu0 0.0
    %2876 = vmatprep.subr.mxu0 0.0
    %2877 = vmatpush2.msra.mxu0 0.0
    %2878 = vmatprep.subr.mxu0 0.0
    %2879 = vmatpush2.msra.mxu0 0.0
    %2880 = vmatprep.subr.mxu0 0.0
    %2881 = vmatpush2.msra.mxu0 0.0
    %2882 = vmatprep.subr.mxu0 0.0
    %2883 = vmatpush2.msra.mxu0 0.0
    %2884 = vmatprep.subr.mxu0 0.0
    %2885 = vmatpush2.msra.mxu0 0.0
    %2886 = vmatprep.subr.mxu0 0.0
    %2887 = vmatpush2.msra.mxu0 0.0
    %2888 = vmatprep.subr.mxu0 0.0
    %2889 = vmatpush2.msra.mxu0 0.0
    %2890 = vmatprep.subr.mxu0 0.0
    %2891 = vmatpush2.msra.mxu0 0.0
    %2892 = vmatprep.subr.mxu0 0.0
    %2893 = vmatpush2.msra.mxu0 0.0
    %2894 = vmatprep.mubr.f32.mxu0 0.0
    %2895 = vmatmul.mubr.f32.gmra.mxu0 %v2617
    %v2896 = vpop.f32.mrf.mxu0
    %v2897 = vadd.f32 0.0, %v2896
    %v2898 = vpop.f32.mrf.mxu0
    %2899 = vmatprep.mubr.f32.mxu0 0.0
    %2900 = vmatmul.mubr.f32.gmra.mxu0 %v2620
    %v2901 = vpop.f32.mrf.mxu0
    %v2902 = vadd.f32 0.0, %v2901
    %v2903 = vpop.f32.mrf.mxu0
    %2904 = vmatprep.mubr.f32.mxu0 0.0
    %2905 = vmatmul.mubr.f32.gmra.mxu0 %v2623
    %v2906 = vpop.f32.mrf.mxu0
    %v2907 = vadd.f32 0.0, %v2906
    %v2908 = vpop.f32.mrf.mxu0
    %2909 = vmatprep.mubr.f32.mxu0 0.0
    %2910 = vmatmul.mubr.f32.gmra.mxu0 %v2626
    %v2911 = vpop.f32.mrf.mxu0
    %v2912 = vadd.f32 0.0, %v2911
    %v2913 = vpop.f32.mrf.mxu0
    %2914 = vmatprep.mubr.f32.mxu0 0.0
    %2915 = vmatmul.mubr.f32.gmra.mxu0 %v2629
    %v2916 = vpop.f32.mrf.mxu0
    %v2917 = vadd.f32 0.0, %v2916
    %v2918 = vpop.f32.mrf.mxu0
    %2919 = vmatprep.mubr.f32.mxu0 0.0
    %2920 = vmatmul.mubr.f32.gmra.mxu0 %v2632
    %v2921 = vpop.f32.mrf.mxu0
    %v2922 = vadd.f32 0.0, %v2921
    %v2923 = vpop.f32.mrf.mxu0
    %2924 = vmatprep.mubr.f32.mxu0 0.0
    %2925 = vmatmul.mubr.f32.gmra.mxu0 %v2635
    %v2926 = vpop.f32.mrf.mxu0
    %v2927 = vadd.f32 0.0, %v2926
    %v2928 = vpop.f32.mrf.mxu0
    %2929 = vmatprep.mubr.f32.mxu0 0.0
    %2930 = vmatmul.mubr.f32.gmra.mxu0 %v2825
    %v2931 = vpop.f32.mrf.mxu0
    %v2932 = vadd.f32 0.0, %v2931
    %v2933 = vpop.f32.mrf.mxu0
    %2934 = vmatprep.mubr.f32.mxu0 0.0
    %2935 = vmatmul.mubr.f32.gmra.mxu0 %v2641
    %v2936 = vpop.f32.mrf.mxu0
    %v2937 = vadd.f32 0.0, %v2936
    %v2938 = vpop.f32.mrf.mxu0
    %2939 = vmatprep.mubr.f32.mxu0 0.0
    %2940 = vmatmul.mubr.f32.gmra.mxu0 %v2644
    %v2941 = vpop.f32.mrf.mxu0
    %v2942 = vadd.f32 0.0, %v2941
    %v2943 = vpop.f32.mrf.mxu0
    %2944 = vmatprep.mubr.f32.mxu0 0.0
    %2945 = vmatmul.mubr.f32.gmra.mxu0 %v2647
    %v2946 = vpop.f32.mrf.mxu0
    %v2947 = vadd.f32 0.0, %v2946
    %v2948 = vpop.f32.mrf.mxu0
    %2949 = vmatprep.mubr.f32.mxu0 0.0
    %2950 = vmatmul.mubr.f32.gmra.mxu0 %v2650
    %v2951 = vpop.f32.mrf.mxu0
    %v2952 = vadd.f32 0.0, %v2951
    %v2953 = vpop.f32.mrf.mxu0
    %2954 = vmatprep.mubr.f32.mxu0 0.0
    %2955 = vmatmul.mubr.f32.gmra.mxu0 %v2653
    %v2956 = vpop.f32.mrf.mxu0
    %v2957 = vadd.f32 0.0, %v2956
    %v2958 = vpop.f32.mrf.mxu0
    %2959 = vmatprep.mubr.f32.mxu0 0.0
    %2960 = vmatmul.mubr.f32.gmra.mxu0 %v2656
    %v2961 = vpop.f32.mrf.mxu0
    %v2962 = vadd.f32 0.0, %v2961
    %v2963 = vpop.f32.mrf.mxu0
    %2964 = vmatprep.mubr.f32.mxu0 0.0
    %2965 = vmatmul.mubr.f32.gmra.mxu0 %v2659
    %v2966 = vpop.f32.mrf.mxu0
    %v2967 = vadd.f32 0.0, %v2966
    %v2968 = vpop.f32.mrf.mxu0
    %2969 = vmatprep.mubr.f32.mxu0 0.0
    %2970 = vmatmul.mubr.f32.gmra.mxu0 %v2828
    %v2971 = vpop.f32.mrf.mxu0
    %v2972 = vadd.f32 0.0, %v2971
    %v2973 = vpop.f32.mrf.mxu0
    %2974 = vdwg.mxu0
    %v2975 = vadd.f32 %v2806, %v2897
    %v2976 = vadd.f32 %v2807, %v2902
    %v2977 = vadd.f32 %v2808, %v2907
    %v2978 = vadd.f32 %v2809, %v2912
    %v2979 = vadd.f32 %v2810, %v2917
    %v2980 = vadd.f32 %v2811, %v2922
    %v2981 = vadd.f32 %v2812, %v2927
    %v2982 = vadd.f32 %v2813, %v2932
    %v2983 = vadd.f32 %v2814, %v2937
    %v2984 = vadd.f32 %v2815, %v2942
    %v2985 = vadd.f32 %v2816, %v2947
    %v2986 = vadd.f32 %v2817, %v2952
    %v2987 = vadd.f32 %v2818, %v2957
    %v2988 = vadd.f32 %v2819, %v2962
    %v2989 = vadd.f32 %v2820, %v2967
    %v2990 = vadd.f32 %v2821, %v2972
    %s2991 = scalar_lea.vmem %s4, 56
    %v2992 = vld [vmem:[%s2991] sm:$0xff]
    %v2994 = vsel %vm202, %v2600, 0
    %v2997 = vsel %vm202, %v2610, 0
    %2999 = vmatprep.subr.mxu0 0.0
    %3000 = vmatpush1.msra.mxu0 0.0
    %3001 = vmatprep.subr.mxu0 0.0
    %3002 = vmatpush1.msra.mxu0 0.0
    %3003 = vmatprep.subr.mxu0 0.0
    %3004 = vmatpush1.msra.mxu0 0.0
    %3005 = vmatprep.subr.mxu0 0.0
    %3006 = vmatpush1.msra.mxu0 0.0
    %3007 = vmatprep.subr.mxu0 0.0
    %3008 = vmatpush1.msra.mxu0 0.0
    %3009 = vmatprep.subr.mxu0 0.0
    %3010 = vmatpush1.msra.mxu0 0.0
    %3011 = vmatprep.subr.mxu0 0.0
    %3012 = vmatpush1.msra.mxu0 0.0
    %3013 = vmatprep.subr.mxu0 0.0
    %3014 = vmatpush1.msra.mxu0 0.0
    %3015 = vmatprep.subr.mxu0 0.0
    %3016 = vmatpush1.msra.mxu0 0.0
    %3017 = vmatprep.subr.mxu0 0.0
    %3018 = vmatpush1.msra.mxu0 0.0
    %3019 = vmatprep.subr.mxu0 0.0
    %3020 = vmatpush1.msra.mxu0 0.0
    %3021 = vmatprep.subr.mxu0 0.0
    %3022 = vmatpush1.msra.mxu0 0.0
    %3023 = vmatprep.subr.mxu0 0.0
    %3024 = vmatpush1.msra.mxu0 0.0
    %3025 = vmatprep.subr.mxu0 0.0
    %3026 = vmatpush1.msra.mxu0 0.0
    %3027 = vmatprep.subr.mxu0 0.0
    %3028 = vmatpush1.msra.mxu0 0.0
    %3029 = vmatprep.subr.mxu0 0.0
    %3030 = vmatpush1.msra.mxu0 %v2992
    %3031 = vmatprep.subr.mxu0 0.0
    %3032 = vmatpush2.msra.mxu0 0.0
    %3033 = vmatprep.subr.mxu0 0.0
    %3034 = vmatpush2.msra.mxu0 0.0
    %3035 = vmatprep.subr.mxu0 0.0
    %3036 = vmatpush2.msra.mxu0 0.0
    %3037 = vmatprep.subr.mxu0 0.0
    %3038 = vmatpush2.msra.mxu0 0.0
    %3039 = vmatprep.subr.mxu0 0.0
    %3040 = vmatpush2.msra.mxu0 0.0
    %3041 = vmatprep.subr.mxu0 0.0
    %3042 = vmatpush2.msra.mxu0 0.0
    %3043 = vmatprep.subr.mxu0 0.0
    %3044 = vmatpush2.msra.mxu0 0.0
    %3045 = vmatprep.subr.mxu0 0.0
    %3046 = vmatpush2.msra.mxu0 0.0
    %3047 = vmatprep.subr.mxu0 0.0
    %3048 = vmatpush2.msra.mxu0 0.0
    %3049 = vmatprep.subr.mxu0 0.0
    %3050 = vmatpush2.msra.mxu0 0.0
    %3051 = vmatprep.subr.mxu0 0.0
    %3052 = vmatpush2.msra.mxu0 0.0
    %3053 = vmatprep.subr.mxu0 0.0
    %3054 = vmatpush2.msra.mxu0 0.0
    %3055 = vmatprep.subr.mxu0 0.0
    %3056 = vmatpush2.msra.mxu0 0.0
    %3057 = vmatprep.subr.mxu0 0.0
    %3058 = vmatpush2.msra.mxu0 0.0
    %3059 = vmatprep.subr.mxu0 0.0
    %3060 = vmatpush2.msra.mxu0 0.0
    %3061 = vmatprep.subr.mxu0 0.0
    %3062 = vmatpush2.msra.mxu0 0.0
    %3063 = vmatprep.mubr.f32.mxu0 0.0
    %3064 = vmatmul.mubr.f32.gmra.mxu0 %v2620
    %v3065 = vpop.f32.mrf.mxu0
    %v3066 = vadd.f32 0.0, %v3065
    %v3067 = vpop.f32.mrf.mxu0
    %3068 = vmatprep.mubr.f32.mxu0 0.0
    %3069 = vmatmul.mubr.f32.gmra.mxu0 %v2623
    %v3070 = vpop.f32.mrf.mxu0
    %v3071 = vadd.f32 0.0, %v3070
    %v3072 = vpop.f32.mrf.mxu0
    %3073 = vmatprep.mubr.f32.mxu0 0.0
    %3074 = vmatmul.mubr.f32.gmra.mxu0 %v2626
    %v3075 = vpop.f32.mrf.mxu0
    %v3076 = vadd.f32 0.0, %v3075
    %v3077 = vpop.f32.mrf.mxu0
    %3078 = vmatprep.mubr.f32.mxu0 0.0
    %3079 = vmatmul.mubr.f32.gmra.mxu0 %v2629
    %v3080 = vpop.f32.mrf.mxu0
    %v3081 = vadd.f32 0.0, %v3080
    %v3082 = vpop.f32.mrf.mxu0
    %3083 = vmatprep.mubr.f32.mxu0 0.0
    %3084 = vmatmul.mubr.f32.gmra.mxu0 %v2632
    %v3085 = vpop.f32.mrf.mxu0
    %v3086 = vadd.f32 0.0, %v3085
    %v3087 = vpop.f32.mrf.mxu0
    %3088 = vmatprep.mubr.f32.mxu0 0.0
    %3089 = vmatmul.mubr.f32.gmra.mxu0 %v2635
    %v3090 = vpop.f32.mrf.mxu0
    %v3091 = vadd.f32 0.0, %v3090
    %v3092 = vpop.f32.mrf.mxu0
    %3093 = vmatprep.mubr.f32.mxu0 0.0
    %3094 = vmatmul.mubr.f32.gmra.mxu0 %v2825
    %v3095 = vpop.f32.mrf.mxu0
    %v3096 = vadd.f32 0.0, %v3095
    %v3097 = vpop.f32.mrf.mxu0
    %3098 = vmatprep.mubr.f32.mxu0 0.0
    %3099 = vmatmul.mubr.f32.gmra.mxu0 %v2994
    %v3100 = vpop.f32.mrf.mxu0
    %v3101 = vadd.f32 0.0, %v3100
    %v3102 = vpop.f32.mrf.mxu0
    %3103 = vmatprep.mubr.f32.mxu0 0.0
    %3104 = vmatmul.mubr.f32.gmra.mxu0 %v2644
    %v3105 = vpop.f32.mrf.mxu0
    %v3106 = vadd.f32 0.0, %v3105
    %v3107 = vpop.f32.mrf.mxu0
    %3108 = vmatprep.mubr.f32.mxu0 0.0
    %3109 = vmatmul.mubr.f32.gmra.mxu0 %v2647
    %v3110 = vpop.f32.mrf.mxu0
    %v3111 = vadd.f32 0.0, %v3110
    %v3112 = vpop.f32.mrf.mxu0
    %3113 = vmatprep.mubr.f32.mxu0 0.0
    %3114 = vmatmul.mubr.f32.gmra.mxu0 %v2650
    %v3115 = vpop.f32.mrf.mxu0
    %v3116 = vadd.f32 0.0, %v3115
    %v3117 = vpop.f32.mrf.mxu0
    %3118 = vmatprep.mubr.f32.mxu0 0.0
    %3119 = vmatmul.mubr.f32.gmra.mxu0 %v2653
    %v3120 = vpop.f32.mrf.mxu0
    %v3121 = vadd.f32 0.0, %v3120
    %v3122 = vpop.f32.mrf.mxu0
    %3123 = vmatprep.mubr.f32.mxu0 0.0
    %3124 = vmatmul.mubr.f32.gmra.mxu0 %v2656
    %v3125 = vpop.f32.mrf.mxu0
    %v3126 = vadd.f32 0.0, %v3125
    %v3127 = vpop.f32.mrf.mxu0
    %3128 = vmatprep.mubr.f32.mxu0 0.0
    %3129 = vmatmul.mubr.f32.gmra.mxu0 %v2659
    %v3130 = vpop.f32.mrf.mxu0
    %v3131 = vadd.f32 0.0, %v3130
    %v3132 = vpop.f32.mrf.mxu0
    %3133 = vmatprep.mubr.f32.mxu0 0.0
    %3134 = vmatmul.mubr.f32.gmra.mxu0 %v2828
    %v3135 = vpop.f32.mrf.mxu0
    %v3136 = vadd.f32 0.0, %v3135
    %v3137 = vpop.f32.mrf.mxu0
    %3138 = vmatprep.mubr.f32.mxu0 0.0
    %3139 = vmatmul.mubr.f32.gmra.mxu0 %v2997
    %v3140 = vpop.f32.mrf.mxu0
    %v3141 = vadd.f32 0.0, %v3140
    %v3142 = vpop.f32.mrf.mxu0
    %3143 = vdwg.mxu0
    %v3144 = vadd.f32 %v2975, %v3066
    %v3145 = vadd.f32 %v2976, %v3071
    %v3146 = vadd.f32 %v2977, %v3076
    %v3147 = vadd.f32 %v2978, %v3081
    %v3148 = vadd.f32 %v2979, %v3086
    %v3149 = vadd.f32 %v2980, %v3091
    %v3150 = vadd.f32 %v2981, %v3096
    %v3151 = vadd.f32 %v2982, %v3101
    %v3152 = vadd.f32 %v2983, %v3106
    %v3153 = vadd.f32 %v2984, %v3111
    %v3154 = vadd.f32 %v2985, %v3116
    %v3155 = vadd.f32 %v2986, %v3121
    %v3156 = vadd.f32 %v2987, %v3126
    %v3157 = vadd.f32 %v2988, %v3131
    %v3158 = vadd.f32 %v2989, %v3136
    %v3159 = vadd.f32 %v2990, %v3141
    %v3160 = vld [vmem:[#allocation2 + $0x2] sm:$0xff]
    %v3161 = vld [vmem:[#allocation2 + $0x12] sm:$0xff]
    %v3162 = vld [vmem:[#allocation2 + $0x22] sm:$0xff]
    %v3163 = vld [vmem:[#allocation2 + $0x32] sm:$0xff]
    %v3164 = vld [vmem:[#allocation2 + $0x42] sm:$0xff]
    %v3165 = vld [vmem:[#allocation2 + $0x52] sm:$0xff]
    %v3166 = vld [vmem:[#allocation2 + $0x62] sm:$0xff]
    %v3167 = vld [vmem:[#allocation2 + $0x72] sm:$0xff]
    %v3168 = vld [vmem:[#allocation2 + $0x82] sm:$0xff]
    %v3169 = vld [vmem:[#allocation2 + $0x92] sm:$0xff]
    %v3170 = vld [vmem:[#allocation2 + $0xa2] sm:$0xff]
    %v3171 = vld [vmem:[#allocation2 + $0xb2] sm:$0xff]
    %v3172 = vld [vmem:[#allocation2 + $0xc2] sm:$0xff]
    %v3173 = vld [vmem:[#allocation2 + $0xd2] sm:$0xff]
    %v3174 = vld [vmem:[#allocation2 + $0xe2] sm:$0xff]
    %v3175 = vld [vmem:[#allocation2 + $0xf2] sm:$0xff]
    %v3176 = vld [vmem:[#allocation2 + $0x102] sm:$0xff]
    %v3177 = vld [vmem:[#allocation2 + $0x112] sm:$0xff]
    %v3178 = vld [vmem:[#allocation2 + $0x122] sm:$0xff]
    %v3179 = vld [vmem:[#allocation2 + $0x132] sm:$0xff]
    %s3180 = scalar_lea.vmem %s4, 16
    %v3181 = vld [vmem:[%s3180] sm:$0xff]
    %v3183 = vsel %vm202, %v3160, 0
    %v3186 = vsel %vm202, %v3161, 0
    %v3189 = vsel %vm202, %v3162, 0
    %v3192 = vsel %vm202, %v3163, 0
    %v3195 = vsel %vm202, %v3164, 0
    %v3198 = vsel %vm202, %v3165, 0
    %v3201 = vsel %vm202, %v3166, 0
    %v3204 = vsel %vm202, %v3167, 0
    %v3207 = vsel %vm202, %v3170, 0
    %v3210 = vsel %vm202, %v3171, 0
    %v3213 = vsel %vm202, %v3172, 0
    %v3216 = vsel %vm202, %v3173, 0
    %v3219 = vsel %vm202, %v3174, 0
    %v3222 = vsel %vm202, %v3175, 0
    %v3225 = vsel %vm202, %v3176, 0
    %v3228 = vsel %vm202, %v3177, 0
    %3230 = vmatprep.subr.mxu0 0.0
    %3231 = vmatpush1.msra.mxu0 0.0
    %3232 = vmatprep.subr.mxu0 0.0
    %3233 = vmatpush1.msra.mxu0 0.0
    %3234 = vmatprep.subr.mxu0 0.0
    %3235 = vmatpush1.msra.mxu0 0.0
    %3236 = vmatprep.subr.mxu0 0.0
    %3237 = vmatpush1.msra.mxu0 0.0
    %3238 = vmatprep.subr.mxu0 0.0
    %3239 = vmatpush1.msra.mxu0 0.0
    %3240 = vmatprep.subr.mxu0 0.0
    %3241 = vmatpush1.msra.mxu0 0.0
    %3242 = vmatprep.subr.mxu0 0.0
    %3243 = vmatpush1.msra.mxu0 0.0
    %3244 = vmatprep.subr.mxu0 0.0
    %3245 = vmatpush1.msra.mxu0 0.0
    %3246 = vmatprep.subr.mxu0 0.0
    %3247 = vmatpush1.msra.mxu0 0.0
    %3248 = vmatprep.subr.mxu0 0.0
    %3249 = vmatpush1.msra.mxu0 0.0
    %3250 = vmatprep.subr.mxu0 0.0
    %3251 = vmatpush1.msra.mxu0 0.0
    %3252 = vmatprep.subr.mxu0 0.0
    %3253 = vmatpush1.msra.mxu0 0.0
    %3254 = vmatprep.subr.mxu0 0.0
    %3255 = vmatpush1.msra.mxu0 0.0
    %3256 = vmatprep.subr.mxu0 0.0
    %3257 = vmatpush1.msra.mxu0 0.0
    %3258 = vmatprep.subr.mxu0 0.0
    %3259 = vmatpush1.msra.mxu0 0.0
    %3260 = vmatprep.subr.mxu0 0.0
    %3261 = vmatpush1.msra.mxu0 %v3181
    %3262 = vmatprep.subr.mxu0 0.0
    %3263 = vmatpush2.msra.mxu0 0.0
    %3264 = vmatprep.subr.mxu0 0.0
    %3265 = vmatpush2.msra.mxu0 0.0
    %3266 = vmatprep.subr.mxu0 0.0
    %3267 = vmatpush2.msra.mxu0 0.0
    %3268 = vmatprep.subr.mxu0 0.0
    %3269 = vmatpush2.msra.mxu0 0.0
    %3270 = vmatprep.subr.mxu0 0.0
    %3271 = vmatpush2.msra.mxu0 0.0
    %3272 = vmatprep.subr.mxu0 0.0
    %3273 = vmatpush2.msra.mxu0 0.0
    %3274 = vmatprep.subr.mxu0 0.0
    %3275 = vmatpush2.msra.mxu0 0.0
    %3276 = vmatprep.subr.mxu0 0.0
    %3277 = vmatpush2.msra.mxu0 0.0
    %3278 = vmatprep.subr.mxu0 0.0
    %3279 = vmatpush2.msra.mxu0 0.0
    %3280 = vmatprep.subr.mxu0 0.0
    %3281 = vmatpush2.msra.mxu0 0.0
    %3282 = vmatprep.subr.mxu0 0.0
    %3283 = vmatpush2.msra.mxu0 0.0
    %3284 = vmatprep.subr.mxu0 0.0
    %3285 = vmatpush2.msra.mxu0 0.0
    %3286 = vmatprep.subr.mxu0 0.0
    %3287 = vmatpush2.msra.mxu0 0.0
    %3288 = vmatprep.subr.mxu0 0.0
    %3289 = vmatpush2.msra.mxu0 0.0
    %3290 = vmatprep.subr.mxu0 0.0
    %3291 = vmatpush2.msra.mxu0 0.0
    %3292 = vmatprep.subr.mxu0 0.0
    %3293 = vmatpush2.msra.mxu0 0.0
    %3294 = vmatprep.mubr.f32.mxu0 0.0
    %3295 = vmatmul.mubr.f32.gmra.mxu0 %v3183
    %v3296 = vpop.f32.mrf.mxu0
    %v3297 = vadd.f32 0.0, %v3296
    %v3298 = vpop.f32.mrf.mxu0
    %3299 = vmatprep.mubr.f32.mxu0 0.0
    %3300 = vmatmul.mubr.f32.gmra.mxu0 %v3186
    %v3301 = vpop.f32.mrf.mxu0
    %v3302 = vadd.f32 0.0, %v3301
    %v3303 = vpop.f32.mrf.mxu0
    %3304 = vmatprep.mubr.f32.mxu0 0.0
    %3305 = vmatmul.mubr.f32.gmra.mxu0 %v3189
    %v3306 = vpop.f32.mrf.mxu0
    %v3307 = vadd.f32 0.0, %v3306
    %v3308 = vpop.f32.mrf.mxu0
    %3309 = vmatprep.mubr.f32.mxu0 0.0
    %3310 = vmatmul.mubr.f32.gmra.mxu0 %v3192
    %v3311 = vpop.f32.mrf.mxu0
    %v3312 = vadd.f32 0.0, %v3311
    %v3313 = vpop.f32.mrf.mxu0
    %3314 = vmatprep.mubr.f32.mxu0 0.0
    %3315 = vmatmul.mubr.f32.gmra.mxu0 %v3195
    %v3316 = vpop.f32.mrf.mxu0
    %v3317 = vadd.f32 0.0, %v3316
    %v3318 = vpop.f32.mrf.mxu0
    %3319 = vmatprep.mubr.f32.mxu0 0.0
    %3320 = vmatmul.mubr.f32.gmra.mxu0 %v3198
    %v3321 = vpop.f32.mrf.mxu0
    %v3322 = vadd.f32 0.0, %v3321
    %v3323 = vpop.f32.mrf.mxu0
    %3324 = vmatprep.mubr.f32.mxu0 0.0
    %3325 = vmatmul.mubr.f32.gmra.mxu0 %v3201
    %v3326 = vpop.f32.mrf.mxu0
    %v3327 = vadd.f32 0.0, %v3326
    %v3328 = vpop.f32.mrf.mxu0
    %3329 = vmatprep.mubr.f32.mxu0 0.0
    %3330 = vmatmul.mubr.f32.gmra.mxu0 %v3204
    %v3331 = vpop.f32.mrf.mxu0
    %v3332 = vadd.f32 0.0, %v3331
    %v3333 = vpop.f32.mrf.mxu0
    %3334 = vmatprep.mubr.f32.mxu0 0.0
    %3335 = vmatmul.mubr.f32.gmra.mxu0 %v3207
    %v3336 = vpop.f32.mrf.mxu0
    %v3337 = vadd.f32 0.0, %v3336
    %v3338 = vpop.f32.mrf.mxu0
    %3339 = vmatprep.mubr.f32.mxu0 0.0
    %3340 = vmatmul.mubr.f32.gmra.mxu0 %v3210
    %v3341 = vpop.f32.mrf.mxu0
    %v3342 = vadd.f32 0.0, %v3341
    %v3343 = vpop.f32.mrf.mxu0
    %3344 = vmatprep.mubr.f32.mxu0 0.0
    %3345 = vmatmul.mubr.f32.gmra.mxu0 %v3213
    %v3346 = vpop.f32.mrf.mxu0
    %v3347 = vadd.f32 0.0, %v3346
    %v3348 = vpop.f32.mrf.mxu0
    %3349 = vmatprep.mubr.f32.mxu0 0.0
    %3350 = vmatmul.mubr.f32.gmra.mxu0 %v3216
    %v3351 = vpop.f32.mrf.mxu0
    %v3352 = vadd.f32 0.0, %v3351
    %v3353 = vpop.f32.mrf.mxu0
    %3354 = vmatprep.mubr.f32.mxu0 0.0
    %3355 = vmatmul.mubr.f32.gmra.mxu0 %v3219
    %v3356 = vpop.f32.mrf.mxu0
    %v3357 = vadd.f32 0.0, %v3356
    %v3358 = vpop.f32.mrf.mxu0
    %3359 = vmatprep.mubr.f32.mxu0 0.0
    %3360 = vmatmul.mubr.f32.gmra.mxu0 %v3222
    %v3361 = vpop.f32.mrf.mxu0
    %v3362 = vadd.f32 0.0, %v3361
    %v3363 = vpop.f32.mrf.mxu0
    %3364 = vmatprep.mubr.f32.mxu0 0.0
    %3365 = vmatmul.mubr.f32.gmra.mxu0 %v3225
    %v3366 = vpop.f32.mrf.mxu0
    %v3367 = vadd.f32 0.0, %v3366
    %v3368 = vpop.f32.mrf.mxu0
    %3369 = vmatprep.mubr.f32.mxu0 0.0
    %3370 = vmatmul.mubr.f32.gmra.mxu0 %v3228
    %v3371 = vpop.f32.mrf.mxu0
    %v3372 = vadd.f32 0.0, %v3371
    %v3373 = vpop.f32.mrf.mxu0
    %3374 = vdwg.mxu0
    %v3375 = vadd.f32 %v3144, %v3297
    %v3376 = vadd.f32 %v3145, %v3302
    %v3377 = vadd.f32 %v3146, %v3307
    %v3378 = vadd.f32 %v3147, %v3312
    %v3379 = vadd.f32 %v3148, %v3317
    %v3380 = vadd.f32 %v3149, %v3322
    %v3381 = vadd.f32 %v3150, %v3327
    %v3382 = vadd.f32 %v3151, %v3332
    %v3383 = vadd.f32 %v3152, %v3337
    %v3384 = vadd.f32 %v3153, %v3342
    %v3385 = vadd.f32 %v3154, %v3347
    %v3386 = vadd.f32 %v3155, %v3352
    %v3387 = vadd.f32 %v3156, %v3357
    %v3388 = vadd.f32 %v3157, %v3362
    %v3389 = vadd.f32 %v3158, %v3367
    %v3390 = vadd.f32 %v3159, %v3372
    %s3391 = scalar_lea.vmem %s4, 40
    %v3392 = vld [vmem:[%s3391] sm:$0xff]
    %v3394 = vsel %vm202, %v3168, 0
    %v3397 = vsel %vm202, %v3178, 0
    %3399 = vmatprep.subr.mxu0 0.0
    %3400 = vmatpush1.msra.mxu0 0.0
    %3401 = vmatprep.subr.mxu0 0.0
    %3402 = vmatpush1.msra.mxu0 0.0
    %3403 = vmatprep.subr.mxu0 0.0
    %3404 = vmatpush1.msra.mxu0 0.0
    %3405 = vmatprep.subr.mxu0 0.0
    %3406 = vmatpush1.msra.mxu0 0.0
    %3407 = vmatprep.subr.mxu0 0.0
    %3408 = vmatpush1.msra.mxu0 0.0
    %3409 = vmatprep.subr.mxu0 0.0
    %3410 = vmatpush1.msra.mxu0 0.0
    %3411 = vmatprep.subr.mxu0 0.0
    %3412 = vmatpush1.msra.mxu0 0.0
    %3413 = vmatprep.subr.mxu0 0.0
    %3414 = vmatpush1.msra.mxu0 0.0
    %3415 = vmatprep.subr.mxu0 0.0
    %3416 = vmatpush1.msra.mxu0 0.0
    %3417 = vmatprep.subr.mxu0 0.0
    %3418 = vmatpush1.msra.mxu0 0.0
    %3419 = vmatprep.subr.mxu0 0.0
    %3420 = vmatpush1.msra.mxu0 0.0
    %3421 = vmatprep.subr.mxu0 0.0
    %3422 = vmatpush1.msra.mxu0 0.0
    %3423 = vmatprep.subr.mxu0 0.0
    %3424 = vmatpush1.msra.mxu0 0.0
    %3425 = vmatprep.subr.mxu0 0.0
    %3426 = vmatpush1.msra.mxu0 0.0
    %3427 = vmatprep.subr.mxu0 0.0
    %3428 = vmatpush1.msra.mxu0 0.0
    %3429 = vmatprep.subr.mxu0 0.0
    %3430 = vmatpush1.msra.mxu0 %v3392
    %3431 = vmatprep.subr.mxu0 0.0
    %3432 = vmatpush2.msra.mxu0 0.0
    %3433 = vmatprep.subr.mxu0 0.0
    %3434 = vmatpush2.msra.mxu0 0.0
    %3435 = vmatprep.subr.mxu0 0.0
    %3436 = vmatpush2.msra.mxu0 0.0
    %3437 = vmatprep.subr.mxu0 0.0
    %3438 = vmatpush2.msra.mxu0 0.0
    %3439 = vmatprep.subr.mxu0 0.0
    %3440 = vmatpush2.msra.mxu0 0.0
    %3441 = vmatprep.subr.mxu0 0.0
    %3442 = vmatpush2.msra.mxu0 0.0
    %3443 = vmatprep.subr.mxu0 0.0
    %3444 = vmatpush2.msra.mxu0 0.0
    %3445 = vmatprep.subr.mxu0 0.0
    %3446 = vmatpush2.msra.mxu0 0.0
    %3447 = vmatprep.subr.mxu0 0.0
    %3448 = vmatpush2.msra.mxu0 0.0
    %3449 = vmatprep.subr.mxu0 0.0
    %3450 = vmatpush2.msra.mxu0 0.0
    %3451 = vmatprep.subr.mxu0 0.0
    %3452 = vmatpush2.msra.mxu0 0.0
    %3453 = vmatprep.subr.mxu0 0.0
    %3454 = vmatpush2.msra.mxu0 0.0
    %3455 = vmatprep.subr.mxu0 0.0
    %3456 = vmatpush2.msra.mxu0 0.0
    %3457 = vmatprep.subr.mxu0 0.0
    %3458 = vmatpush2.msra.mxu0 0.0
    %3459 = vmatprep.subr.mxu0 0.0
    %3460 = vmatpush2.msra.mxu0 0.0
    %3461 = vmatprep.subr.mxu0 0.0
    %3462 = vmatpush2.msra.mxu0 0.0
    %3463 = vmatprep.mubr.f32.mxu0 0.0
    %3464 = vmatmul.mubr.f32.gmra.mxu0 %v3186
    %v3465 = vpop.f32.mrf.mxu0
    %v3466 = vadd.f32 0.0, %v3465
    %v3467 = vpop.f32.mrf.mxu0
    %3468 = vmatprep.mubr.f32.mxu0 0.0
    %3469 = vmatmul.mubr.f32.gmra.mxu0 %v3189
    %v3470 = vpop.f32.mrf.mxu0
    %v3471 = vadd.f32 0.0, %v3470
    %v3472 = vpop.f32.mrf.mxu0
    %3473 = vmatprep.mubr.f32.mxu0 0.0
    %3474 = vmatmul.mubr.f32.gmra.mxu0 %v3192
    %v3475 = vpop.f32.mrf.mxu0
    %v3476 = vadd.f32 0.0, %v3475
    %v3477 = vpop.f32.mrf.mxu0
    %3478 = vmatprep.mubr.f32.mxu0 0.0
    %3479 = vmatmul.mubr.f32.gmra.mxu0 %v3195
    %v3480 = vpop.f32.mrf.mxu0
    %v3481 = vadd.f32 0.0, %v3480
    %v3482 = vpop.f32.mrf.mxu0
    %3483 = vmatprep.mubr.f32.mxu0 0.0
    %3484 = vmatmul.mubr.f32.gmra.mxu0 %v3198
    %v3485 = vpop.f32.mrf.mxu0
    %v3486 = vadd.f32 0.0, %v3485
    %v3487 = vpop.f32.mrf.mxu0
    %3488 = vmatprep.mubr.f32.mxu0 0.0
    %3489 = vmatmul.mubr.f32.gmra.mxu0 %v3201
    %v3490 = vpop.f32.mrf.mxu0
    %v3491 = vadd.f32 0.0, %v3490
    %v3492 = vpop.f32.mrf.mxu0
    %3493 = vmatprep.mubr.f32.mxu0 0.0
    %3494 = vmatmul.mubr.f32.gmra.mxu0 %v3204
    %v3495 = vpop.f32.mrf.mxu0
    %v3496 = vadd.f32 0.0, %v3495
    %v3497 = vpop.f32.mrf.mxu0
    %3498 = vmatprep.mubr.f32.mxu0 0.0
    %3499 = vmatmul.mubr.f32.gmra.mxu0 %v3394
    %v3500 = vpop.f32.mrf.mxu0
    %v3501 = vadd.f32 0.0, %v3500
    %v3502 = vpop.f32.mrf.mxu0
    %3503 = vmatprep.mubr.f32.mxu0 0.0
    %3504 = vmatmul.mubr.f32.gmra.mxu0 %v3210
    %v3505 = vpop.f32.mrf.mxu0
    %v3506 = vadd.f32 0.0, %v3505
    %v3507 = vpop.f32.mrf.mxu0
    %3508 = vmatprep.mubr.f32.mxu0 0.0
    %3509 = vmatmul.mubr.f32.gmra.mxu0 %v3213
    %v3510 = vpop.f32.mrf.mxu0
    %v3511 = vadd.f32 0.0, %v3510
    %v3512 = vpop.f32.mrf.mxu0
    %3513 = vmatprep.mubr.f32.mxu0 0.0
    %3514 = vmatmul.mubr.f32.gmra.mxu0 %v3216
    %v3515 = vpop.f32.mrf.mxu0
    %v3516 = vadd.f32 0.0, %v3515
    %v3517 = vpop.f32.mrf.mxu0
    %3518 = vmatprep.mubr.f32.mxu0 0.0
    %3519 = vmatmul.mubr.f32.gmra.mxu0 %v3219
    %v3520 = vpop.f32.mrf.mxu0
    %v3521 = vadd.f32 0.0, %v3520
    %v3522 = vpop.f32.mrf.mxu0
    %3523 = vmatprep.mubr.f32.mxu0 0.0
    %3524 = vmatmul.mubr.f32.gmra.mxu0 %v3222
    %v3525 = vpop.f32.mrf.mxu0
    %v3526 = vadd.f32 0.0, %v3525
    %v3527 = vpop.f32.mrf.mxu0
    %3528 = vmatprep.mubr.f32.mxu0 0.0
    %3529 = vmatmul.mubr.f32.gmra.mxu0 %v3225
    %v3530 = vpop.f32.mrf.mxu0
    %v3531 = vadd.f32 0.0, %v3530
    %v3532 = vpop.f32.mrf.mxu0
    %3533 = vmatprep.mubr.f32.mxu0 0.0
    %3534 = vmatmul.mubr.f32.gmra.mxu0 %v3228
    %v3535 = vpop.f32.mrf.mxu0
    %v3536 = vadd.f32 0.0, %v3535
    %v3537 = vpop.f32.mrf.mxu0
    %3538 = vmatprep.mubr.f32.mxu0 0.0
    %3539 = vmatmul.mubr.f32.gmra.mxu0 %v3397
    %v3540 = vpop.f32.mrf.mxu0
    %v3541 = vadd.f32 0.0, %v3540
    %v3542 = vpop.f32.mrf.mxu0
    %3543 = vdwg.mxu0
    %v3544 = vadd.f32 %v3375, %v3466
    %v3545 = vadd.f32 %v3376, %v3471
    %v3546 = vadd.f32 %v3377, %v3476
    %v3547 = vadd.f32 %v3378, %v3481
    %v3548 = vadd.f32 %v3379, %v3486
    %v3549 = vadd.f32 %v3380, %v3491
    %v3550 = vadd.f32 %v3381, %v3496
    %v3551 = vadd.f32 %v3382, %v3501
    %v3552 = vadd.f32 %v3383, %v3506
    %v3553 = vadd.f32 %v3384, %v3511
    %v3554 = vadd.f32 %v3385, %v3516
    %v3555 = vadd.f32 %v3386, %v3521
    %v3556 = vadd.f32 %v3387, %v3526
    %v3557 = vadd.f32 %v3388, %v3531
    %v3558 = vadd.f32 %v3389, %v3536
    %v3559 = vadd.f32 %v3390, %v3541
    %s3560 = scalar_lea.vmem %s4, 64
    %v3561 = vld [vmem:[%s3560] sm:$0xff]
    %v3563 = vsel %vm202, %v3169, 0
    %v3566 = vsel %vm202, %v3179, 0
    %3568 = vmatprep.subr.mxu0 0.0
    %3569 = vmatpush1.msra.mxu0 0.0
    %3570 = vmatprep.subr.mxu0 0.0
    %3571 = vmatpush1.msra.mxu0 0.0
    %3572 = vmatprep.subr.mxu0 0.0
    %3573 = vmatpush1.msra.mxu0 0.0
    %3574 = vmatprep.subr.mxu0 0.0
    %3575 = vmatpush1.msra.mxu0 0.0
    %3576 = vmatprep.subr.mxu0 0.0
    %3577 = vmatpush1.msra.mxu0 0.0
    %3578 = vmatprep.subr.mxu0 0.0
    %3579 = vmatpush1.msra.mxu0 0.0
    %3580 = vmatprep.subr.mxu0 0.0
    %3581 = vmatpush1.msra.mxu0 0.0
    %3582 = vmatprep.subr.mxu0 0.0
    %3583 = vmatpush1.msra.mxu0 0.0
    %3584 = vmatprep.subr.mxu0 0.0
    %3585 = vmatpush1.msra.mxu0 0.0
    %3586 = vmatprep.subr.mxu0 0.0
    %3587 = vmatpush1.msra.mxu0 0.0
    %3588 = vmatprep.subr.mxu0 0.0
    %3589 = vmatpush1.msra.mxu0 0.0
    %3590 = vmatprep.subr.mxu0 0.0
    %3591 = vmatpush1.msra.mxu0 0.0
    %3592 = vmatprep.subr.mxu0 0.0
    %3593 = vmatpush1.msra.mxu0 0.0
    %3594 = vmatprep.subr.mxu0 0.0
    %3595 = vmatpush1.msra.mxu0 0.0
    %3596 = vmatprep.subr.mxu0 0.0
    %3597 = vmatpush1.msra.mxu0 0.0
    %3598 = vmatprep.subr.mxu0 0.0
    %3599 = vmatpush1.msra.mxu0 %v3561
    %3600 = vmatprep.subr.mxu0 0.0
    %3601 = vmatpush2.msra.mxu0 0.0
    %3602 = vmatprep.subr.mxu0 0.0
    %3603 = vmatpush2.msra.mxu0 0.0
    %3604 = vmatprep.subr.mxu0 0.0
    %3605 = vmatpush2.msra.mxu0 0.0
    %3606 = vmatprep.subr.mxu0 0.0
    %3607 = vmatpush2.msra.mxu0 0.0
    %3608 = vmatprep.subr.mxu0 0.0
    %3609 = vmatpush2.msra.mxu0 0.0
    %3610 = vmatprep.subr.mxu0 0.0
    %3611 = vmatpush2.msra.mxu0 0.0
    %3612 = vmatprep.subr.mxu0 0.0
    %3613 = vmatpush2.msra.mxu0 0.0
    %3614 = vmatprep.subr.mxu0 0.0
    %3615 = vmatpush2.msra.mxu0 0.0
    %3616 = vmatprep.subr.mxu0 0.0
    %3617 = vmatpush2.msra.mxu0 0.0
    %3618 = vmatprep.subr.mxu0 0.0
    %3619 = vmatpush2.msra.mxu0 0.0
    %3620 = vmatprep.subr.mxu0 0.0
    %3621 = vmatpush2.msra.mxu0 0.0
    %3622 = vmatprep.subr.mxu0 0.0
    %3623 = vmatpush2.msra.mxu0 0.0
    %3624 = vmatprep.subr.mxu0 0.0
    %3625 = vmatpush2.msra.mxu0 0.0
    %3626 = vmatprep.subr.mxu0 0.0
    %3627 = vmatpush2.msra.mxu0 0.0
    %3628 = vmatprep.subr.mxu0 0.0
    %3629 = vmatpush2.msra.mxu0 0.0
    %3630 = vmatprep.subr.mxu0 0.0
    %3631 = vmatpush2.msra.mxu0 0.0
    %3632 = vmatprep.mubr.f32.mxu0 0.0
    %3633 = vmatmul.mubr.f32.gmra.mxu0 %v3189
    %v3634 = vpop.f32.mrf.mxu0
    %v3635 = vadd.f32 0.0, %v3634
    %v3636 = vpop.f32.mrf.mxu0
    %3637 = vmatprep.mubr.f32.mxu0 0.0
    %3638 = vmatmul.mubr.f32.gmra.mxu0 %v3192
    %v3639 = vpop.f32.mrf.mxu0
    %v3640 = vadd.f32 0.0, %v3639
    %v3641 = vpop.f32.mrf.mxu0
    %3642 = vmatprep.mubr.f32.mxu0 0.0
    %3643 = vmatmul.mubr.f32.gmra.mxu0 %v3195
    %v3644 = vpop.f32.mrf.mxu0
    %v3645 = vadd.f32 0.0, %v3644
    %v3646 = vpop.f32.mrf.mxu0
    %3647 = vmatprep.mubr.f32.mxu0 0.0
    %3648 = vmatmul.mubr.f32.gmra.mxu0 %v3198
    %v3649 = vpop.f32.mrf.mxu0
    %v3650 = vadd.f32 0.0, %v3649
    %v3651 = vpop.f32.mrf.mxu0
    %3652 = vmatprep.mubr.f32.mxu0 0.0
    %3653 = vmatmul.mubr.f32.gmra.mxu0 %v3201
    %v3654 = vpop.f32.mrf.mxu0
    %v3655 = vadd.f32 0.0, %v3654
    %v3656 = vpop.f32.mrf.mxu0
    %3657 = vmatprep.mubr.f32.mxu0 0.0
    %3658 = vmatmul.mubr.f32.gmra.mxu0 %v3204
    %v3659 = vpop.f32.mrf.mxu0
    %v3660 = vadd.f32 0.0, %v3659
    %v3661 = vpop.f32.mrf.mxu0
    %3662 = vmatprep.mubr.f32.mxu0 0.0
    %3663 = vmatmul.mubr.f32.gmra.mxu0 %v3394
    %v3664 = vpop.f32.mrf.mxu0
    %v3665 = vadd.f32 0.0, %v3664
    %v3666 = vpop.f32.mrf.mxu0
    %3667 = vmatprep.mubr.f32.mxu0 0.0
    %3668 = vmatmul.mubr.f32.gmra.mxu0 %v3563
    %v3669 = vpop.f32.mrf.mxu0
    %v3670 = vadd.f32 0.0, %v3669
    %v3671 = vpop.f32.mrf.mxu0
    %3672 = vmatprep.mubr.f32.mxu0 0.0
    %3673 = vmatmul.mubr.f32.gmra.mxu0 %v3213
    %v3674 = vpop.f32.mrf.mxu0
    %v3675 = vadd.f32 0.0, %v3674
    %v3676 = vpop.f32.mrf.mxu0
    %3677 = vmatprep.mubr.f32.mxu0 0.0
    %3678 = vmatmul.mubr.f32.gmra.mxu0 %v3216
    %v3679 = vpop.f32.mrf.mxu0
    %v3680 = vadd.f32 0.0, %v3679
    %v3681 = vpop.f32.mrf.mxu0
    %3682 = vmatprep.mubr.f32.mxu0 0.0
    %3683 = vmatmul.mubr.f32.gmra.mxu0 %v3219
    %v3684 = vpop.f32.mrf.mxu0
    %v3685 = vadd.f32 0.0, %v3684
    %v3686 = vpop.f32.mrf.mxu0
    %3687 = vmatprep.mubr.f32.mxu0 0.0
    %3688 = vmatmul.mubr.f32.gmra.mxu0 %v3222
    %v3689 = vpop.f32.mrf.mxu0
    %v3690 = vadd.f32 0.0, %v3689
    %v3691 = vpop.f32.mrf.mxu0
    %3692 = vmatprep.mubr.f32.mxu0 0.0
    %3693 = vmatmul.mubr.f32.gmra.mxu0 %v3225
    %v3694 = vpop.f32.mrf.mxu0
    %v3695 = vadd.f32 0.0, %v3694
    %v3696 = vpop.f32.mrf.mxu0
    %3697 = vmatprep.mubr.f32.mxu0 0.0
    %3698 = vmatmul.mubr.f32.gmra.mxu0 %v3228
    %v3699 = vpop.f32.mrf.mxu0
    %v3700 = vadd.f32 0.0, %v3699
    %v3701 = vpop.f32.mrf.mxu0
    %3702 = vmatprep.mubr.f32.mxu0 0.0
    %3703 = vmatmul.mubr.f32.gmra.mxu0 %v3397
    %v3704 = vpop.f32.mrf.mxu0
    %v3705 = vadd.f32 0.0, %v3704
    %v3706 = vpop.f32.mrf.mxu0
    %3707 = vmatprep.mubr.f32.mxu0 0.0
    %3708 = vmatmul.mubr.f32.gmra.mxu0 %v3566
    %v3709 = vpop.f32.mrf.mxu0
    %v3710 = vadd.f32 0.0, %v3709
    %v3711 = vpop.f32.mrf.mxu0
    %3712 = vdwg.mxu0
    %v3713 = vadd.f32 %v3544, %v3635
    %v3714 = vadd.f32 %v3545, %v3640
    %v3715 = vadd.f32 %v3546, %v3645
    %v3716 = vadd.f32 %v3547, %v3650
    %v3717 = vadd.f32 %v3548, %v3655
    %v3718 = vadd.f32 %v3549, %v3660
    %v3719 = vadd.f32 %v3550, %v3665
    %v3720 = vadd.f32 %v3551, %v3670
    %v3721 = vadd.f32 %v3552, %v3675
    %v3722 = vadd.f32 %v3553, %v3680
    %v3723 = vadd.f32 %v3554, %v3685
    %v3724 = vadd.f32 %v3555, %v3690
    %v3725 = vadd.f32 %v3556, %v3695
    %v3726 = vadd.f32 %v3557, %v3700
    %v3727 = vadd.f32 %v3558, %v3705
    %v3728 = vadd.f32 %v3559, %v3710
    %3729 = vxpose.xlu0.b32.start [1/16] %v3713, 128
    %3730 = vxpose.xlu0.b32.cont [2/16] %v3714, 128
    %3731 = vxpose.xlu0.b32.cont [3/16] %v3715, 128
    %3732 = vxpose.xlu0.b32.cont [4/16] %v3716, 128
    %3733 = vxpose.xlu0.b32.cont [5/16] %v3717, 128
    %3734 = vxpose.xlu0.b32.cont [6/16] %v3718, 128
    %3735 = vxpose.xlu0.b32.cont [7/16] %v3719, 128
    %3736 = vxpose.xlu0.b32.cont [8/16] %v3720, 128
    %3737 = vxpose.xlu0.b32.cont [9/16] %v3721, 128
    %3738 = vxpose.xlu0.b32.cont [10/16] %v3722, 128
    %3739 = vxpose.xlu0.b32.cont [11/16] %v3723, 128
    %3740 = vxpose.xlu0.b32.cont [12/16] %v3724, 128
    %3741 = vxpose.xlu0.b32.cont [13/16] %v3725, 128
    %3742 = vxpose.xlu0.b32.cont [14/16] %v3726, 128
    %3743 = vxpose.xlu0.b32.cont [15/16] %v3727, 128
    %3744 = vxpose.xlu0.b32.end [16/16] %v3728, 128
    %v3745 = vpop.trf.xlu0
    %v3746 = vpop.trf.xlu0
    %v3747 = vpop.trf.xlu0
    %v3748 = vpop.trf.xlu0
    %v3749 = vpop.trf.xlu0
    %v3750 = vpop.trf.xlu0
    %v3751 = vpop.trf.xlu0
    %v3752 = vpop.trf.xlu0
    %v3753 = vpop.trf.xlu0
    %v3754 = vpop.trf.xlu0
    %v3755 = vpop.trf.xlu0
    %v3756 = vpop.trf.xlu0
    %v3757 = vpop.trf.xlu0
    %v3758 = vpop.trf.xlu0
    %v3759 = vpop.trf.xlu0
    %v3760 = vpop.trf.xlu0
    %3761 = vadd.xlane.f32.xlu0 %v3745
    %v3762 = vpop.xlane.xlu0 %3761
    %v3763 = vmul.f32 %v3762, 0.0078125
    %v3764 = vmul.f32 %v3745, %v3745
    %3765 = vadd.xlane.f32.xlu0 %v3764
    %v3766 = vpop.xlane.xlu0 %3765
    %v3767 = vmul.f32 %v3766, 0.0078125
    %v3768 = vmul.f32 %v3763, %v3763
    %v3769 = vsub.f32 %v3767, %v3768
    %v3770 = vmax.f32 %v3769, 0.0
    %v3771 = vld [vmem:[%s5] sm:$0xff]
    %v3772 = vadd.f32 %v3770, 1e-05
    %v3773 = vrsqrt.pop %v3772
    %v3774 = vmul.f32 %v3771, %v3773
    %v3775 = vld [vmem:[%s6] sm:$0xff]
    %v3776 = vmul.f32 %v3763, %v3774
    %v3777 = vsub.f32 %v3775, %v3776
    %3779 = vset.pattern.permute.xlu0 0
    %3780 = vperm.xlu0 %3779, %v3774
    %v3781 = vpop.permute.xlu0 %3780
    %v3783 = vmul.f32 %v3745, %v3781
    %3785 = vset.pattern.permute.xlu0 0
    %3786 = vperm.xlu0 %3785, %v3777
    %v3787 = vpop.permute.xlu0 %3786
    %v3789 = vadd.f32 %v3783, %v3787
    %v3790 = vmax.f32 %v3789, 0.0
    %3791 = vst [vmem:[#allocation3] sm:$0xff] %v3790
    // Predicated region
    $region30: #{tpu_custom_call.1} parent=1 // pred_check
      _
    $region31: #{tpu_custom_call.1} parent=1 // pred_check_branch
      %3793 = sbr.rel (0) target = $region33
    $region32: #{tpu_custom_call.1} parent=1 // pred_region
      %s3795 = ssub.s32 128, 128
      %3796 = vsyncadd [#allocation4], %s3795
      %s3798 = sshll.u32 [#allocation3], 4
      %s3799 = int_to_ptr.vmem [resolvable:$true] %s3798
      %3801 = dma.vmem_to_hbm [thread:$0]  %s3799, 128, %s7, [#allocation4]
    $region33: #{tpu_custom_call.1} parent=1 // pred_fallthru
      _
    // Predicated region
    $region34: #{tpu_custom_call.1} parent=1 // pred_check
      _
    $region35: #{tpu_custom_call.1} parent=1 // pred_check_branch
      %3803 = sbr.rel (0) target = $region37
    $region36: #{tpu_custom_call.1} parent=1 // pred_region
      %3804 = dma.done [#allocation4], 128
    $region37: #{tpu_custom_call.1} parent=1 // pred_fallthru
      _
    %3805 = vsyncpa [#allocation4], 1

</llo_original>
